<compile_context>
chip_gen: v7x
topology: tpu7x:2x2x1
jax: 0.10.0
libtpu: 0.0.40
codegen_flags: <defaults>
</compile_context>

<pallas_src>
import functools

import jax
import jax.numpy as jnp
from jax.experimental import pallas as pl
from jax.experimental.pallas import tpu as pltpu


# ------------------------------ kernel helpers -------------------------------
def _normlayer(v, alpha, beta, eps, n):
    # Matches torch: mean / unbiased std (N-1), eps added to std (not var).
    mean = jnp.mean(v, axis=-1, keepdims=True)
    c = v - mean                                            # reused for var & output
    var = jnp.sum(c * c, axis=-1, keepdims=True) * (1.0 / (n - 1))
    std = jnp.sqrt(var)
    return alpha * c * pl.reciprocal(std + eps) + beta


# --------------------------------- kernel ------------------------------------
def encoder_kernel(
    x_ref, mask_ref,
    wqkv_ref, bqkv_ref, wfc_ref, bfc_ref,
    a1_ref, g1_ref, w1_ref, b1_ref, w2_ref, b2_ref, a2_ref, g2_ref,
    out_ref,
    *, num_layers, num_heads, d_model, eps,
):
    H = num_heads
    x = x_ref[0].astype(jnp.float32)                        # (S, D)
    S = x.shape[0]

    # Hoisted: key-padding mask additive term, computed once for all layers.
    neg_mask = (mask_ref[0].astype(jnp.float32) * jnp.float32(-1e9))[None, :, :]  # (1,1,S)

    h = x                                                   # f32 residual stream
    for l in range(num_layers):                             # static unroll (small L)
        xb = h.astype(jnp.bfloat16)
        xh = jnp.broadcast_to(xb[None, :, :], (3 * H, S, d_model))   # (3H,S,D) bf16

        # ---- fused Q/K/V projection (weights pre-split per head, 3H batch) ----
        qkv = jnp.einsum('hsd,hdf->hsf', xh, wqkv_ref[l],
                         preferred_element_type=jnp.float32) + bqkv_ref[l]  # (3H,S,dep)
        q = qkv[0:H]          # 1/sqrt(depth) scale already folded into wq / bq
        k = qkv[H:2 * H]
        v = qkv[2 * H:3 * H]

        # ---- scaled dot-product attention (all heads batched) -----------------
        logits = jnp.einsum('hqd,hkd->hqk',
                            q.astype(jnp.bfloat16), k.astype(jnp.bfloat16),
                            preferred_element_type=jnp.float32)             # (H,S,S)
        logits = logits + neg_mask
        m = jnp.max(logits, axis=-1, keepdims=True)
        p = jnp.exp(logits - m)
        denom = jnp.sum(p, axis=-1, keepdims=True)
        p = p * pl.reciprocal(denom, approx=True)

        ctx = jnp.einsum('hqk,hkd->hqd',
                         p.astype(jnp.bfloat16), v.astype(jnp.bfloat16),
                         preferred_element_type=jnp.float32)                # (H,S,dep)

        # ---- output projection: per-head matmul + sum over heads (== concat@Wfc)
        mha = jnp.sum(
            jnp.einsum('hqd,hdf->hqf', ctx.astype(jnp.bfloat16), wfc_ref[l],
                       preferred_element_type=jnp.float32),
            axis=0) + bfc_ref[l]                                            # (S,D)

        # ---- residual + norm1 (dropout == identity in eval) -------------------
        out1 = _normlayer(h + mha, a1_ref[l], g1_ref[l], eps, d_model)

        # ---- FFN ---------------------------------------------------------------
        h1 = jnp.dot(out1.astype(jnp.bfloat16), w1_ref[l],
                     preferred_element_type=jnp.float32) + b1_ref[l]
        h1 = jnp.maximum(h1, 0.0)
        ffn = jnp.dot(h1.astype(jnp.bfloat16), w2_ref[l],
                      preferred_element_type=jnp.float32) + b2_ref[l]

        # ---- residual + norm2 --------------------------------------------------
        h = _normlayer(out1 + ffn, a2_ref[l], g2_ref[l], eps, d_model)

    out_ref[0] = h.astype(out_ref.dtype)


# ------------------------------ host wrapper ----------------------------------
def _full_spec(shape):
    r = len(shape)
    return pl.BlockSpec(shape, lambda b, _r=r: (0,) * _r)


_PARAM_ORDER = ("wqkv", "bqkv", "wfc", "bfc",
                "alpha1", "beta1", "w1", "b1", "w2", "b2", "alpha2", "beta2")


def encoder_forward(x, mask, params, *, num_heads):
    """x: (B, S, D) float32; mask: (B, S) with 1.0 = masked key, 0.0 = attend."""
    B, S, D = x.shape
    L = params["wqkv"].shape[0]
    mask3 = mask.reshape(B, 1, S).astype(jnp.float32)

    plist = [params[n] for n in _PARAM_ORDER]
    in_specs = [
        pl.BlockSpec((1, S, D), lambda b: (b, 0, 0)),
        pl.BlockSpec((1, 1, S), lambda b: (b, 0, 0)),
    ] + [_full_spec(p.shape) for p in plist]

    kernel = functools.partial(
        encoder_kernel,
        num_layers=L, num_heads=num_heads, d_model=D, eps=1e-6,
    )
    return pl.pallas_call(
        kernel,
        out_shape=jax.ShapeDtypeStruct((B, S, D), x.dtype),
        grid=(B,),
        in_specs=in_specs,
        out_specs=pl.BlockSpec((1, S, D), lambda b: (b, 0, 0)),
        compiler_params=pltpu.CompilerParams(
            dimension_semantics=("parallel",),
            vmem_limit_bytes=32 * 1024 * 1024,
        ),
    )(x, mask3, *plist)


# ------------------------------ parameter init --------------------------------
def init_encoder_params(key, num_layers, d_model, num_heads, hidden_dim):
    """Weights stored bf16, pre-transposed to [in, out], split head-major,
    Q/K/V stacked along the head axis, attention scale folded into Q."""
    H = num_heads
    depth = d_model // H
    q_scale = 1.0 / (float(depth) ** 0.5)
    scale = 0.02
    layers = []
    for l in range(num_layers):
        keys = jax.random.split(jax.random.fold_in(key, l), 6)

        def dense(k, din, dout):
            return scale * jax.random.normal(k, (din, dout), jnp.float32)

        def head_proj(k):  # (D, D) -> (H, D, depth), head-major on the out dim
            w = dense(k, d_model, d_model)
            return jnp.transpose(w.reshape(d_model, H, depth), (1, 0, 2))

        wq = head_proj(keys[0]) * q_scale                  # fold 1/sqrt(depth)
        wk = head_proj(keys[1])
        wv = head_proj(keys[2])
        wqkv = jnp.concatenate([wq, wk, wv], axis=0).astype(jnp.bfloat16)   # (3H,D,dep)

        bq = jnp.zeros((H, 1, depth), jnp.float32) * q_scale
        bk = jnp.zeros((H, 1, depth), jnp.float32)
        bv = jnp.zeros((H, 1, depth), jnp.float32)
        bqkv = jnp.concatenate([bq, bk, bv], axis=0)                         # (3H,1,dep)

        # fc: (D, D) with the *input* dim split per head -> (H, depth, D)
        wfc = dense(keys[3], d_model, d_model).reshape(H, depth, d_model).astype(jnp.bfloat16)
        w1 = dense(keys[4], d_model, hidden_dim).astype(jnp.bfloat16)
        w2 = dense(keys[5], hidden_dim, d_model).astype(jnp.bfloat16)

        layers.append(dict(
            wqkv=wqkv, bqkv=bqkv, wfc=wfc, w1=w1, w2=w2,
            bfc=jnp.zeros((1, d_model), jnp.float32),
            b1=jnp.zeros((1, hidden_dim), jnp.float32),
            b2=jnp.zeros((1, d_model), jnp.float32),
            alpha1=jnp.ones((1, d_model), jnp.float32),
            beta1=jnp.zeros((1, d_model), jnp.float32),
            alpha2=jnp.ones((1, d_model), jnp.float32),
            beta2=jnp.zeros((1, d_model), jnp.float32),
        ))
    # stack per-parameter along a leading layer axis
    return jax.tree_util.tree_map(lambda *xs: jnp.stack(xs, axis=0), *layers)


# ------------------------------------ main -------------------------------------
if __name__ == "__main__":
    B, S = 2, 8
    d_model, num_heads, hidden_dim, num_layers = 32, 4, 64, 2

    key = jax.random.PRNGKey(0)
    kx, kp = jax.random.split(key)
    x = jax.random.normal(kx, (B, S, d_model), jnp.float32)
    # padding mask: 1.0 = masked-out key position, 0.0 = attend
    mask = jnp.zeros((B, S), jnp.float32).at[:, -2:].set(1.0)

    params = init_encoder_params(kp, num_layers, d_model, num_heads, hidden_dim)

    out = encoder_forward(x, mask, params, num_heads=num_heads)
    jax.block_until_ready(out)
    assert out.shape == (B, S, d_model)
    print("KERNEL_OK")
</pallas_src>

<mosaic_0001>
module attributes {stable_mosaic.version = 11 : i64} {
  func.func @encoder_kernel(%arg0: i32, %arg1: memref<1x8x32xf32, #tpu.memory_space<vmem>>, %arg2: memref<1x1x8xf32, #tpu.memory_space<vmem>>, %arg3: memref<2x12x32x8xbf16, #tpu.memory_space<vmem>>, %arg4: memref<2x12x1x8xf32, #tpu.memory_space<vmem>>, %arg5: memref<2x4x8x32xbf16, #tpu.memory_space<vmem>>, %arg6: memref<2x1x32xf32, #tpu.memory_space<vmem>>, %arg7: memref<2x1x32xf32, #tpu.memory_space<vmem>>, %arg8: memref<2x1x32xf32, #tpu.memory_space<vmem>>, %arg9: memref<2x32x64xbf16, #tpu.memory_space<vmem>>, %arg10: memref<2x1x64xf32, #tpu.memory_space<vmem>>, %arg11: memref<2x64x32xbf16, #tpu.memory_space<vmem>>, %arg12: memref<2x1x32xf32, #tpu.memory_space<vmem>>, %arg13: memref<2x1x32xf32, #tpu.memory_space<vmem>>, %arg14: memref<2x1x32xf32, #tpu.memory_space<vmem>>, %arg15: memref<1x8x32xf32, #tpu.memory_space<vmem>>) attributes {dimension_semantics = [#tpu.dimension_semantics<parallel>], iteration_bounds = array<i64: 2>, scalar_prefetch = 0 : i64, scratch_operands = 0 : i64, tpu.core_type = #tpu.core_type<tc>, window_params = [{transform_indices = @transform_0, window_bounds = array<i64: 1, 8, 32>}, {transform_indices = @transform_1, window_bounds = array<i64: 1, 1, 8>}, {pipeline_mode = #tpu.pipeline_mode<synchronous>, transform_indices = @transform_2, window_bounds = array<i64: 2, 12, 32, 8>}, {pipeline_mode = #tpu.pipeline_mode<synchronous>, transform_indices = @transform_3, window_bounds = array<i64: 2, 12, 1, 8>}, {pipeline_mode = #tpu.pipeline_mode<synchronous>, transform_indices = @transform_4, window_bounds = array<i64: 2, 4, 8, 32>}, {pipeline_mode = #tpu.pipeline_mode<synchronous>, transform_indices = @transform_5, window_bounds = array<i64: 2, 1, 32>}, {pipeline_mode = #tpu.pipeline_mode<synchronous>, transform_indices = @transform_6, window_bounds = array<i64: 2, 1, 32>}, {pipeline_mode = #tpu.pipeline_mode<synchronous>, transform_indices = @transform_7, window_bounds = array<i64: 2, 1, 32>}, {pipeline_mode = #tpu.pipeline_mode<synchronous>, transform_indices = @transform_8, window_bounds = array<i64: 2, 32, 64>}, {pipeline_mode = #tpu.pipeline_mode<synchronous>, transform_indices = @transform_9, window_bounds = array<i64: 2, 1, 64>}, {pipeline_mode = #tpu.pipeline_mode<synchronous>, transform_indices = @transform_10, window_bounds = array<i64: 2, 64, 32>}, {pipeline_mode = #tpu.pipeline_mode<synchronous>, transform_indices = @transform_11, window_bounds = array<i64: 2, 1, 32>}, {pipeline_mode = #tpu.pipeline_mode<synchronous>, transform_indices = @transform_12, window_bounds = array<i64: 2, 1, 32>}, {pipeline_mode = #tpu.pipeline_mode<synchronous>, transform_indices = @transform_13, window_bounds = array<i64: 2, 1, 32>}, {transform_indices = @transform_14, window_bounds = array<i64: 1, 8, 32>}]} {
    %c0 = arith.constant 0 : index
    %c0_0 = arith.constant 0 : index
    %c0_1 = arith.constant 0 : index
    %0 = vector.load %arg1[%c0, %c0_0, %c0_1] : memref<1x8x32xf32, #tpu.memory_space<vmem>>, vector<1x8x32xf32>
    %1 = vector.shape_cast %0 : vector<1x8x32xf32> to vector<8x32xf32>
    %c0_2 = arith.constant 0 : index
    %c0_3 = arith.constant 0 : index
    %c0_4 = arith.constant 0 : index
    %2 = vector.load %arg2[%c0_2, %c0_3, %c0_4] : memref<1x1x8xf32, #tpu.memory_space<vmem>>, vector<1x1x8xf32>
    %3 = vector.shape_cast %2 : vector<1x1x8xf32> to vector<1x8xf32>
    %cst = arith.constant -1.000000e+09 : f32
    %4 = vector.broadcast %cst : f32 to vector<1x8xf32>
    %5 = arith.mulf %3, %4 : vector<1x8xf32>
    %6 = vector.shape_cast %5 : vector<1x8xf32> to vector<1x1x8xf32>
    %7 = arith.truncf %1 : vector<8x32xf32> to vector<8x32xbf16>
    %8 = vector.shape_cast %7 : vector<8x32xbf16> to vector<1x8x32xbf16>
    %9 = vector.shape_cast %8 : vector<1x8x32xbf16> to vector<1x8x32xbf16>
    %10 = vector.broadcast %9 : vector<1x8x32xbf16> to vector<12x8x32xbf16>
    %c0_5 = arith.constant 0 : index
    %c0_6 = arith.constant 0 : index
    %c0_7 = arith.constant 0 : index
    %c0_8 = arith.constant 0 : index
    %11 = vector.load %arg3[%c0_5, %c0_6, %c0_7, %c0_8] : memref<2x12x32x8xbf16, #tpu.memory_space<vmem>>, vector<1x12x32x8xbf16>
    %12 = vector.shape_cast %11 : vector<1x12x32x8xbf16> to vector<12x32x8xbf16>
    "tpu.trace_start"() <{level = 10 : i32, message = "hsd,hdf->hsf"}> : () -> ()
    %cst_9 = arith.constant dense<0.000000e+00> : vector<12x8x8xf32>
    %13 = tpu.matmul %10, %12, %cst_9 {dimension_numbers = #tpu.dot_dimension_numbers<[2], [1], [1], [2], [0, 0, 0, 1, 1, 2], [0], [0]>} : vector<12x8x32xbf16>, vector<12x32x8xbf16>, vector<12x8x8xf32> -> vector<12x8x8xf32>
    "tpu.trace_stop"() : () -> ()
    %c0_10 = arith.constant 0 : index
    %c0_11 = arith.constant 0 : index
    %c0_12 = arith.constant 0 : index
    %c0_13 = arith.constant 0 : index
    %14 = vector.load %arg4[%c0_10, %c0_11, %c0_12, %c0_13] : memref<2x12x1x8xf32, #tpu.memory_space<vmem>>, vector<1x12x1x8xf32>
    %15 = vector.shape_cast %14 : vector<1x12x1x8xf32> to vector<12x1x8xf32>
    %16 = vector.broadcast %15 : vector<12x1x8xf32> to vector<12x8x8xf32>
    %17 = arith.addf %13, %16 : vector<12x8x8xf32>
    %18 = vector.extract_strided_slice %17 {offsets = [0, 0, 0], sizes = [4, 8, 8], strides = [1, 1, 1]} : vector<12x8x8xf32> to vector<4x8x8xf32>
    %19 = vector.extract_strided_slice %17 {offsets = [4, 0, 0], sizes = [4, 8, 8], strides = [1, 1, 1]} : vector<12x8x8xf32> to vector<4x8x8xf32>
    %20 = vector.extract_strided_slice %17 {offsets = [8, 0, 0], sizes = [4, 8, 8], strides = [1, 1, 1]} : vector<12x8x8xf32> to vector<4x8x8xf32>
    %21 = arith.truncf %18 : vector<4x8x8xf32> to vector<4x8x8xbf16>
    %22 = arith.truncf %19 : vector<4x8x8xf32> to vector<4x8x8xbf16>
    "tpu.trace_start"() <{level = 10 : i32, message = "hqd,hkd->hqk"}> : () -> ()
    %cst_14 = arith.constant dense<0.000000e+00> : vector<4x8x8xf32>
    %23 = tpu.matmul %21, %22, %cst_14 {dimension_numbers = #tpu.dot_dimension_numbers<[2], [2], [1], [1], [0, 0, 0, 1, 1, 1], [0], [0]>} : vector<4x8x8xbf16>, vector<4x8x8xbf16>, vector<4x8x8xf32> -> vector<4x8x8xf32>
    "tpu.trace_stop"() : () -> ()
    %24 = vector.broadcast %6 : vector<1x1x8xf32> to vector<4x8x8xf32>
    %25 = arith.addf %23, %24 : vector<4x8x8xf32>
    %cst_15 = arith.constant dense<0xFF800000> : vector<4x8xf32>
    %26 = vector.multi_reduction <maximumf>, %25, %cst_15 [2] : vector<4x8x8xf32> to vector<4x8xf32>
    %27 = vector.shape_cast %26 : vector<4x8xf32> to vector<4x8x1xf32>
    %28 = vector.broadcast %27 : vector<4x8x1xf32> to vector<4x8x8xf32>
    %29 = arith.subf %25, %28 : vector<4x8x8xf32>
    %30 = math.exp %29 : vector<4x8x8xf32>
    %cst_16 = arith.constant dense<0.000000e+00> : vector<4x8xf32>
    %31 = vector.multi_reduction <add>, %30, %cst_16 [2] : vector<4x8x8xf32> to vector<4x8xf32>
    %32 = vector.shape_cast %31 : vector<4x8xf32> to vector<4x8x1xf32>
    %33 = tpu.reciprocal %32 {approx = true} : vector<4x8x1xf32> -> vector<4x8x1xf32>
    %34 = vector.broadcast %33 : vector<4x8x1xf32> to vector<4x8x8xf32>
    %35 = arith.mulf %30, %34 : vector<4x8x8xf32>
    %36 = arith.truncf %35 : vector<4x8x8xf32> to vector<4x8x8xbf16>
    %37 = arith.truncf %20 : vector<4x8x8xf32> to vector<4x8x8xbf16>
    "tpu.trace_start"() <{level = 10 : i32, message = "hqk,hkd->hqd"}> : () -> ()
    %cst_17 = arith.constant dense<0.000000e+00> : vector<4x8x8xf32>
    %38 = tpu.matmul %36, %37, %cst_17 {dimension_numbers = #tpu.dot_dimension_numbers<[2], [1], [1], [2], [0, 0, 0, 1, 1, 2], [0], [0]>} : vector<4x8x8xbf16>, vector<4x8x8xbf16>, vector<4x8x8xf32> -> vector<4x8x8xf32>
    "tpu.trace_stop"() : () -> ()
    %39 = arith.truncf %38 : vector<4x8x8xf32> to vector<4x8x8xbf16>
    %c0_18 = arith.constant 0 : index
    %c0_19 = arith.constant 0 : index
    %c0_20 = arith.constant 0 : index
    %c0_21 = arith.constant 0 : index
    %40 = vector.load %arg5[%c0_18, %c0_19, %c0_20, %c0_21] : memref<2x4x8x32xbf16, #tpu.memory_space<vmem>>, vector<1x4x8x32xbf16>
    %41 = vector.shape_cast %40 : vector<1x4x8x32xbf16> to vector<4x8x32xbf16>
    "tpu.trace_start"() <{level = 10 : i32, message = "hqd,hdf->hqf"}> : () -> ()
    %cst_22 = arith.constant dense<0.000000e+00> : vector<4x8x32xf32>
    %42 = tpu.matmul %39, %41, %cst_22 {dimension_numbers = #tpu.dot_dimension_numbers<[2], [1], [1], [2], [0, 0, 0, 1, 1, 2], [0], [0]>} : vector<4x8x8xbf16>, vector<4x8x32xbf16>, vector<4x8x32xf32> -> vector<4x8x32xf32>
    "tpu.trace_stop"() : () -> ()
    %cst_23 = arith.constant dense<0.000000e+00> : vector<8x32xf32>
    %43 = vector.multi_reduction <add>, %42, %cst_23 [0] : vector<4x8x32xf32> to vector<8x32xf32>
    %c0_24 = arith.constant 0 : index
    %c0_25 = arith.constant 0 : index
    %c0_26 = arith.constant 0 : index
    %44 = vector.load %arg6[%c0_24, %c0_25, %c0_26] : memref<2x1x32xf32, #tpu.memory_space<vmem>>, vector<1x1x32xf32>
    %45 = vector.shape_cast %44 : vector<1x1x32xf32> to vector<1x32xf32>
    %46 = vector.broadcast %45 : vector<1x32xf32> to vector<8x32xf32>
    %47 = arith.addf %43, %46 : vector<8x32xf32>
    %48 = arith.addf %1, %47 : vector<8x32xf32>
    %c0_27 = arith.constant 0 : index
    %c0_28 = arith.constant 0 : index
    %c0_29 = arith.constant 0 : index
    %49 = vector.load %arg7[%c0_27, %c0_28, %c0_29] : memref<2x1x32xf32, #tpu.memory_space<vmem>>, vector<1x1x32xf32>
    %50 = vector.shape_cast %49 : vector<1x1x32xf32> to vector<1x32xf32>
    %c0_30 = arith.constant 0 : index
    %c0_31 = arith.constant 0 : index
    %c0_32 = arith.constant 0 : index
    %51 = vector.load %arg8[%c0_30, %c0_31, %c0_32] : memref<2x1x32xf32, #tpu.memory_space<vmem>>, vector<1x1x32xf32>
    %52 = vector.shape_cast %51 : vector<1x1x32xf32> to vector<1x32xf32>
    %cst_33 = arith.constant dense<0.000000e+00> : vector<8xf32>
    %53 = vector.multi_reduction <add>, %48, %cst_33 [1] : vector<8x32xf32> to vector<8xf32>
    %54 = vector.shape_cast %53 : vector<8xf32> to vector<8x1xf32>
    %cst_34 = arith.constant 3.200000e+01 : f32
    %55 = vector.broadcast %cst_34 : f32 to vector<8x1xf32>
    %56 = arith.divf %54, %55 : vector<8x1xf32>
    %57 = vector.broadcast %56 : vector<8x1xf32> to vector<8x32xf32>
    %58 = arith.subf %48, %57 : vector<8x32xf32>
    %59 = arith.mulf %58, %58 : vector<8x32xf32>
    %cst_35 = arith.constant dense<0.000000e+00> : vector<8xf32>
    %60 = vector.multi_reduction <add>, %59, %cst_35 [1] : vector<8x32xf32> to vector<8xf32>
    %61 = vector.shape_cast %60 : vector<8xf32> to vector<8x1xf32>
    %cst_36 = arith.constant 0.0322580636 : f32
    %62 = vector.broadcast %cst_36 : f32 to vector<8x1xf32>
    %63 = arith.mulf %61, %62 : vector<8x1xf32>
    %64 = math.sqrt %63 : vector<8x1xf32>
    %65 = vector.broadcast %50 : vector<1x32xf32> to vector<8x32xf32>
    %66 = arith.mulf %65, %58 : vector<8x32xf32>
    %cst_37 = arith.constant 9.99999997E-7 : f32
    %67 = vector.broadcast %cst_37 : f32 to vector<8x1xf32>
    %68 = arith.addf %64, %67 : vector<8x1xf32>
    %69 = tpu.reciprocal %68 : vector<8x1xf32> -> vector<8x1xf32>
    %70 = vector.broadcast %69 : vector<8x1xf32> to vector<8x32xf32>
    %71 = arith.mulf %66, %70 : vector<8x32xf32>
    %72 = vector.broadcast %52 : vector<1x32xf32> to vector<8x32xf32>
    %73 = arith.addf %71, %72 : vector<8x32xf32>
    %74 = arith.truncf %73 : vector<8x32xf32> to vector<8x32xbf16>
    %c0_38 = arith.constant 0 : index
    %c0_39 = arith.constant 0 : index
    %c0_40 = arith.constant 0 : index
    %75 = vector.load %arg9[%c0_38, %c0_39, %c0_40] : memref<2x32x64xbf16, #tpu.memory_space<vmem>>, vector<1x32x64xbf16>
    %76 = vector.shape_cast %75 : vector<1x32x64xbf16> to vector<32x64xbf16>
    %cst_41 = arith.constant dense<0.000000e+00> : vector<8x64xf32>
    %77 = tpu.matmul %74, %76, %cst_41 {dimension_numbers = #tpu.dot_dimension_numbers<[1], [0], [0], [1], [0, 0, 1, 1], [], []>} : vector<8x32xbf16>, vector<32x64xbf16>, vector<8x64xf32> -> vector<8x64xf32>
    %c0_42 = arith.constant 0 : index
    %c0_43 = arith.constant 0 : index
    %c0_44 = arith.constant 0 : index
    %78 = vector.load %arg10[%c0_42, %c0_43, %c0_44] : memref<2x1x64xf32, #tpu.memory_space<vmem>>, vector<1x1x64xf32>
    %79 = vector.shape_cast %78 : vector<1x1x64xf32> to vector<1x64xf32>
    %80 = vector.broadcast %79 : vector<1x64xf32> to vector<8x64xf32>
    %81 = arith.addf %77, %80 : vector<8x64xf32>
    %cst_45 = arith.constant 0.000000e+00 : f32
    %82 = vector.broadcast %cst_45 : f32 to vector<8x64xf32>
    %83 = arith.maximumf %81, %82 : vector<8x64xf32>
    %84 = arith.truncf %83 : vector<8x64xf32> to vector<8x64xbf16>
    %c0_46 = arith.constant 0 : index
    %c0_47 = arith.constant 0 : index
    %c0_48 = arith.constant 0 : index
    %85 = vector.load %arg11[%c0_46, %c0_47, %c0_48] : memref<2x64x32xbf16, #tpu.memory_space<vmem>>, vector<1x64x32xbf16>
    %86 = vector.shape_cast %85 : vector<1x64x32xbf16> to vector<64x32xbf16>
    %cst_49 = arith.constant dense<0.000000e+00> : vector<8x32xf32>
    %87 = tpu.matmul %84, %86, %cst_49 {dimension_numbers = #tpu.dot_dimension_numbers<[1], [0], [0], [1], [0, 0, 1, 1], [], []>} : vector<8x64xbf16>, vector<64x32xbf16>, vector<8x32xf32> -> vector<8x32xf32>
    %c0_50 = arith.constant 0 : index
    %c0_51 = arith.constant 0 : index
    %c0_52 = arith.constant 0 : index
    %88 = vector.load %arg12[%c0_50, %c0_51, %c0_52] : memref<2x1x32xf32, #tpu.memory_space<vmem>>, vector<1x1x32xf32>
    %89 = vector.shape_cast %88 : vector<1x1x32xf32> to vector<1x32xf32>
    %90 = vector.broadcast %89 : vector<1x32xf32> to vector<8x32xf32>
    %91 = arith.addf %87, %90 : vector<8x32xf32>
    %92 = arith.addf %73, %91 : vector<8x32xf32>
    %c0_53 = arith.constant 0 : index
    %c0_54 = arith.constant 0 : index
    %c0_55 = arith.constant 0 : index
    %93 = vector.load %arg13[%c0_53, %c0_54, %c0_55] : memref<2x1x32xf32, #tpu.memory_space<vmem>>, vector<1x1x32xf32>
    %94 = vector.shape_cast %93 : vector<1x1x32xf32> to vector<1x32xf32>
    %c0_56 = arith.constant 0 : index
    %c0_57 = arith.constant 0 : index
    %c0_58 = arith.constant 0 : index
    %95 = vector.load %arg14[%c0_56, %c0_57, %c0_58] : memref<2x1x32xf32, #tpu.memory_space<vmem>>, vector<1x1x32xf32>
    %96 = vector.shape_cast %95 : vector<1x1x32xf32> to vector<1x32xf32>
    %cst_59 = arith.constant dense<0.000000e+00> : vector<8xf32>
    %97 = vector.multi_reduction <add>, %92, %cst_59 [1] : vector<8x32xf32> to vector<8xf32>
    %98 = vector.shape_cast %97 : vector<8xf32> to vector<8x1xf32>
    %cst_60 = arith.constant 3.200000e+01 : f32
    %99 = vector.broadcast %cst_60 : f32 to vector<8x1xf32>
    %100 = arith.divf %98, %99 : vector<8x1xf32>
    %101 = vector.broadcast %100 : vector<8x1xf32> to vector<8x32xf32>
    %102 = arith.subf %92, %101 : vector<8x32xf32>
    %103 = arith.mulf %102, %102 : vector<8x32xf32>
    %cst_61 = arith.constant dense<0.000000e+00> : vector<8xf32>
    %104 = vector.multi_reduction <add>, %103, %cst_61 [1] : vector<8x32xf32> to vector<8xf32>
    %105 = vector.shape_cast %104 : vector<8xf32> to vector<8x1xf32>
    %cst_62 = arith.constant 0.0322580636 : f32
    %106 = vector.broadcast %cst_62 : f32 to vector<8x1xf32>
    %107 = arith.mulf %105, %106 : vector<8x1xf32>
    %108 = math.sqrt %107 : vector<8x1xf32>
    %109 = vector.broadcast %94 : vector<1x32xf32> to vector<8x32xf32>
    %110 = arith.mulf %109, %102 : vector<8x32xf32>
    %cst_63 = arith.constant 9.99999997E-7 : f32
    %111 = vector.broadcast %cst_63 : f32 to vector<8x1xf32>
    %112 = arith.addf %108, %111 : vector<8x1xf32>
    %113 = tpu.reciprocal %112 : vector<8x1xf32> -> vector<8x1xf32>
    %114 = vector.broadcast %113 : vector<8x1xf32> to vector<8x32xf32>
    %115 = arith.mulf %110, %114 : vector<8x32xf32>
    %116 = vector.broadcast %96 : vector<1x32xf32> to vector<8x32xf32>
    %117 = arith.addf %115, %116 : vector<8x32xf32>
    %118 = arith.truncf %117 : vector<8x32xf32> to vector<8x32xbf16>
    %119 = vector.shape_cast %118 : vector<8x32xbf16> to vector<1x8x32xbf16>
    %120 = vector.shape_cast %119 : vector<1x8x32xbf16> to vector<1x8x32xbf16>
    %121 = vector.broadcast %120 : vector<1x8x32xbf16> to vector<12x8x32xbf16>
    %c1 = arith.constant 1 : index
    %c0_64 = arith.constant 0 : index
    %c0_65 = arith.constant 0 : index
    %c0_66 = arith.constant 0 : index
    %122 = vector.load %arg3[%c1, %c0_64, %c0_65, %c0_66] : memref<2x12x32x8xbf16, #tpu.memory_space<vmem>>, vector<1x12x32x8xbf16>
    %123 = vector.shape_cast %122 : vector<1x12x32x8xbf16> to vector<12x32x8xbf16>
    "tpu.trace_start"() <{level = 10 : i32, message = "hsd,hdf->hsf"}> : () -> ()
    %cst_67 = arith.constant dense<0.000000e+00> : vector<12x8x8xf32>
    %124 = tpu.matmul %121, %123, %cst_67 {dimension_numbers = #tpu.dot_dimension_numbers<[2], [1], [1], [2], [0, 0, 0, 1, 1, 2], [0], [0]>} : vector<12x8x32xbf16>, vector<12x32x8xbf16>, vector<12x8x8xf32> -> vector<12x8x8xf32>
    "tpu.trace_stop"() : () -> ()
    %c1_68 = arith.constant 1 : index
    %c0_69 = arith.constant 0 : index
    %c0_70 = arith.constant 0 : index
    %c0_71 = arith.constant 0 : index
    %125 = vector.load %arg4[%c1_68, %c0_69, %c0_70, %c0_71] : memref<2x12x1x8xf32, #tpu.memory_space<vmem>>, vector<1x12x1x8xf32>
    %126 = vector.shape_cast %125 : vector<1x12x1x8xf32> to vector<12x1x8xf32>
    %127 = vector.broadcast %126 : vector<12x1x8xf32> to vector<12x8x8xf32>
    %128 = arith.addf %124, %127 : vector<12x8x8xf32>
    %129 = vector.extract_strided_slice %128 {offsets = [0, 0, 0], sizes = [4, 8, 8], strides = [1, 1, 1]} : vector<12x8x8xf32> to vector<4x8x8xf32>
    %130 = vector.extract_strided_slice %128 {offsets = [4, 0, 0], sizes = [4, 8, 8], strides = [1, 1, 1]} : vector<12x8x8xf32> to vector<4x8x8xf32>
    %131 = vector.extract_strided_slice %128 {offsets = [8, 0, 0], sizes = [4, 8, 8], strides = [1, 1, 1]} : vector<12x8x8xf32> to vector<4x8x8xf32>
    %132 = arith.truncf %129 : vector<4x8x8xf32> to vector<4x8x8xbf16>
    %133 = arith.truncf %130 : vector<4x8x8xf32> to vector<4x8x8xbf16>
    "tpu.trace_start"() <{level = 10 : i32, message = "hqd,hkd->hqk"}> : () -> ()
    %cst_72 = arith.constant dense<0.000000e+00> : vector<4x8x8xf32>
    %134 = tpu.matmul %132, %133, %cst_72 {dimension_numbers = #tpu.dot_dimension_numbers<[2], [2], [1], [1], [0, 0, 0, 1, 1, 1], [0], [0]>} : vector<4x8x8xbf16>, vector<4x8x8xbf16>, vector<4x8x8xf32> -> vector<4x8x8xf32>
    "tpu.trace_stop"() : () -> ()
    %135 = vector.broadcast %6 : vector<1x1x8xf32> to vector<4x8x8xf32>
    %136 = arith.addf %134, %135 : vector<4x8x8xf32>
    %cst_73 = arith.constant dense<0xFF800000> : vector<4x8xf32>
    %137 = vector.multi_reduction <maximumf>, %136, %cst_73 [2] : vector<4x8x8xf32> to vector<4x8xf32>
    %138 = vector.shape_cast %137 : vector<4x8xf32> to vector<4x8x1xf32>
    %139 = vector.broadcast %138 : vector<4x8x1xf32> to vector<4x8x8xf32>
    %140 = arith.subf %136, %139 : vector<4x8x8xf32>
    %141 = math.exp %140 : vector<4x8x8xf32>
    %cst_74 = arith.constant dense<0.000000e+00> : vector<4x8xf32>
    %142 = vector.multi_reduction <add>, %141, %cst_74 [2] : vector<4x8x8xf32> to vector<4x8xf32>
    %143 = vector.shape_cast %142 : vector<4x8xf32> to vector<4x8x1xf32>
    %144 = tpu.reciprocal %143 {approx = true} : vector<4x8x1xf32> -> vector<4x8x1xf32>
    %145 = vector.broadcast %144 : vector<4x8x1xf32> to vector<4x8x8xf32>
    %146 = arith.mulf %141, %145 : vector<4x8x8xf32>
    %147 = arith.truncf %146 : vector<4x8x8xf32> to vector<4x8x8xbf16>
    %148 = arith.truncf %131 : vector<4x8x8xf32> to vector<4x8x8xbf16>
    "tpu.trace_start"() <{level = 10 : i32, message = "hqk,hkd->hqd"}> : () -> ()
    %cst_75 = arith.constant dense<0.000000e+00> : vector<4x8x8xf32>
    %149 = tpu.matmul %147, %148, %cst_75 {dimension_numbers = #tpu.dot_dimension_numbers<[2], [1], [1], [2], [0, 0, 0, 1, 1, 2], [0], [0]>} : vector<4x8x8xbf16>, vector<4x8x8xbf16>, vector<4x8x8xf32> -> vector<4x8x8xf32>
    "tpu.trace_stop"() : () -> ()
    %150 = arith.truncf %149 : vector<4x8x8xf32> to vector<4x8x8xbf16>
    %c1_76 = arith.constant 1 : index
    %c0_77 = arith.constant 0 : index
    %c0_78 = arith.constant 0 : index
    %c0_79 = arith.constant 0 : index
    %151 = vector.load %arg5[%c1_76, %c0_77, %c0_78, %c0_79] : memref<2x4x8x32xbf16, #tpu.memory_space<vmem>>, vector<1x4x8x32xbf16>
    %152 = vector.shape_cast %151 : vector<1x4x8x32xbf16> to vector<4x8x32xbf16>
    "tpu.trace_start"() <{level = 10 : i32, message = "hqd,hdf->hqf"}> : () -> ()
    %cst_80 = arith.constant dense<0.000000e+00> : vector<4x8x32xf32>
    %153 = tpu.matmul %150, %152, %cst_80 {dimension_numbers = #tpu.dot_dimension_numbers<[2], [1], [1], [2], [0, 0, 0, 1, 1, 2], [0], [0]>} : vector<4x8x8xbf16>, vector<4x8x32xbf16>, vector<4x8x32xf32> -> vector<4x8x32xf32>
    "tpu.trace_stop"() : () -> ()
    %cst_81 = arith.constant dense<0.000000e+00> : vector<8x32xf32>
    %154 = vector.multi_reduction <add>, %153, %cst_81 [0] : vector<4x8x32xf32> to vector<8x32xf32>
    %c1_82 = arith.constant 1 : index
    %c0_83 = arith.constant 0 : index
    %c0_84 = arith.constant 0 : index
    %155 = vector.load %arg6[%c1_82, %c0_83, %c0_84] : memref<2x1x32xf32, #tpu.memory_space<vmem>>, vector<1x1x32xf32>
    %156 = vector.shape_cast %155 : vector<1x1x32xf32> to vector<1x32xf32>
    %157 = vector.broadcast %156 : vector<1x32xf32> to vector<8x32xf32>
    %158 = arith.addf %154, %157 : vector<8x32xf32>
    %159 = arith.addf %117, %158 : vector<8x32xf32>
    %c1_85 = arith.constant 1 : index
    %c0_86 = arith.constant 0 : index
    %c0_87 = arith.constant 0 : index
    %160 = vector.load %arg7[%c1_85, %c0_86, %c0_87] : memref<2x1x32xf32, #tpu.memory_space<vmem>>, vector<1x1x32xf32>
    %161 = vector.shape_cast %160 : vector<1x1x32xf32> to vector<1x32xf32>
    %c1_88 = arith.constant 1 : index
    %c0_89 = arith.constant 0 : index
    %c0_90 = arith.constant 0 : index
    %162 = vector.load %arg8[%c1_88, %c0_89, %c0_90] : memref<2x1x32xf32, #tpu.memory_space<vmem>>, vector<1x1x32xf32>
    %163 = vector.shape_cast %162 : vector<1x1x32xf32> to vector<1x32xf32>
    %cst_91 = arith.constant dense<0.000000e+00> : vector<8xf32>
    %164 = vector.multi_reduction <add>, %159, %cst_91 [1] : vector<8x32xf32> to vector<8xf32>
    %165 = vector.shape_cast %164 : vector<8xf32> to vector<8x1xf32>
    %cst_92 = arith.constant 3.200000e+01 : f32
    %166 = vector.broadcast %cst_92 : f32 to vector<8x1xf32>
    %167 = arith.divf %165, %166 : vector<8x1xf32>
    %168 = vector.broadcast %167 : vector<8x1xf32> to vector<8x32xf32>
    %169 = arith.subf %159, %168 : vector<8x32xf32>
    %170 = arith.mulf %169, %169 : vector<8x32xf32>
    %cst_93 = arith.constant dense<0.000000e+00> : vector<8xf32>
    %171 = vector.multi_reduction <add>, %170, %cst_93 [1] : vector<8x32xf32> to vector<8xf32>
    %172 = vector.shape_cast %171 : vector<8xf32> to vector<8x1xf32>
    %cst_94 = arith.constant 0.0322580636 : f32
    %173 = vector.broadcast %cst_94 : f32 to vector<8x1xf32>
    %174 = arith.mulf %172, %173 : vector<8x1xf32>
    %175 = math.sqrt %174 : vector<8x1xf32>
    %176 = vector.broadcast %161 : vector<1x32xf32> to vector<8x32xf32>
    %177 = arith.mulf %176, %169 : vector<8x32xf32>
    %cst_95 = arith.constant 9.99999997E-7 : f32
    %178 = vector.broadcast %cst_95 : f32 to vector<8x1xf32>
    %179 = arith.addf %175, %178 : vector<8x1xf32>
    %180 = tpu.reciprocal %179 : vector<8x1xf32> -> vector<8x1xf32>
    %181 = vector.broadcast %180 : vector<8x1xf32> to vector<8x32xf32>
    %182 = arith.mulf %177, %181 : vector<8x32xf32>
    %183 = vector.broadcast %163 : vector<1x32xf32> to vector<8x32xf32>
    %184 = arith.addf %182, %183 : vector<8x32xf32>
    %185 = arith.truncf %184 : vector<8x32xf32> to vector<8x32xbf16>
    %c1_96 = arith.constant 1 : index
    %c0_97 = arith.constant 0 : index
    %c0_98 = arith.constant 0 : index
    %186 = vector.load %arg9[%c1_96, %c0_97, %c0_98] : memref<2x32x64xbf16, #tpu.memory_space<vmem>>, vector<1x32x64xbf16>
    %187 = vector.shape_cast %186 : vector<1x32x64xbf16> to vector<32x64xbf16>
    %cst_99 = arith.constant dense<0.000000e+00> : vector<8x64xf32>
    %188 = tpu.matmul %185, %187, %cst_99 {dimension_numbers = #tpu.dot_dimension_numbers<[1], [0], [0], [1], [0, 0, 1, 1], [], []>} : vector<8x32xbf16>, vector<32x64xbf16>, vector<8x64xf32> -> vector<8x64xf32>
    %c1_100 = arith.constant 1 : index
    %c0_101 = arith.constant 0 : index
    %c0_102 = arith.constant 0 : index
    %189 = vector.load %arg10[%c1_100, %c0_101, %c0_102] : memref<2x1x64xf32, #tpu.memory_space<vmem>>, vector<1x1x64xf32>
    %190 = vector.shape_cast %189 : vector<1x1x64xf32> to vector<1x64xf32>
    %191 = vector.broadcast %190 : vector<1x64xf32> to vector<8x64xf32>
    %192 = arith.addf %188, %191 : vector<8x64xf32>
    %cst_103 = arith.constant 0.000000e+00 : f32
    %193 = vector.broadcast %cst_103 : f32 to vector<8x64xf32>
    %194 = arith.maximumf %192, %193 : vector<8x64xf32>
    %195 = arith.truncf %194 : vector<8x64xf32> to vector<8x64xbf16>
    %c1_104 = arith.constant 1 : index
    %c0_105 = arith.constant 0 : index
    %c0_106 = arith.constant 0 : index
    %196 = vector.load %arg11[%c1_104, %c0_105, %c0_106] : memref<2x64x32xbf16, #tpu.memory_space<vmem>>, vector<1x64x32xbf16>
    %197 = vector.shape_cast %196 : vector<1x64x32xbf16> to vector<64x32xbf16>
    %cst_107 = arith.constant dense<0.000000e+00> : vector<8x32xf32>
    %198 = tpu.matmul %195, %197, %cst_107 {dimension_numbers = #tpu.dot_dimension_numbers<[1], [0], [0], [1], [0, 0, 1, 1], [], []>} : vector<8x64xbf16>, vector<64x32xbf16>, vector<8x32xf32> -> vector<8x32xf32>
    %c1_108 = arith.constant 1 : index
    %c0_109 = arith.constant 0 : index
    %c0_110 = arith.constant 0 : index
    %199 = vector.load %arg12[%c1_108, %c0_109, %c0_110] : memref<2x1x32xf32, #tpu.memory_space<vmem>>, vector<1x1x32xf32>
    %200 = vector.shape_cast %199 : vector<1x1x32xf32> to vector<1x32xf32>
    %201 = vector.broadcast %200 : vector<1x32xf32> to vector<8x32xf32>
    %202 = arith.addf %198, %201 : vector<8x32xf32>
    %203 = arith.addf %184, %202 : vector<8x32xf32>
    %c1_111 = arith.constant 1 : index
    %c0_112 = arith.constant 0 : index
    %c0_113 = arith.constant 0 : index
    %204 = vector.load %arg13[%c1_111, %c0_112, %c0_113] : memref<2x1x32xf32, #tpu.memory_space<vmem>>, vector<1x1x32xf32>
    %205 = vector.shape_cast %204 : vector<1x1x32xf32> to vector<1x32xf32>
    %c1_114 = arith.constant 1 : index
    %c0_115 = arith.constant 0 : index
    %c0_116 = arith.constant 0 : index
    %206 = vector.load %arg14[%c1_114, %c0_115, %c0_116] : memref<2x1x32xf32, #tpu.memory_space<vmem>>, vector<1x1x32xf32>
    %207 = vector.shape_cast %206 : vector<1x1x32xf32> to vector<1x32xf32>
    %cst_117 = arith.constant dense<0.000000e+00> : vector<8xf32>
    %208 = vector.multi_reduction <add>, %203, %cst_117 [1] : vector<8x32xf32> to vector<8xf32>
    %209 = vector.shape_cast %208 : vector<8xf32> to vector<8x1xf32>
    %cst_118 = arith.constant 3.200000e+01 : f32
    %210 = vector.broadcast %cst_118 : f32 to vector<8x1xf32>
    %211 = arith.divf %209, %210 : vector<8x1xf32>
    %212 = vector.broadcast %211 : vector<8x1xf32> to vector<8x32xf32>
    %213 = arith.subf %203, %212 : vector<8x32xf32>
    %214 = arith.mulf %213, %213 : vector<8x32xf32>
    %cst_119 = arith.constant dense<0.000000e+00> : vector<8xf32>
    %215 = vector.multi_reduction <add>, %214, %cst_119 [1] : vector<8x32xf32> to vector<8xf32>
    %216 = vector.shape_cast %215 : vector<8xf32> to vector<8x1xf32>
    %cst_120 = arith.constant 0.0322580636 : f32
    %217 = vector.broadcast %cst_120 : f32 to vector<8x1xf32>
    %218 = arith.mulf %216, %217 : vector<8x1xf32>
    %219 = math.sqrt %218 : vector<8x1xf32>
    %220 = vector.broadcast %205 : vector<1x32xf32> to vector<8x32xf32>
    %221 = arith.mulf %220, %213 : vector<8x32xf32>
    %cst_121 = arith.constant 9.99999997E-7 : f32
    %222 = vector.broadcast %cst_121 : f32 to vector<8x1xf32>
    %223 = arith.addf %219, %222 : vector<8x1xf32>
    %224 = tpu.reciprocal %223 : vector<8x1xf32> -> vector<8x1xf32>
    %225 = vector.broadcast %224 : vector<8x1xf32> to vector<8x32xf32>
    %226 = arith.mulf %221, %225 : vector<8x32xf32>
    %227 = vector.broadcast %207 : vector<1x32xf32> to vector<8x32xf32>
    %228 = arith.addf %226, %227 : vector<8x32xf32>
    %c0_122 = arith.constant 0 : index
    %c0_123 = arith.constant 0 : index
    %c0_124 = arith.constant 0 : index
    %229 = vector.load %arg15[%c0_122, %c0_123, %c0_124] : memref<1x8x32xf32, #tpu.memory_space<vmem>>, vector<1x8x32xf32>
    %230 = vector.shape_cast %229 : vector<1x8x32xf32> to vector<8x32xf32>
    %231 = vector.shape_cast %228 : vector<8x32xf32> to vector<1x8x32xf32>
    tpu.vector_store %arg15[%c0_122, %c0_123, %c0_124], %231 {strides = array<i32>} : memref<1x8x32xf32, #tpu.memory_space<vmem>>, vector<1x8x32xf32>,
    return
  }
  func.func @transform_0(%arg0: i32) -> (i32, i32, i32) {
    %c0_i32 = arith.constant 0 : i32
    %c0_i32_0 = arith.constant 0 : i32
    %c0_i32_1 = arith.constant 0 : i32
    return %arg0, %c0_i32, %c0_i32_0 : i32, i32, i32
  }
  func.func @transform_1(%arg0: i32) -> (i32, i32, i32) {
    %c0_i32 = arith.constant 0 : i32
    %c0_i32_0 = arith.constant 0 : i32
    %c0_i32_1 = arith.constant 0 : i32
    return %arg0, %c0_i32, %c0_i32_0 : i32, i32, i32
  }
  func.func @transform_2(%arg0: i32) -> (i32, i32, i32, i32) {
    %c0_i32 = arith.constant 0 : i32
    %c0_i32_0 = arith.constant 0 : i32
    %c0_i32_1 = arith.constant 0 : i32
    %c0_i32_2 = arith.constant 0 : i32
    %c0_i32_3 = arith.constant 0 : i32
    return %c0_i32, %c0_i32_0, %c0_i32_1, %c0_i32_2 : i32, i32, i32, i32
  }
  func.func @transform_3(%arg0: i32) -> (i32, i32, i32, i32) {
    %c0_i32 = arith.constant 0 : i32
    %c0_i32_0 = arith.constant 0 : i32
    %c0_i32_1 = arith.constant 0 : i32
    %c0_i32_2 = arith.constant 0 : i32
    %c0_i32_3 = arith.constant 0 : i32
    return %c0_i32, %c0_i32_0, %c0_i32_1, %c0_i32_2 : i32, i32, i32, i32
  }
  func.func @transform_4(%arg0: i32) -> (i32, i32, i32, i32) {
    %c0_i32 = arith.constant 0 : i32
    %c0_i32_0 = arith.constant 0 : i32
    %c0_i32_1 = arith.constant 0 : i32
    %c0_i32_2 = arith.constant 0 : i32
    %c0_i32_3 = arith.constant 0 : i32
    return %c0_i32, %c0_i32_0, %c0_i32_1, %c0_i32_2 : i32, i32, i32, i32
  }
  func.func @transform_5(%arg0: i32) -> (i32, i32, i32) {
    %c0_i32 = arith.constant 0 : i32
    %c0_i32_0 = arith.constant 0 : i32
    %c0_i32_1 = arith.constant 0 : i32
    %c0_i32_2 = arith.constant 0 : i32
    return %c0_i32, %c0_i32_0, %c0_i32_1 : i32, i32, i32
  }
  func.func @transform_6(%arg0: i32) -> (i32, i32, i32) {
    %c0_i32 = arith.constant 0 : i32
    %c0_i32_0 = arith.constant 0 : i32
    %c0_i32_1 = arith.constant 0 : i32
    %c0_i32_2 = arith.constant 0 : i32
    return %c0_i32, %c0_i32_0, %c0_i32_1 : i32, i32, i32
  }
  func.func @transform_7(%arg0: i32) -> (i32, i32, i32) {
    %c0_i32 = arith.constant 0 : i32
    %c0_i32_0 = arith.constant 0 : i32
    %c0_i32_1 = arith.constant 0 : i32
    %c0_i32_2 = arith.constant 0 : i32
    return %c0_i32, %c0_i32_0, %c0_i32_1 : i32, i32, i32
  }
  func.func @transform_8(%arg0: i32) -> (i32, i32, i32) {
    %c0_i32 = arith.constant 0 : i32
    %c0_i32_0 = arith.constant 0 : i32
    %c0_i32_1 = arith.constant 0 : i32
    %c0_i32_2 = arith.constant 0 : i32
    return %c0_i32, %c0_i32_0, %c0_i32_1 : i32, i32, i32
  }
  func.func @transform_9(%arg0: i32) -> (i32, i32, i32) {
    %c0_i32 = arith.constant 0 : i32
    %c0_i32_0 = arith.constant 0 : i32
    %c0_i32_1 = arith.constant 0 : i32
    %c0_i32_2 = arith.constant 0 : i32
    return %c0_i32, %c0_i32_0, %c0_i32_1 : i32, i32, i32
  }
  func.func @transform_10(%arg0: i32) -> (i32, i32, i32) {
    %c0_i32 = arith.constant 0 : i32
    %c0_i32_0 = arith.constant 0 : i32
    %c0_i32_1 = arith.constant 0 : i32
    %c0_i32_2 = arith.constant 0 : i32
    return %c0_i32, %c0_i32_0, %c0_i32_1 : i32, i32, i32
  }
  func.func @transform_11(%arg0: i32) -> (i32, i32, i32) {
    %c0_i32 = arith.constant 0 : i32
    %c0_i32_0 = arith.constant 0 : i32
    %c0_i32_1 = arith.constant 0 : i32
    %c0_i32_2 = arith.constant 0 : i32
    return %c0_i32, %c0_i32_0, %c0_i32_1 : i32, i32, i32
  }
  func.func @transform_12(%arg0: i32) -> (i32, i32, i32) {
    %c0_i32 = arith.constant 0 : i32
    %c0_i32_0 = arith.constant 0 : i32
    %c0_i32_1 = arith.constant 0 : i32
    %c0_i32_2 = arith.constant 0 : i32
    return %c0_i32, %c0_i32_0, %c0_i32_1 : i32, i32, i32
  }
  func.func @transform_13(%arg0: i32) -> (i32, i32, i32) {
    %c0_i32 = arith.constant 0 : i32
    %c0_i32_0 = arith.constant 0 : i32
    %c0_i32_1 = arith.constant 0 : i32
    %c0_i32_2 = arith.constant 0 : i32
    return %c0_i32, %c0_i32_0, %c0_i32_1 : i32, i32, i32
  }
  func.func @transform_14(%arg0: i32) -> (i32, i32, i32) {
    %c0_i32 = arith.constant 0 : i32
    %c0_i32_0 = arith.constant 0 : i32
    %c0_i32_1 = arith.constant 0 : i32
    return %arg0, %c0_i32, %c0_i32_0 : i32, i32, i32
  }
}

</mosaic_0001>

<llo_original>
// kernel: tpu_custom_call.1
$region0: #{tpu_custom_call.1}
  #allocation0 [shape = 'u32[]', space=smem, size = 0x4, offset = 0x4, fixed_abs, tag = 'smem constant byte address 0x4 - core index']
  #allocation1 [shape = 'u32[144,128]{1,0:T(1,128)}', space=vmem, size = 0x12000, scoped, tag = 'internal scratch']
  %s0 = inlined_call_operand.vmem [shape: f32[2,8,32], index: 0, kind: input, shape index: {}]
  %s1 = inlined_call_operand.vmem [shape: f32[2,1,8], index: 1, kind: input, shape index: {}]
  %s2 = inlined_call_operand.vmem [shape: bf16[2,12,32,8], index: 2, kind: input, shape index: {}]
  %s3 = inlined_call_operand.vmem [shape: f32[2,12,1,8], index: 3, kind: input, shape index: {}]
  %s4 = inlined_call_operand.vmem [shape: bf16[2,4,8,32], index: 4, kind: input, shape index: {}]
  %s5 = inlined_call_operand.vmem [shape: f32[2,1,32], index: 5, kind: input, shape index: {}]
  %s6 = inlined_call_operand.vmem [shape: f32[2,1,32], index: 6, kind: input, shape index: {}]
  %s7 = inlined_call_operand.vmem [shape: f32[2,1,32], index: 7, kind: input, shape index: {}]
  %s8 = inlined_call_operand.vmem [shape: bf16[2,32,64], index: 8, kind: input, shape index: {}]
  %s9 = inlined_call_operand.vmem [shape: f32[2,1,64], index: 9, kind: input, shape index: {}]
  %s10 = inlined_call_operand.vmem [shape: bf16[2,64,32], index: 10, kind: input, shape index: {}]
  %s11 = inlined_call_operand.vmem [shape: f32[2,1,32], index: 11, kind: input, shape index: {}]
  %s12 = inlined_call_operand.vmem [shape: f32[2,1,32], index: 12, kind: input, shape index: {}]
  %s13 = inlined_call_operand.vmem [shape: f32[2,1,32], index: 13, kind: input, shape index: {}]
  %s14 = inlined_call_operand.hbm [shape: f32[2,8,32], index: 14, kind: output, shape index: {}]
  %s15 = sld [smem:[#allocation0]]
  $region89: #{tpu_custom_call.1} parent=0
    _
  %s17 = ssub.s32 1, %s15
  %s18 = scalar_select 0, %s17, %s15
  $region1: #{tpu_custom_call.1} parent=0
    #allocation2 [shape = 'u8[8192]{0}', space=vmem, size = 0x2000, scoped, tag = 'output window, operand 0']
    #allocation3 [shape = 's32[2]{0}', space=sflag, size = 0x8, scoped, tag = 'scoped memory for tpu_custom_call.1']
    %19 = vsyncpa [#allocation3], 0
    %s20 = scalar_lea.sflag [#allocation3], 1
    %21 = vsyncpa %s20, 0
    loop: start=0, step=1, limit=4
    $region2: #{tpu_custom_call.1} parent=1 // loop_pre_header
      _
    $region3: #{tpu_custom_call.1} parent=1 // loop_header
      %s23 = sphi 0, %s27
      %p24 = scmp.ge.s32.totalorder %s23, 4
      %s33 = sphi 0, %s35
      %s36 = sphi 0, %s33
      %s37 = sphi 0, %s36
      %s53 = sphi 0, %s37
      %s59 = sphi 0, %s61
      %s62 = sphi 0, %s59
      %s63 = sphi 0, %s62
      %s79 = sphi 0, %s63
      %s83 = sphi 0, %s83
      %s85 = sphi 0, %s83
      %s86 = sphi 0, %s85
      %s100 = sphi 0, %s86
      %s104 = sphi 0, %s104
      %s106 = sphi 0, %s104
      %s107 = sphi 0, %s106
      %s121 = sphi 0, %s107
      %s125 = sphi 0, %s125
      %s127 = sphi 0, %s125
      %s128 = sphi 0, %s127
      %s142 = sphi 0, %s128
      %s146 = sphi 0, %s146
      %s148 = sphi 0, %s146
      %s149 = sphi 0, %s148
      %s163 = sphi 0, %s149
      %s167 = sphi 0, %s167
      %s169 = sphi 0, %s167
      %s170 = sphi 0, %s169
      %s184 = sphi 0, %s170
      %s188 = sphi 0, %s188
      %s190 = sphi 0, %s188
      %s191 = sphi 0, %s190
      %s205 = sphi 0, %s191
      %s209 = sphi 0, %s209
      %s211 = sphi 0, %s209
      %s212 = sphi 0, %s211
      %s226 = sphi 0, %s212
      %s230 = sphi 0, %s230
      %s232 = sphi 0, %s230
      %s233 = sphi 0, %s232
      %s247 = sphi 0, %s233
      %s251 = sphi 0, %s251
      %s253 = sphi 0, %s251
      %s254 = sphi 0, %s253
      %s268 = sphi 0, %s254
      %s272 = sphi 0, %s272
      %s274 = sphi 0, %s272
      %s275 = sphi 0, %s274
      %s289 = sphi 0, %s275
      %s293 = sphi 0, %s293
      %s295 = sphi 0, %s293
      %s296 = sphi 0, %s295
      %s310 = sphi 0, %s296
      %s314 = sphi 0, %s314
      %s316 = sphi 0, %s314
      %s317 = sphi 0, %s316
      %s331 = sphi 0, %s317
      %s337 = sphi 0, %s339
      %s340 = sphi 0, %s337
      %s341 = sphi 0, %s340
      %s357 = sphi 0, %s341
    $region4: #{tpu_custom_call.1} parent=1 // loop_header_branch
      %26 = sbr.rel (%p24) target = $region8
    $region5: #{tpu_custom_call.1} parent=1 // loop_body
      %s28 = ssub.s32 %s23, 1
      %s29 = ssub.s32 %s23, 2
      %s30 = sadd.s32 %s23, 1
      %s31 = ssub.s32 %s23, %s30
      %p32 = scmp.eq.s32.totalorder %s31, 0
      %s34 = sadd.s32 %s33, 1
      %s35 = scalar_select %p32, %s33, %s34
      %p38 = pneg %p32
      %p39 = scmp.eq.s32.totalorder %s23, 1
      %p40 = por %p38, %p39
      %p41 = scmp.ne.s32.totalorder %s33, %s36
      %p42 = scmp.eq.s32.totalorder %s23, 0
      %p43 = por %p41, %p42
      %p44 = scmp.ne.s32.totalorder %s33, %s36
      %p45 = scmp.eq.s32.totalorder %s28, 1
      %p46 = por %p44, %p45
      %p47 = scmp.ne.s32.totalorder %s36, %s37
      %p48 = scmp.eq.s32.totalorder %s28, 0
      %p49 = por %p47, %p48
      %p50 = scmp.ne.s32.totalorder %s36, %s37
      %p51 = scmp.eq.s32.totalorder %s29, 1
      %p52 = por %p50, %p51
      %p54 = scmp.ne.s32.totalorder %s37, %s53
      %p55 = scmp.eq.s32.totalorder %s29, 0
      %p56 = por %p54, %p55
      %s57 = ssub.s32 %s23, %s30
      %p58 = scmp.eq.s32.totalorder %s57, 0
      %s60 = sadd.s32 %s59, 1
      %s61 = scalar_select %p58, %s59, %s60
      %p64 = pneg %p58
      %p65 = scmp.eq.s32.totalorder %s23, 1
      %p66 = por %p64, %p65
      %p67 = scmp.ne.s32.totalorder %s59, %s62
      %p68 = scmp.eq.s32.totalorder %s23, 0
      %p69 = por %p67, %p68
      %p70 = scmp.ne.s32.totalorder %s59, %s62
      %p71 = scmp.eq.s32.totalorder %s28, 1
      %p72 = por %p70, %p71
      %p73 = scmp.ne.s32.totalorder %s62, %s63
      %p74 = scmp.eq.s32.totalorder %s28, 0
      %p75 = por %p73, %p74
      %p76 = scmp.ne.s32.totalorder %s62, %s63
      %p77 = scmp.eq.s32.totalorder %s29, 1
      %p78 = por %p76, %p77
      %p80 = scmp.ne.s32.totalorder %s63, %s79
      %p81 = scmp.eq.s32.totalorder %s29, 0
      %p82 = por %p80, %p81
      %s84 = sadd.s32 %s83, 1
      %p87 = scmp.eq.s32.totalorder %s23, 1
      %p88 = scmp.ne.s32.totalorder %s83, %s85
      %p89 = scmp.eq.s32.totalorder %s23, 0
      %p90 = por %p88, %p89
      %p91 = scmp.ne.s32.totalorder %s83, %s85
      %p92 = scmp.eq.s32.totalorder %s28, 1
      %p93 = por %p91, %p92
      %p94 = scmp.ne.s32.totalorder %s85, %s86
      %p95 = scmp.eq.s32.totalorder %s28, 0
      %p96 = por %p94, %p95
      %p97 = scmp.ne.s32.totalorder %s85, %s86
      %p98 = scmp.eq.s32.totalorder %s29, 1
      %p99 = por %p97, %p98
      %p101 = scmp.ne.s32.totalorder %s86, %s100
      %p102 = scmp.eq.s32.totalorder %s29, 0
      %p103 = por %p101, %p102
      %s105 = sadd.s32 %s104, 1
      %p108 = scmp.eq.s32.totalorder %s23, 1
      %p109 = scmp.ne.s32.totalorder %s104, %s106
      %p110 = scmp.eq.s32.totalorder %s23, 0
      %p111 = por %p109, %p110
      %p112 = scmp.ne.s32.totalorder %s104, %s106
      %p113 = scmp.eq.s32.totalorder %s28, 1
      %p114 = por %p112, %p113
      %p115 = scmp.ne.s32.totalorder %s106, %s107
      %p116 = scmp.eq.s32.totalorder %s28, 0
      %p117 = por %p115, %p116
      %p118 = scmp.ne.s32.totalorder %s106, %s107
      %p119 = scmp.eq.s32.totalorder %s29, 1
      %p120 = por %p118, %p119
      %p122 = scmp.ne.s32.totalorder %s107, %s121
      %p123 = scmp.eq.s32.totalorder %s29, 0
      %p124 = por %p122, %p123
      %s126 = sadd.s32 %s125, 1
      %p129 = scmp.eq.s32.totalorder %s23, 1
      %p130 = scmp.ne.s32.totalorder %s125, %s127
      %p131 = scmp.eq.s32.totalorder %s23, 0
      %p132 = por %p130, %p131
      %p133 = scmp.ne.s32.totalorder %s125, %s127
      %p134 = scmp.eq.s32.totalorder %s28, 1
      %p135 = por %p133, %p134
      %p136 = scmp.ne.s32.totalorder %s127, %s128
      %p137 = scmp.eq.s32.totalorder %s28, 0
      %p138 = por %p136, %p137
      %p139 = scmp.ne.s32.totalorder %s127, %s128
      %p140 = scmp.eq.s32.totalorder %s29, 1
      %p141 = por %p139, %p140
      %p143 = scmp.ne.s32.totalorder %s128, %s142
      %p144 = scmp.eq.s32.totalorder %s29, 0
      %p145 = por %p143, %p144
      %s147 = sadd.s32 %s146, 1
      %p150 = scmp.eq.s32.totalorder %s23, 1
      %p151 = scmp.ne.s32.totalorder %s146, %s148
      %p152 = scmp.eq.s32.totalorder %s23, 0
      %p153 = por %p151, %p152
      %p154 = scmp.ne.s32.totalorder %s146, %s148
      %p155 = scmp.eq.s32.totalorder %s28, 1
      %p156 = por %p154, %p155
      %p157 = scmp.ne.s32.totalorder %s148, %s149
      %p158 = scmp.eq.s32.totalorder %s28, 0
      %p159 = por %p157, %p158
      %p160 = scmp.ne.s32.totalorder %s148, %s149
      %p161 = scmp.eq.s32.totalorder %s29, 1
      %p162 = por %p160, %p161
      %p164 = scmp.ne.s32.totalorder %s149, %s163
      %p165 = scmp.eq.s32.totalorder %s29, 0
      %p166 = por %p164, %p165
      %s168 = sadd.s32 %s167, 1
      %p171 = scmp.eq.s32.totalorder %s23, 1
      %p172 = scmp.ne.s32.totalorder %s167, %s169
      %p173 = scmp.eq.s32.totalorder %s23, 0
      %p174 = por %p172, %p173
      %p175 = scmp.ne.s32.totalorder %s167, %s169
      %p176 = scmp.eq.s32.totalorder %s28, 1
      %p177 = por %p175, %p176
      %p178 = scmp.ne.s32.totalorder %s169, %s170
      %p179 = scmp.eq.s32.totalorder %s28, 0
      %p180 = por %p178, %p179
      %p181 = scmp.ne.s32.totalorder %s169, %s170
      %p182 = scmp.eq.s32.totalorder %s29, 1
      %p183 = por %p181, %p182
      %p185 = scmp.ne.s32.totalorder %s170, %s184
      %p186 = scmp.eq.s32.totalorder %s29, 0
      %p187 = por %p185, %p186
      %s189 = sadd.s32 %s188, 1
      %p192 = scmp.eq.s32.totalorder %s23, 1
      %p193 = scmp.ne.s32.totalorder %s188, %s190
      %p194 = scmp.eq.s32.totalorder %s23, 0
      %p195 = por %p193, %p194
      %p196 = scmp.ne.s32.totalorder %s188, %s190
      %p197 = scmp.eq.s32.totalorder %s28, 1
      %p198 = por %p196, %p197
      %p199 = scmp.ne.s32.totalorder %s190, %s191
      %p200 = scmp.eq.s32.totalorder %s28, 0
      %p201 = por %p199, %p200
      %p202 = scmp.ne.s32.totalorder %s190, %s191
      %p203 = scmp.eq.s32.totalorder %s29, 1
      %p204 = por %p202, %p203
      %p206 = scmp.ne.s32.totalorder %s191, %s205
      %p207 = scmp.eq.s32.totalorder %s29, 0
      %p208 = por %p206, %p207
      %s210 = sadd.s32 %s209, 1
      %p213 = scmp.eq.s32.totalorder %s23, 1
      %p214 = scmp.ne.s32.totalorder %s209, %s211
      %p215 = scmp.eq.s32.totalorder %s23, 0
      %p216 = por %p214, %p215
      %p217 = scmp.ne.s32.totalorder %s209, %s211
      %p218 = scmp.eq.s32.totalorder %s28, 1
      %p219 = por %p217, %p218
      %p220 = scmp.ne.s32.totalorder %s211, %s212
      %p221 = scmp.eq.s32.totalorder %s28, 0
      %p222 = por %p220, %p221
      %p223 = scmp.ne.s32.totalorder %s211, %s212
      %p224 = scmp.eq.s32.totalorder %s29, 1
      %p225 = por %p223, %p224
      %p227 = scmp.ne.s32.totalorder %s212, %s226
      %p228 = scmp.eq.s32.totalorder %s29, 0
      %p229 = por %p227, %p228
      %s231 = sadd.s32 %s230, 1
      %p234 = scmp.eq.s32.totalorder %s23, 1
      %p235 = scmp.ne.s32.totalorder %s230, %s232
      %p236 = scmp.eq.s32.totalorder %s23, 0
      %p237 = por %p235, %p236
      %p238 = scmp.ne.s32.totalorder %s230, %s232
      %p239 = scmp.eq.s32.totalorder %s28, 1
      %p240 = por %p238, %p239
      %p241 = scmp.ne.s32.totalorder %s232, %s233
      %p242 = scmp.eq.s32.totalorder %s28, 0
      %p243 = por %p241, %p242
      %p244 = scmp.ne.s32.totalorder %s232, %s233
      %p245 = scmp.eq.s32.totalorder %s29, 1
      %p246 = por %p244, %p245
      %p248 = scmp.ne.s32.totalorder %s233, %s247
      %p249 = scmp.eq.s32.totalorder %s29, 0
      %p250 = por %p248, %p249
      %s252 = sadd.s32 %s251, 1
      %p255 = scmp.eq.s32.totalorder %s23, 1
      %p256 = scmp.ne.s32.totalorder %s251, %s253
      %p257 = scmp.eq.s32.totalorder %s23, 0
      %p258 = por %p256, %p257
      %p259 = scmp.ne.s32.totalorder %s251, %s253
      %p260 = scmp.eq.s32.totalorder %s28, 1
      %p261 = por %p259, %p260
      %p262 = scmp.ne.s32.totalorder %s253, %s254
      %p263 = scmp.eq.s32.totalorder %s28, 0
      %p264 = por %p262, %p263
      %p265 = scmp.ne.s32.totalorder %s253, %s254
      %p266 = scmp.eq.s32.totalorder %s29, 1
      %p267 = por %p265, %p266
      %p269 = scmp.ne.s32.totalorder %s254, %s268
      %p270 = scmp.eq.s32.totalorder %s29, 0
      %p271 = por %p269, %p270
      %s273 = sadd.s32 %s272, 1
      %p276 = scmp.eq.s32.totalorder %s23, 1
      %p277 = scmp.ne.s32.totalorder %s272, %s274
      %p278 = scmp.eq.s32.totalorder %s23, 0
      %p279 = por %p277, %p278
      %p280 = scmp.ne.s32.totalorder %s272, %s274
      %p281 = scmp.eq.s32.totalorder %s28, 1
      %p282 = por %p280, %p281
      %p283 = scmp.ne.s32.totalorder %s274, %s275
      %p284 = scmp.eq.s32.totalorder %s28, 0
      %p285 = por %p283, %p284
      %p286 = scmp.ne.s32.totalorder %s274, %s275
      %p287 = scmp.eq.s32.totalorder %s29, 1
      %p288 = por %p286, %p287
      %p290 = scmp.ne.s32.totalorder %s275, %s289
      %p291 = scmp.eq.s32.totalorder %s29, 0
      %p292 = por %p290, %p291
      %s294 = sadd.s32 %s293, 1
      %p297 = scmp.eq.s32.totalorder %s23, 1
      %p298 = scmp.ne.s32.totalorder %s293, %s295
      %p299 = scmp.eq.s32.totalorder %s23, 0
      %p300 = por %p298, %p299
      %p301 = scmp.ne.s32.totalorder %s293, %s295
      %p302 = scmp.eq.s32.totalorder %s28, 1
      %p303 = por %p301, %p302
      %p304 = scmp.ne.s32.totalorder %s295, %s296
      %p305 = scmp.eq.s32.totalorder %s28, 0
      %p306 = por %p304, %p305
      %p307 = scmp.ne.s32.totalorder %s295, %s296
      %p308 = scmp.eq.s32.totalorder %s29, 1
      %p309 = por %p307, %p308
      %p311 = scmp.ne.s32.totalorder %s296, %s310
      %p312 = scmp.eq.s32.totalorder %s29, 0
      %p313 = por %p311, %p312
      %s315 = sadd.s32 %s314, 1
      %p318 = scmp.eq.s32.totalorder %s23, 1
      %p319 = scmp.ne.s32.totalorder %s314, %s316
      %p320 = scmp.eq.s32.totalorder %s23, 0
      %p321 = por %p319, %p320
      %p322 = scmp.ne.s32.totalorder %s314, %s316
      %p323 = scmp.eq.s32.totalorder %s28, 1
      %p324 = por %p322, %p323
      %p325 = scmp.ne.s32.totalorder %s316, %s317
      %p326 = scmp.eq.s32.totalorder %s28, 0
      %p327 = por %p325, %p326
      %p328 = scmp.ne.s32.totalorder %s316, %s317
      %p329 = scmp.eq.s32.totalorder %s29, 1
      %p330 = por %p328, %p329
      %p332 = scmp.ne.s32.totalorder %s317, %s331
      %p333 = scmp.eq.s32.totalorder %s29, 0
      %p334 = por %p332, %p333
      %s335 = ssub.s32 %s23, %s30
      %p336 = scmp.eq.s32.totalorder %s335, 0
      %s338 = sadd.s32 %s337, 1
      %s339 = scalar_select %p336, %s337, %s338
      %p342 = pneg %p336
      %p343 = scmp.eq.s32.totalorder %s23, 1
      %p344 = por %p342, %p343
      %p345 = scmp.ne.s32.totalorder %s337, %s340
      %p346 = scmp.eq.s32.totalorder %s23, 0
      %p347 = por %p345, %p346
      %p348 = scmp.ne.s32.totalorder %s337, %s340
      %p349 = scmp.eq.s32.totalorder %s28, 1
      %p350 = por %p348, %p349
      %p351 = scmp.ne.s32.totalorder %s340, %s341
      %p352 = scmp.eq.s32.totalorder %s28, 0
      %p353 = por %p351, %p352
      %p354 = scmp.ne.s32.totalorder %s340, %s341
      %p355 = scmp.eq.s32.totalorder %s29, 1
      %p356 = por %p354, %p355
      %p358 = scmp.ne.s32.totalorder %s341, %s357
      %p359 = scmp.eq.s32.totalorder %s29, 0
      %p360 = por %p358, %p359
      %p361 = scmp.le.s32.totalorder 1, %s23
      %p362 = scmp.lt.s32.totalorder %s23, 3
      %p363 = pnand %p361, %p362
      %p364 = pneg %p363
      // Predicated region
      $region9: #{tpu_custom_call.1} parent=5 // pred_check
        _
      $region10: #{tpu_custom_call.1} parent=5 // pred_check_branch
        %366 = sbr.rel (%p363) target = $region12
      $region11: #{tpu_custom_call.1} parent=5 // pred_region
        %s367 = ssub.s32 %s23, 1
        // Predicated region
        $region13: #{tpu_custom_call.1} parent=11 // pred_check
          %p368 = pneg %p96
        $region14: #{tpu_custom_call.1} parent=11 // pred_check_branch
          %370 = sbr.rel (%p368) target = $region16
        $region15: #{tpu_custom_call.1} parent=11 // pred_region
          _
        $region16: #{tpu_custom_call.1} parent=11 // pred_fallthru
          _
        // Predicated region
        $region17: #{tpu_custom_call.1} parent=11 // pred_check
          %p371 = pneg %p117
        $region18: #{tpu_custom_call.1} parent=11 // pred_check_branch
          %373 = sbr.rel (%p371) target = $region20
        $region19: #{tpu_custom_call.1} parent=11 // pred_region
          _
        $region20: #{tpu_custom_call.1} parent=11 // pred_fallthru
          _
        // Predicated region
        $region21: #{tpu_custom_call.1} parent=11 // pred_check
          %p374 = pneg %p138
        $region22: #{tpu_custom_call.1} parent=11 // pred_check_branch
          %376 = sbr.rel (%p374) target = $region24
        $region23: #{tpu_custom_call.1} parent=11 // pred_region
          _
        $region24: #{tpu_custom_call.1} parent=11 // pred_fallthru
          _
        // Predicated region
        $region25: #{tpu_custom_call.1} parent=11 // pred_check
          %p377 = pneg %p159
        $region26: #{tpu_custom_call.1} parent=11 // pred_check_branch
          %379 = sbr.rel (%p377) target = $region28
        $region27: #{tpu_custom_call.1} parent=11 // pred_region
          _
        $region28: #{tpu_custom_call.1} parent=11 // pred_fallthru
          _
        // Predicated region
        $region29: #{tpu_custom_call.1} parent=11 // pred_check
          %p380 = pneg %p180
        $region30: #{tpu_custom_call.1} parent=11 // pred_check_branch
          %382 = sbr.rel (%p380) target = $region32
        $region31: #{tpu_custom_call.1} parent=11 // pred_region
          _
        $region32: #{tpu_custom_call.1} parent=11 // pred_fallthru
          _
        // Predicated region
        $region33: #{tpu_custom_call.1} parent=11 // pred_check
          %p383 = pneg %p201
        $region34: #{tpu_custom_call.1} parent=11 // pred_check_branch
          %385 = sbr.rel (%p383) target = $region36
        $region35: #{tpu_custom_call.1} parent=11 // pred_region
          _
        $region36: #{tpu_custom_call.1} parent=11 // pred_fallthru
          _
        // Predicated region
        $region37: #{tpu_custom_call.1} parent=11 // pred_check
          %p386 = pneg %p222
        $region38: #{tpu_custom_call.1} parent=11 // pred_check_branch
          %388 = sbr.rel (%p386) target = $region40
        $region39: #{tpu_custom_call.1} parent=11 // pred_region
          _
        $region40: #{tpu_custom_call.1} parent=11 // pred_fallthru
          _
        // Predicated region
        $region41: #{tpu_custom_call.1} parent=11 // pred_check
          %p389 = pneg %p243
        $region42: #{tpu_custom_call.1} parent=11 // pred_check_branch
          %391 = sbr.rel (%p389) target = $region44
        $region43: #{tpu_custom_call.1} parent=11 // pred_region
          _
        $region44: #{tpu_custom_call.1} parent=11 // pred_fallthru
          _
        // Predicated region
        $region45: #{tpu_custom_call.1} parent=11 // pred_check
          %p392 = pneg %p264
        $region46: #{tpu_custom_call.1} parent=11 // pred_check_branch
          %394 = sbr.rel (%p392) target = $region48
        $region47: #{tpu_custom_call.1} parent=11 // pred_region
          _
        $region48: #{tpu_custom_call.1} parent=11 // pred_fallthru
          _
        // Predicated region
        $region49: #{tpu_custom_call.1} parent=11 // pred_check
          %p395 = pneg %p285
        $region50: #{tpu_custom_call.1} parent=11 // pred_check_branch
          %397 = sbr.rel (%p395) target = $region52
        $region51: #{tpu_custom_call.1} parent=11 // pred_region
          _
        $region52: #{tpu_custom_call.1} parent=11 // pred_fallthru
          _
        // Predicated region
        $region53: #{tpu_custom_call.1} parent=11 // pred_check
          %p398 = pneg %p306
        $region54: #{tpu_custom_call.1} parent=11 // pred_check_branch
          %400 = sbr.rel (%p398) target = $region56
        $region55: #{tpu_custom_call.1} parent=11 // pred_region
          _
        $region56: #{tpu_custom_call.1} parent=11 // pred_fallthru
          _
        // Predicated region
        $region57: #{tpu_custom_call.1} parent=11 // pred_check
          %p401 = pneg %p327
        $region58: #{tpu_custom_call.1} parent=11 // pred_check_branch
          %403 = sbr.rel (%p401) target = $region60
        $region59: #{tpu_custom_call.1} parent=11 // pred_region
          _
        $region60: #{tpu_custom_call.1} parent=11 // pred_fallthru
          _
      $region12: #{tpu_custom_call.1} parent=5 // pred_fallthru
        _
      %p404 = scmp.lt.s32.totalorder %s23, 2
      // Predicated region
      $region61: #{tpu_custom_call.1} parent=5 // pred_check
        %p405 = pneg %p404
      $region62: #{tpu_custom_call.1} parent=5 // pred_check_branch
        %407 = sbr.rel (%p405) target = $region64
      $region63: #{tpu_custom_call.1} parent=5 // pred_region
        // Predicated region
        $region65: #{tpu_custom_call.1} parent=63 // pred_check
          %p408 = pneg %p43
        $region66: #{tpu_custom_call.1} parent=63 // pred_check_branch
          %410 = sbr.rel (%p408) target = $region68
        $region67: #{tpu_custom_call.1} parent=63 // pred_region
          %p411 = scmp.lt.s32.totalorder %s23, 1
          %s412 = scalar_select %p411, %s23, 1
          %s413 = smul.addr %s412, 8
          %s414 = scalar_lea.vmem %s0, %s413
        $region68: #{tpu_custom_call.1} parent=63 // pred_fallthru
          _
        // Predicated region
        $region69: #{tpu_custom_call.1} parent=63 // pred_check
          %p415 = pneg %p69
        $region70: #{tpu_custom_call.1} parent=63 // pred_check_branch
          %417 = sbr.rel (%p415) target = $region72
        $region71: #{tpu_custom_call.1} parent=63 // pred_region
          %p418 = scmp.lt.s32.totalorder %s23, 1
          %s419 = scalar_select %p418, %s23, 1
          %s420 = scalar_lea.vmem %s1, %s419
        $region72: #{tpu_custom_call.1} parent=63 // pred_fallthru
          _
      $region64: #{tpu_custom_call.1} parent=5 // pred_fallthru
        _
      %p421 = scmp.le.s32.totalorder 1, %s23
      %p422 = scmp.lt.s32.totalorder %s23, 3
      %p423 = pnand %p421, %p422
      %p424 = pneg %p423
      // Predicated region
      $region73: #{tpu_custom_call.1} parent=5 // pred_check
        _
      $region74: #{tpu_custom_call.1} parent=5 // pred_check_branch
        %426 = sbr.rel (%p423) target = $region76
      $region75: #{tpu_custom_call.1} parent=5 // pred_region
        %s427 = ssub.s32 %s23, 1
        %p428 = scmp.lt.s32.totalorder %s28, 1
        %s429 = scalar_select %p428, %s28, 1
        %s430 = smul.addr %s429, 8
        %s431 = scalar_lea.vmem %s0, %s430
        %p432 = pneg %p49
        %p433 = pneg %p46
        %p434 = scmp.lt.s32.totalorder %s28, 1
        %s435 = scalar_select %p434, %s28, 1
        %s436 = scalar_lea.vmem %s1, %s435
        %p437 = pneg %p75
        %p438 = pneg %p72
        %p439 = pneg %p96
        %p440 = pneg %p93
        %p441 = pneg %p117
        %p442 = pneg %p114
        %p443 = pneg %p138
        %p444 = pneg %p135
        %p445 = pneg %p159
        %p446 = pneg %p156
        %p447 = pneg %p180
        %p448 = pneg %p177
        %p449 = pneg %p201
        %p450 = pneg %p198
        %p451 = pneg %p222
        %p452 = pneg %p219
        %p453 = pneg %p243
        %p454 = pneg %p240
        %p455 = pneg %p264
        %p456 = pneg %p261
        %p457 = pneg %p285
        %p458 = pneg %p282
        %p459 = pneg %p306
        %p460 = pneg %p303
        %p461 = pneg %p327
        %p462 = pneg %p324
        %p463 = pneg %p353
        %p464 = pneg %p350
        %s465 = sand.u32 %s340, 1
        %s466 = scalar_lea.sflag [#allocation3], %s465
        %s467 = sand.u32 %s340, 1
        %s468 = smul.addr %s467, 8
        %s469 = scalar_lea.vmem [#allocation2], %s468
        %p470 = scmp.lt.s32.totalorder %s28, 1
        %s471 = scalar_select %p470, %s28, 1
        %s472 = smul.addr %s471, 8
        %s473 = scalar_lea.vmem %s0, %s472
        %p474 = scmp.lt.s32.totalorder %s28, 1
        %s475 = scalar_select %p474, %s28, 1
        %s476 = scalar_lea.vmem %s1, %s475
        %v478 = vld [vmem:[%s473] sm:$0xff]
        %v479 = vld [vmem:[%s476] sm:$0x1]
        %v480 = vmul.f32 %v479, -1e+09
        %v481 = vpack.c.bf16 %v478, %v478
        %v482 = vld [vmem:[%s2] sm:$0xf]
        %v483 = vld [vmem:[%s2 + $0x4] sm:$0xf]
        %v484 = vld [vmem:[%s2 + $0x8] sm:$0xf]
        %v485 = vld [vmem:[%s2 + $0xc] sm:$0xf]
        %v486 = vld [vmem:[%s2 + $0x10] sm:$0xf]
        %v487 = vld [vmem:[%s2 + $0x14] sm:$0xf]
        %v488 = vld [vmem:[%s2 + $0x18] sm:$0xf]
        %v489 = vld [vmem:[%s2 + $0x1c] sm:$0xf]
        %v490 = vld [vmem:[%s2 + $0x20] sm:$0xf]
        %v491 = vld [vmem:[%s2 + $0x24] sm:$0xf]
        %v492 = vld [vmem:[%s2 + $0x28] sm:$0xf]
        %v493 = vld [vmem:[%s2 + $0x2c] sm:$0xf]
        %v494 = vld [vmem:[%s2 + $0x30] sm:$0xf]
        %v495 = vld [vmem:[%s2 + $0x34] sm:$0xf]
        %v496 = vld [vmem:[%s2 + $0x38] sm:$0xf]
        %v497 = vld [vmem:[%s2 + $0x3c] sm:$0xf]
        %v498 = vld [vmem:[%s2 + $0x40] sm:$0xf]
        %v499 = vld [vmem:[%s2 + $0x44] sm:$0xf]
        %v500 = vld [vmem:[%s2 + $0x48] sm:$0xf]
        %v501 = vld [vmem:[%s2 + $0x4c] sm:$0xf]
        %v502 = vld [vmem:[%s2 + $0x50] sm:$0xf]
        %v503 = vld [vmem:[%s2 + $0x54] sm:$0xf]
        %v504 = vld [vmem:[%s2 + $0x58] sm:$0xf]
        %v505 = vld [vmem:[%s2 + $0x5c] sm:$0xf]
        %v506 = vld [vmem:[%s2 + $0x60] sm:$0xf]
        %v507 = vld [vmem:[%s2 + $0x64] sm:$0xf]
        %v508 = vld [vmem:[%s2 + $0x68] sm:$0xf]
        %v509 = vld [vmem:[%s2 + $0x6c] sm:$0xf]
        %v510 = vld [vmem:[%s2 + $0x70] sm:$0xf]
        %v511 = vld [vmem:[%s2 + $0x74] sm:$0xf]
        %v512 = vld [vmem:[%s2 + $0x78] sm:$0xf]
        %v513 = vld [vmem:[%s2 + $0x7c] sm:$0xf]
        %v514 = vld [vmem:[%s2 + $0x80] sm:$0xf]
        %v515 = vld [vmem:[%s2 + $0x84] sm:$0xf]
        %v516 = vld [vmem:[%s2 + $0x88] sm:$0xf]
        %v517 = vld [vmem:[%s2 + $0x8c] sm:$0xf]
        %v518 = vld [vmem:[%s2 + $0x90] sm:$0xf]
        %v519 = vld [vmem:[%s2 + $0x94] sm:$0xf]
        %v520 = vld [vmem:[%s2 + $0x98] sm:$0xf]
        %v521 = vld [vmem:[%s2 + $0x9c] sm:$0xf]
        %v522 = vld [vmem:[%s2 + $0xa0] sm:$0xf]
        %v523 = vld [vmem:[%s2 + $0xa4] sm:$0xf]
        %v524 = vld [vmem:[%s2 + $0xa8] sm:$0xf]
        %v525 = vld [vmem:[%s2 + $0xac] sm:$0xf]
        %v526 = vld [vmem:[%s2 + $0xb0] sm:$0xf]
        %v527 = vld [vmem:[%s2 + $0xb4] sm:$0xf]
        %v528 = vld [vmem:[%s2 + $0xb8] sm:$0xf]
        %v529 = vld [vmem:[%s2 + $0xbc] sm:$0xf]
        %v530 = vld [vmem:[%s3] sm:$0x1]
        %v531 = vld [vmem:[%s3 + $0x1] sm:$0x1]
        %v532 = vld [vmem:[%s3 + $0x2] sm:$0x1]
        %v533 = vld [vmem:[%s3 + $0x3] sm:$0x1]
        %v534 = vld [vmem:[%s3 + $0x4] sm:$0x1]
        %v535 = vld [vmem:[%s3 + $0x5] sm:$0x1]
        %v536 = vld [vmem:[%s3 + $0x6] sm:$0x1]
        %v537 = vld [vmem:[%s3 + $0x7] sm:$0x1]
        %v538 = vld [vmem:[%s3 + $0x8] sm:$0x1]
        %v539 = vld [vmem:[%s3 + $0x9] sm:$0x1]
        %v540 = vld [vmem:[%s3 + $0xa] sm:$0x1]
        %v541 = vld [vmem:[%s3 + $0xb] sm:$0x1]
        %v554 = vlaneseq
        %v555 = vshrl.u32 %v554, 7
        %v556 = vsub.s32 0, %v555
        %v557 = vrot.slane %v530, %v556
        %v558 = vlaneseq
        %v559 = vshrl.u32 %v558, 7
        %v560 = vsub.s32 0, %v559
        %v561 = vrot.slane %v531, %v560
        %v562 = vlaneseq
        %v563 = vshrl.u32 %v562, 7
        %v564 = vsub.s32 0, %v563
        %v565 = vrot.slane %v532, %v564
        %v566 = vlaneseq
        %v567 = vshrl.u32 %v566, 7
        %v568 = vsub.s32 0, %v567
        %v569 = vrot.slane %v533, %v568
        %v570 = vlaneseq
        %v571 = vshrl.u32 %v570, 7
        %v572 = vsub.s32 0, %v571
        %v573 = vrot.slane %v534, %v572
        %v574 = vlaneseq
        %v575 = vshrl.u32 %v574, 7
        %v576 = vsub.s32 0, %v575
        %v577 = vrot.slane %v535, %v576
        %v578 = vlaneseq
        %v579 = vshrl.u32 %v578, 7
        %v580 = vsub.s32 0, %v579
        %v581 = vrot.slane %v536, %v580
        %v582 = vlaneseq
        %v583 = vshrl.u32 %v582, 7
        %v584 = vsub.s32 0, %v583
        %v585 = vrot.slane %v537, %v584
        %v586 = vlaneseq
        %v587 = vshrl.u32 %v586, 7
        %v588 = vsub.s32 0, %v587
        %v589 = vrot.slane %v538, %v588
        %v590 = vlaneseq
        %v591 = vshrl.u32 %v590, 7
        %v592 = vsub.s32 0, %v591
        %v593 = vrot.slane %v539, %v592
        %v594 = vlaneseq
        %v595 = vshrl.u32 %v594, 7
        %v596 = vsub.s32 0, %v595
        %v597 = vrot.slane %v540, %v596
        %v598 = vlaneseq
        %v599 = vshrl.u32 %v598, 7
        %v600 = vsub.s32 0, %v599
        %v601 = vrot.slane %v541, %v600
        %v618 = vunpack.c.l.b16 %v482
        %v619 = vunpack.c.l.b16 %v483
        %v620 = vunpack.c.l.b16 %v484
        %v621 = vunpack.c.l.b16 %v485
        %v622 = vpack.c.b16 %v619, %v618
        %v623 = vpack.c.b16 %v621, %v620
        %vm626 = vcmask 261120
        %v628 = vsel %vm626, %v481, 0
        %630 = vmatprep.subr.bf16.mxu0 0
        %631 = vmatpush1.bf16.msra.mxu0 %v622
        %632 = vmatprep.subr.bf16.mxu0 0
        %633 = vmatpush1.bf16.msra.mxu0 %v623
        %634 = vmatprep.subr.bf16.mxu0 0
        %635 = vmatpush1.bf16.msra.mxu0 0
        %636 = vmatprep.subr.bf16.mxu0 0
        %637 = vmatpush1.bf16.msra.mxu0 0
        %638 = vmatprep.subr.bf16.mxu0 0
        %639 = vmatpush1.bf16.msra.mxu0 0
        %640 = vmatprep.subr.bf16.mxu0 0
        %641 = vmatpush1.bf16.msra.mxu0 0
        %642 = vmatprep.subr.bf16.mxu0 0
        %643 = vmatpush1.bf16.msra.mxu0 0
        %644 = vmatprep.subr.bf16.mxu0 0
        %645 = vmatpush1.bf16.msra.mxu0 0
        %646 = vmatprep.subr.bf16.mxu0 0
        %647 = vmatpush1.bf16.msra.mxu0 0
        %648 = vmatprep.subr.bf16.mxu0 0
        %649 = vmatpush1.bf16.msra.mxu0 0
        %650 = vmatprep.subr.bf16.mxu0 0
        %651 = vmatpush1.bf16.msra.mxu0 0
        %652 = vmatprep.subr.bf16.mxu0 0
        %653 = vmatpush1.bf16.msra.mxu0 0
        %654 = vmatprep.subr.bf16.mxu0 0
        %655 = vmatpush1.bf16.msra.mxu0 0
        %656 = vmatprep.subr.bf16.mxu0 0
        %657 = vmatpush1.bf16.msra.mxu0 0
        %658 = vmatprep.subr.bf16.mxu0 0
        %659 = vmatpush1.bf16.msra.mxu0 0
        %660 = vmatprep.subr.bf16.mxu0 0
        %661 = vmatpush1.bf16.msra.mxu0 0
        %662 = vmatprep.mubr.bf16.mxu0 0
        %663 = vmatmul.mubr.bf16.gmra.mrb[0].mxu0 %v628
        %v664 = vpop.f32.mrb[0].mxu0
        %v665 = vadd.f32 %v557, %v664
        %v666 = vpop.f32.mrb[0].mxu0
        %v667 = vpop.f32.mrb[0].mxu0
        %v668 = vpop.f32.mrb[0].mxu0
        %669 = vdwg.mxu0
        %v674 = vunpack.c.l.b16 %v486
        %v675 = vunpack.c.l.b16 %v487
        %v676 = vunpack.c.l.b16 %v488
        %v677 = vunpack.c.l.b16 %v489
        %v678 = vpack.c.b16 %v675, %v674
        %v679 = vpack.c.b16 %v677, %v676
        %682 = vmatprep.subr.bf16.mxu0 0
        %683 = vmatpush1.bf16.msra.mxu0 %v678
        %684 = vmatprep.subr.bf16.mxu0 0
        %685 = vmatpush1.bf16.msra.mxu0 %v679
        %686 = vmatprep.subr.bf16.mxu0 0
        %687 = vmatpush1.bf16.msra.mxu0 0
        %688 = vmatprep.subr.bf16.mxu0 0
        %689 = vmatpush1.bf16.msra.mxu0 0
        %690 = vmatprep.subr.bf16.mxu0 0
        %691 = vmatpush1.bf16.msra.mxu0 0
        %692 = vmatprep.subr.bf16.mxu0 0
        %693 = vmatpush1.bf16.msra.mxu0 0
        %694 = vmatprep.subr.bf16.mxu0 0
        %695 = vmatpush1.bf16.msra.mxu0 0
        %696 = vmatprep.subr.bf16.mxu0 0
        %697 = vmatpush1.bf16.msra.mxu0 0
        %698 = vmatprep.subr.bf16.mxu0 0
        %699 = vmatpush1.bf16.msra.mxu0 0
        %700 = vmatprep.subr.bf16.mxu0 0
        %701 = vmatpush1.bf16.msra.mxu0 0
        %702 = vmatprep.subr.bf16.mxu0 0
        %703 = vmatpush1.bf16.msra.mxu0 0
        %704 = vmatprep.subr.bf16.mxu0 0
        %705 = vmatpush1.bf16.msra.mxu0 0
        %706 = vmatprep.subr.bf16.mxu0 0
        %707 = vmatpush1.bf16.msra.mxu0 0
        %708 = vmatprep.subr.bf16.mxu0 0
        %709 = vmatpush1.bf16.msra.mxu0 0
        %710 = vmatprep.subr.bf16.mxu0 0
        %711 = vmatpush1.bf16.msra.mxu0 0
        %712 = vmatprep.subr.bf16.mxu0 0
        %713 = vmatpush1.bf16.msra.mxu0 0
        %714 = vmatprep.mubr.bf16.mxu0 0
        %715 = vmatmul.mubr.bf16.gmra.mrb[0].mxu0 %v628
        %v716 = vpop.f32.mrb[0].mxu0
        %v717 = vadd.f32 %v561, %v716
        %v718 = vpop.f32.mrb[0].mxu0
        %v719 = vpop.f32.mrb[0].mxu0
        %v720 = vpop.f32.mrb[0].mxu0
        %721 = vdwg.mxu0
        %v726 = vunpack.c.l.b16 %v490
        %v727 = vunpack.c.l.b16 %v491
        %v728 = vunpack.c.l.b16 %v492
        %v729 = vunpack.c.l.b16 %v493
        %v730 = vpack.c.b16 %v727, %v726
        %v731 = vpack.c.b16 %v729, %v728
        %734 = vmatprep.subr.bf16.mxu0 0
        %735 = vmatpush1.bf16.msra.mxu0 %v730
        %736 = vmatprep.subr.bf16.mxu0 0
        %737 = vmatpush1.bf16.msra.mxu0 %v731
        %738 = vmatprep.subr.bf16.mxu0 0
        %739 = vmatpush1.bf16.msra.mxu0 0
        %740 = vmatprep.subr.bf16.mxu0 0
        %741 = vmatpush1.bf16.msra.mxu0 0
        %742 = vmatprep.subr.bf16.mxu0 0
        %743 = vmatpush1.bf16.msra.mxu0 0
        %744 = vmatprep.subr.bf16.mxu0 0
        %745 = vmatpush1.bf16.msra.mxu0 0
        %746 = vmatprep.subr.bf16.mxu0 0
        %747 = vmatpush1.bf16.msra.mxu0 0
        %748 = vmatprep.subr.bf16.mxu0 0
        %749 = vmatpush1.bf16.msra.mxu0 0
        %750 = vmatprep.subr.bf16.mxu0 0
        %751 = vmatpush1.bf16.msra.mxu0 0
        %752 = vmatprep.subr.bf16.mxu0 0
        %753 = vmatpush1.bf16.msra.mxu0 0
        %754 = vmatprep.subr.bf16.mxu0 0
        %755 = vmatpush1.bf16.msra.mxu0 0
        %756 = vmatprep.subr.bf16.mxu0 0
        %757 = vmatpush1.bf16.msra.mxu0 0
        %758 = vmatprep.subr.bf16.mxu0 0
        %759 = vmatpush1.bf16.msra.mxu0 0
        %760 = vmatprep.subr.bf16.mxu0 0
        %761 = vmatpush1.bf16.msra.mxu0 0
        %762 = vmatprep.subr.bf16.mxu0 0
        %763 = vmatpush1.bf16.msra.mxu0 0
        %764 = vmatprep.subr.bf16.mxu0 0
        %765 = vmatpush1.bf16.msra.mxu0 0
        %766 = vmatprep.mubr.bf16.mxu0 0
        %767 = vmatmul.mubr.bf16.gmra.mrb[0].mxu0 %v628
        %v768 = vpop.f32.mrb[0].mxu0
        %v769 = vadd.f32 %v565, %v768
        %v770 = vpop.f32.mrb[0].mxu0
        %v771 = vpop.f32.mrb[0].mxu0
        %v772 = vpop.f32.mrb[0].mxu0
        %773 = vdwg.mxu0
        %v778 = vunpack.c.l.b16 %v494
        %v779 = vunpack.c.l.b16 %v495
        %v780 = vunpack.c.l.b16 %v496
        %v781 = vunpack.c.l.b16 %v497
        %v782 = vpack.c.b16 %v779, %v778
        %v783 = vpack.c.b16 %v781, %v780
        %786 = vmatprep.subr.bf16.mxu0 0
        %787 = vmatpush1.bf16.msra.mxu0 %v782
        %788 = vmatprep.subr.bf16.mxu0 0
        %789 = vmatpush1.bf16.msra.mxu0 %v783
        %790 = vmatprep.subr.bf16.mxu0 0
        %791 = vmatpush1.bf16.msra.mxu0 0
        %792 = vmatprep.subr.bf16.mxu0 0
        %793 = vmatpush1.bf16.msra.mxu0 0
        %794 = vmatprep.subr.bf16.mxu0 0
        %795 = vmatpush1.bf16.msra.mxu0 0
        %796 = vmatprep.subr.bf16.mxu0 0
        %797 = vmatpush1.bf16.msra.mxu0 0
        %798 = vmatprep.subr.bf16.mxu0 0
        %799 = vmatpush1.bf16.msra.mxu0 0
        %800 = vmatprep.subr.bf16.mxu0 0
        %801 = vmatpush1.bf16.msra.mxu0 0
        %802 = vmatprep.subr.bf16.mxu0 0
        %803 = vmatpush1.bf16.msra.mxu0 0
        %804 = vmatprep.subr.bf16.mxu0 0
        %805 = vmatpush1.bf16.msra.mxu0 0
        %806 = vmatprep.subr.bf16.mxu0 0
        %807 = vmatpush1.bf16.msra.mxu0 0
        %808 = vmatprep.subr.bf16.mxu0 0
        %809 = vmatpush1.bf16.msra.mxu0 0
        %810 = vmatprep.subr.bf16.mxu0 0
        %811 = vmatpush1.bf16.msra.mxu0 0
        %812 = vmatprep.subr.bf16.mxu0 0
        %813 = vmatpush1.bf16.msra.mxu0 0
        %814 = vmatprep.subr.bf16.mxu0 0
        %815 = vmatpush1.bf16.msra.mxu0 0
        %816 = vmatprep.subr.bf16.mxu0 0
        %817 = vmatpush1.bf16.msra.mxu0 0
        %818 = vmatprep.mubr.bf16.mxu0 0
        %819 = vmatmul.mubr.bf16.gmra.mrb[0].mxu0 %v628
        %v820 = vpop.f32.mrb[0].mxu0
        %v821 = vadd.f32 %v569, %v820
        %v822 = vpop.f32.mrb[0].mxu0
        %v823 = vpop.f32.mrb[0].mxu0
        %v824 = vpop.f32.mrb[0].mxu0
        %825 = vdwg.mxu0
        %v830 = vunpack.c.l.b16 %v498
        %v831 = vunpack.c.l.b16 %v499
        %v832 = vunpack.c.l.b16 %v500
        %v833 = vunpack.c.l.b16 %v501
        %v834 = vpack.c.b16 %v831, %v830
        %v835 = vpack.c.b16 %v833, %v832
        %838 = vmatprep.subr.bf16.mxu0 0
        %839 = vmatpush1.bf16.msra.mxu0 %v834
        %840 = vmatprep.subr.bf16.mxu0 0
        %841 = vmatpush1.bf16.msra.mxu0 %v835
        %842 = vmatprep.subr.bf16.mxu0 0
        %843 = vmatpush1.bf16.msra.mxu0 0
        %844 = vmatprep.subr.bf16.mxu0 0
        %845 = vmatpush1.bf16.msra.mxu0 0
        %846 = vmatprep.subr.bf16.mxu0 0
        %847 = vmatpush1.bf16.msra.mxu0 0
        %848 = vmatprep.subr.bf16.mxu0 0
        %849 = vmatpush1.bf16.msra.mxu0 0
        %850 = vmatprep.subr.bf16.mxu0 0
        %851 = vmatpush1.bf16.msra.mxu0 0
        %852 = vmatprep.subr.bf16.mxu0 0
        %853 = vmatpush1.bf16.msra.mxu0 0
        %854 = vmatprep.subr.bf16.mxu0 0
        %855 = vmatpush1.bf16.msra.mxu0 0
        %856 = vmatprep.subr.bf16.mxu0 0
        %857 = vmatpush1.bf16.msra.mxu0 0
        %858 = vmatprep.subr.bf16.mxu0 0
        %859 = vmatpush1.bf16.msra.mxu0 0
        %860 = vmatprep.subr.bf16.mxu0 0
        %861 = vmatpush1.bf16.msra.mxu0 0
        %862 = vmatprep.subr.bf16.mxu0 0
        %863 = vmatpush1.bf16.msra.mxu0 0
        %864 = vmatprep.subr.bf16.mxu0 0
        %865 = vmatpush1.bf16.msra.mxu0 0
        %866 = vmatprep.subr.bf16.mxu0 0
        %867 = vmatpush1.bf16.msra.mxu0 0
        %868 = vmatprep.subr.bf16.mxu0 0
        %869 = vmatpush1.bf16.msra.mxu0 0
        %870 = vmatprep.mubr.bf16.mxu0 0
        %871 = vmatmul.mubr.bf16.gmra.mrb[0].mxu0 %v628
        %v872 = vpop.f32.mrb[0].mxu0
        %v873 = vadd.f32 %v573, %v872
        %v874 = vpop.f32.mrb[0].mxu0
        %v875 = vpop.f32.mrb[0].mxu0
        %v876 = vpop.f32.mrb[0].mxu0
        %877 = vdwg.mxu0
        %v882 = vunpack.c.l.b16 %v502
        %v883 = vunpack.c.l.b16 %v503
        %v884 = vunpack.c.l.b16 %v504
        %v885 = vunpack.c.l.b16 %v505
        %v886 = vpack.c.b16 %v883, %v882
        %v887 = vpack.c.b16 %v885, %v884
        %890 = vmatprep.subr.bf16.mxu0 0
        %891 = vmatpush1.bf16.msra.mxu0 %v886
        %892 = vmatprep.subr.bf16.mxu0 0
        %893 = vmatpush1.bf16.msra.mxu0 %v887
        %894 = vmatprep.subr.bf16.mxu0 0
        %895 = vmatpush1.bf16.msra.mxu0 0
        %896 = vmatprep.subr.bf16.mxu0 0
        %897 = vmatpush1.bf16.msra.mxu0 0
        %898 = vmatprep.subr.bf16.mxu0 0
        %899 = vmatpush1.bf16.msra.mxu0 0
        %900 = vmatprep.subr.bf16.mxu0 0
        %901 = vmatpush1.bf16.msra.mxu0 0
        %902 = vmatprep.subr.bf16.mxu0 0
        %903 = vmatpush1.bf16.msra.mxu0 0
        %904 = vmatprep.subr.bf16.mxu0 0
        %905 = vmatpush1.bf16.msra.mxu0 0
        %906 = vmatprep.subr.bf16.mxu0 0
        %907 = vmatpush1.bf16.msra.mxu0 0
        %908 = vmatprep.subr.bf16.mxu0 0
        %909 = vmatpush1.bf16.msra.mxu0 0
        %910 = vmatprep.subr.bf16.mxu0 0
        %911 = vmatpush1.bf16.msra.mxu0 0
        %912 = vmatprep.subr.bf16.mxu0 0
        %913 = vmatpush1.bf16.msra.mxu0 0
        %914 = vmatprep.subr.bf16.mxu0 0
        %915 = vmatpush1.bf16.msra.mxu0 0
        %916 = vmatprep.subr.bf16.mxu0 0
        %917 = vmatpush1.bf16.msra.mxu0 0
        %918 = vmatprep.subr.bf16.mxu0 0
        %919 = vmatpush1.bf16.msra.mxu0 0
        %920 = vmatprep.subr.bf16.mxu0 0
        %921 = vmatpush1.bf16.msra.mxu0 0
        %922 = vmatprep.mubr.bf16.mxu0 0
        %923 = vmatmul.mubr.bf16.gmra.mrb[0].mxu0 %v628
        %v924 = vpop.f32.mrb[0].mxu0
        %v925 = vadd.f32 %v577, %v924
        %v926 = vpop.f32.mrb[0].mxu0
        %v927 = vpop.f32.mrb[0].mxu0
        %v928 = vpop.f32.mrb[0].mxu0
        %929 = vdwg.mxu0
        %v934 = vunpack.c.l.b16 %v506
        %v935 = vunpack.c.l.b16 %v507
        %v936 = vunpack.c.l.b16 %v508
        %v937 = vunpack.c.l.b16 %v509
        %v938 = vpack.c.b16 %v935, %v934
        %v939 = vpack.c.b16 %v937, %v936
        %942 = vmatprep.subr.bf16.mxu0 0
        %943 = vmatpush1.bf16.msra.mxu0 %v938
        %944 = vmatprep.subr.bf16.mxu0 0
        %945 = vmatpush1.bf16.msra.mxu0 %v939
        %946 = vmatprep.subr.bf16.mxu0 0
        %947 = vmatpush1.bf16.msra.mxu0 0
        %948 = vmatprep.subr.bf16.mxu0 0
        %949 = vmatpush1.bf16.msra.mxu0 0
        %950 = vmatprep.subr.bf16.mxu0 0
        %951 = vmatpush1.bf16.msra.mxu0 0
        %952 = vmatprep.subr.bf16.mxu0 0
        %953 = vmatpush1.bf16.msra.mxu0 0
        %954 = vmatprep.subr.bf16.mxu0 0
        %955 = vmatpush1.bf16.msra.mxu0 0
        %956 = vmatprep.subr.bf16.mxu0 0
        %957 = vmatpush1.bf16.msra.mxu0 0
        %958 = vmatprep.subr.bf16.mxu0 0
        %959 = vmatpush1.bf16.msra.mxu0 0
        %960 = vmatprep.subr.bf16.mxu0 0
        %961 = vmatpush1.bf16.msra.mxu0 0
        %962 = vmatprep.subr.bf16.mxu0 0
        %963 = vmatpush1.bf16.msra.mxu0 0
        %964 = vmatprep.subr.bf16.mxu0 0
        %965 = vmatpush1.bf16.msra.mxu0 0
        %966 = vmatprep.subr.bf16.mxu0 0
        %967 = vmatpush1.bf16.msra.mxu0 0
        %968 = vmatprep.subr.bf16.mxu0 0
        %969 = vmatpush1.bf16.msra.mxu0 0
        %970 = vmatprep.subr.bf16.mxu0 0
        %971 = vmatpush1.bf16.msra.mxu0 0
        %972 = vmatprep.subr.bf16.mxu0 0
        %973 = vmatpush1.bf16.msra.mxu0 0
        %974 = vmatprep.mubr.bf16.mxu0 0
        %975 = vmatmul.mubr.bf16.gmra.mrb[0].mxu0 %v628
        %v976 = vpop.f32.mrb[0].mxu0
        %v977 = vadd.f32 %v581, %v976
        %v978 = vpop.f32.mrb[0].mxu0
        %v979 = vpop.f32.mrb[0].mxu0
        %v980 = vpop.f32.mrb[0].mxu0
        %981 = vdwg.mxu0
        %v986 = vunpack.c.l.b16 %v510
        %v987 = vunpack.c.l.b16 %v511
        %v988 = vunpack.c.l.b16 %v512
        %v989 = vunpack.c.l.b16 %v513
        %v990 = vpack.c.b16 %v987, %v986
        %v991 = vpack.c.b16 %v989, %v988
        %994 = vmatprep.subr.bf16.mxu0 0
        %995 = vmatpush1.bf16.msra.mxu0 %v990
        %996 = vmatprep.subr.bf16.mxu0 0
        %997 = vmatpush1.bf16.msra.mxu0 %v991
        %998 = vmatprep.subr.bf16.mxu0 0
        %999 = vmatpush1.bf16.msra.mxu0 0
        %1000 = vmatprep.subr.bf16.mxu0 0
        %1001 = vmatpush1.bf16.msra.mxu0 0
        %1002 = vmatprep.subr.bf16.mxu0 0
        %1003 = vmatpush1.bf16.msra.mxu0 0
        %1004 = vmatprep.subr.bf16.mxu0 0
        %1005 = vmatpush1.bf16.msra.mxu0 0
        %1006 = vmatprep.subr.bf16.mxu0 0
        %1007 = vmatpush1.bf16.msra.mxu0 0
        %1008 = vmatprep.subr.bf16.mxu0 0
        %1009 = vmatpush1.bf16.msra.mxu0 0
        %1010 = vmatprep.subr.bf16.mxu0 0
        %1011 = vmatpush1.bf16.msra.mxu0 0
        %1012 = vmatprep.subr.bf16.mxu0 0
        %1013 = vmatpush1.bf16.msra.mxu0 0
        %1014 = vmatprep.subr.bf16.mxu0 0
        %1015 = vmatpush1.bf16.msra.mxu0 0
        %1016 = vmatprep.subr.bf16.mxu0 0
        %1017 = vmatpush1.bf16.msra.mxu0 0
        %1018 = vmatprep.subr.bf16.mxu0 0
        %1019 = vmatpush1.bf16.msra.mxu0 0
        %1020 = vmatprep.subr.bf16.mxu0 0
        %1021 = vmatpush1.bf16.msra.mxu0 0
        %1022 = vmatprep.subr.bf16.mxu0 0
        %1023 = vmatpush1.bf16.msra.mxu0 0
        %1024 = vmatprep.subr.bf16.mxu0 0
        %1025 = vmatpush1.bf16.msra.mxu0 0
        %1026 = vmatprep.mubr.bf16.mxu0 0
        %1027 = vmatmul.mubr.bf16.gmra.mrb[0].mxu0 %v628
        %v1028 = vpop.f32.mrb[0].mxu0
        %v1029 = vadd.f32 %v585, %v1028
        %v1030 = vpop.f32.mrb[0].mxu0
        %v1031 = vpop.f32.mrb[0].mxu0
        %v1032 = vpop.f32.mrb[0].mxu0
        %1033 = vdwg.mxu0
        %v1038 = vunpack.c.l.b16 %v514
        %v1039 = vunpack.c.l.b16 %v515
        %v1040 = vunpack.c.l.b16 %v516
        %v1041 = vunpack.c.l.b16 %v517
        %v1042 = vpack.c.b16 %v1039, %v1038
        %v1043 = vpack.c.b16 %v1041, %v1040
        %1046 = vmatprep.subr.bf16.mxu0 0
        %1047 = vmatpush1.bf16.msra.mxu0 %v1042
        %1048 = vmatprep.subr.bf16.mxu0 0
        %1049 = vmatpush1.bf16.msra.mxu0 %v1043
        %1050 = vmatprep.subr.bf16.mxu0 0
        %1051 = vmatpush1.bf16.msra.mxu0 0
        %1052 = vmatprep.subr.bf16.mxu0 0
        %1053 = vmatpush1.bf16.msra.mxu0 0
        %1054 = vmatprep.subr.bf16.mxu0 0
        %1055 = vmatpush1.bf16.msra.mxu0 0
        %1056 = vmatprep.subr.bf16.mxu0 0
        %1057 = vmatpush1.bf16.msra.mxu0 0
        %1058 = vmatprep.subr.bf16.mxu0 0
        %1059 = vmatpush1.bf16.msra.mxu0 0
        %1060 = vmatprep.subr.bf16.mxu0 0
        %1061 = vmatpush1.bf16.msra.mxu0 0
        %1062 = vmatprep.subr.bf16.mxu0 0
        %1063 = vmatpush1.bf16.msra.mxu0 0
        %1064 = vmatprep.subr.bf16.mxu0 0
        %1065 = vmatpush1.bf16.msra.mxu0 0
        %1066 = vmatprep.subr.bf16.mxu0 0
        %1067 = vmatpush1.bf16.msra.mxu0 0
        %1068 = vmatprep.subr.bf16.mxu0 0
        %1069 = vmatpush1.bf16.msra.mxu0 0
        %1070 = vmatprep.subr.bf16.mxu0 0
        %1071 = vmatpush1.bf16.msra.mxu0 0
        %1072 = vmatprep.subr.bf16.mxu0 0
        %1073 = vmatpush1.bf16.msra.mxu0 0
        %1074 = vmatprep.subr.bf16.mxu0 0
        %1075 = vmatpush1.bf16.msra.mxu0 0
        %1076 = vmatprep.subr.bf16.mxu0 0
        %1077 = vmatpush1.bf16.msra.mxu0 0
        %1078 = vmatprep.mubr.bf16.mxu0 0
        %1079 = vmatmul.mubr.bf16.gmra.mrb[0].mxu0 %v628
        %v1080 = vpop.f32.mrb[0].mxu0
        %v1081 = vadd.f32 %v589, %v1080
        %v1082 = vpop.f32.mrb[0].mxu0
        %v1083 = vpop.f32.mrb[0].mxu0
        %v1084 = vpop.f32.mrb[0].mxu0
        %1085 = vdwg.mxu0
        %v1090 = vunpack.c.l.b16 %v518
        %v1091 = vunpack.c.l.b16 %v519
        %v1092 = vunpack.c.l.b16 %v520
        %v1093 = vunpack.c.l.b16 %v521
        %v1094 = vpack.c.b16 %v1091, %v1090
        %v1095 = vpack.c.b16 %v1093, %v1092
        %1098 = vmatprep.subr.bf16.mxu0 0
        %1099 = vmatpush1.bf16.msra.mxu0 %v1094
        %1100 = vmatprep.subr.bf16.mxu0 0
        %1101 = vmatpush1.bf16.msra.mxu0 %v1095
        %1102 = vmatprep.subr.bf16.mxu0 0
        %1103 = vmatpush1.bf16.msra.mxu0 0
        %1104 = vmatprep.subr.bf16.mxu0 0
        %1105 = vmatpush1.bf16.msra.mxu0 0
        %1106 = vmatprep.subr.bf16.mxu0 0
        %1107 = vmatpush1.bf16.msra.mxu0 0
        %1108 = vmatprep.subr.bf16.mxu0 0
        %1109 = vmatpush1.bf16.msra.mxu0 0
        %1110 = vmatprep.subr.bf16.mxu0 0
        %1111 = vmatpush1.bf16.msra.mxu0 0
        %1112 = vmatprep.subr.bf16.mxu0 0
        %1113 = vmatpush1.bf16.msra.mxu0 0
        %1114 = vmatprep.subr.bf16.mxu0 0
        %1115 = vmatpush1.bf16.msra.mxu0 0
        %1116 = vmatprep.subr.bf16.mxu0 0
        %1117 = vmatpush1.bf16.msra.mxu0 0
        %1118 = vmatprep.subr.bf16.mxu0 0
        %1119 = vmatpush1.bf16.msra.mxu0 0
        %1120 = vmatprep.subr.bf16.mxu0 0
        %1121 = vmatpush1.bf16.msra.mxu0 0
        %1122 = vmatprep.subr.bf16.mxu0 0
        %1123 = vmatpush1.bf16.msra.mxu0 0
        %1124 = vmatprep.subr.bf16.mxu0 0
        %1125 = vmatpush1.bf16.msra.mxu0 0
        %1126 = vmatprep.subr.bf16.mxu0 0
        %1127 = vmatpush1.bf16.msra.mxu0 0
        %1128 = vmatprep.subr.bf16.mxu0 0
        %1129 = vmatpush1.bf16.msra.mxu0 0
        %1130 = vmatprep.mubr.bf16.mxu0 0
        %1131 = vmatmul.mubr.bf16.gmra.mrb[0].mxu0 %v628
        %v1132 = vpop.f32.mrb[0].mxu0
        %v1133 = vadd.f32 %v593, %v1132
        %v1134 = vpop.f32.mrb[0].mxu0
        %v1135 = vpop.f32.mrb[0].mxu0
        %v1136 = vpop.f32.mrb[0].mxu0
        %1137 = vdwg.mxu0
        %v1142 = vunpack.c.l.b16 %v522
        %v1143 = vunpack.c.l.b16 %v523
        %v1144 = vunpack.c.l.b16 %v524
        %v1145 = vunpack.c.l.b16 %v525
        %v1146 = vpack.c.b16 %v1143, %v1142
        %v1147 = vpack.c.b16 %v1145, %v1144
        %1150 = vmatprep.subr.bf16.mxu0 0
        %1151 = vmatpush1.bf16.msra.mxu0 %v1146
        %1152 = vmatprep.subr.bf16.mxu0 0
        %1153 = vmatpush1.bf16.msra.mxu0 %v1147
        %1154 = vmatprep.subr.bf16.mxu0 0
        %1155 = vmatpush1.bf16.msra.mxu0 0
        %1156 = vmatprep.subr.bf16.mxu0 0
        %1157 = vmatpush1.bf16.msra.mxu0 0
        %1158 = vmatprep.subr.bf16.mxu0 0
        %1159 = vmatpush1.bf16.msra.mxu0 0
        %1160 = vmatprep.subr.bf16.mxu0 0
        %1161 = vmatpush1.bf16.msra.mxu0 0
        %1162 = vmatprep.subr.bf16.mxu0 0
        %1163 = vmatpush1.bf16.msra.mxu0 0
        %1164 = vmatprep.subr.bf16.mxu0 0
        %1165 = vmatpush1.bf16.msra.mxu0 0
        %1166 = vmatprep.subr.bf16.mxu0 0
        %1167 = vmatpush1.bf16.msra.mxu0 0
        %1168 = vmatprep.subr.bf16.mxu0 0
        %1169 = vmatpush1.bf16.msra.mxu0 0
        %1170 = vmatprep.subr.bf16.mxu0 0
        %1171 = vmatpush1.bf16.msra.mxu0 0
        %1172 = vmatprep.subr.bf16.mxu0 0
        %1173 = vmatpush1.bf16.msra.mxu0 0
        %1174 = vmatprep.subr.bf16.mxu0 0
        %1175 = vmatpush1.bf16.msra.mxu0 0
        %1176 = vmatprep.subr.bf16.mxu0 0
        %1177 = vmatpush1.bf16.msra.mxu0 0
        %1178 = vmatprep.subr.bf16.mxu0 0
        %1179 = vmatpush1.bf16.msra.mxu0 0
        %1180 = vmatprep.subr.bf16.mxu0 0
        %1181 = vmatpush1.bf16.msra.mxu0 0
        %1182 = vmatprep.mubr.bf16.mxu0 0
        %1183 = vmatmul.mubr.bf16.gmra.mrb[0].mxu0 %v628
        %v1184 = vpop.f32.mrb[0].mxu0
        %v1185 = vadd.f32 %v597, %v1184
        %v1186 = vpop.f32.mrb[0].mxu0
        %v1187 = vpop.f32.mrb[0].mxu0
        %v1188 = vpop.f32.mrb[0].mxu0
        %1189 = vdwg.mxu0
        %v1194 = vunpack.c.l.b16 %v526
        %v1195 = vunpack.c.l.b16 %v527
        %v1196 = vunpack.c.l.b16 %v528
        %v1197 = vunpack.c.l.b16 %v529
        %v1198 = vpack.c.b16 %v1195, %v1194
        %v1199 = vpack.c.b16 %v1197, %v1196
        %1202 = vmatprep.subr.bf16.mxu0 0
        %1203 = vmatpush1.bf16.msra.mxu0 %v1198
        %1204 = vmatprep.subr.bf16.mxu0 0
        %1205 = vmatpush1.bf16.msra.mxu0 %v1199
        %1206 = vmatprep.subr.bf16.mxu0 0
        %1207 = vmatpush1.bf16.msra.mxu0 0
        %1208 = vmatprep.subr.bf16.mxu0 0
        %1209 = vmatpush1.bf16.msra.mxu0 0
        %1210 = vmatprep.subr.bf16.mxu0 0
        %1211 = vmatpush1.bf16.msra.mxu0 0
        %1212 = vmatprep.subr.bf16.mxu0 0
        %1213 = vmatpush1.bf16.msra.mxu0 0
        %1214 = vmatprep.subr.bf16.mxu0 0
        %1215 = vmatpush1.bf16.msra.mxu0 0
        %1216 = vmatprep.subr.bf16.mxu0 0
        %1217 = vmatpush1.bf16.msra.mxu0 0
        %1218 = vmatprep.subr.bf16.mxu0 0
        %1219 = vmatpush1.bf16.msra.mxu0 0
        %1220 = vmatprep.subr.bf16.mxu0 0
        %1221 = vmatpush1.bf16.msra.mxu0 0
        %1222 = vmatprep.subr.bf16.mxu0 0
        %1223 = vmatpush1.bf16.msra.mxu0 0
        %1224 = vmatprep.subr.bf16.mxu0 0
        %1225 = vmatpush1.bf16.msra.mxu0 0
        %1226 = vmatprep.subr.bf16.mxu0 0
        %1227 = vmatpush1.bf16.msra.mxu0 0
        %1228 = vmatprep.subr.bf16.mxu0 0
        %1229 = vmatpush1.bf16.msra.mxu0 0
        %1230 = vmatprep.subr.bf16.mxu0 0
        %1231 = vmatpush1.bf16.msra.mxu0 0
        %1232 = vmatprep.subr.bf16.mxu0 0
        %1233 = vmatpush1.bf16.msra.mxu0 0
        %1234 = vmatprep.mubr.bf16.mxu0 0
        %1235 = vmatmul.mubr.bf16.gmra.mrb[0].mxu0 %v628
        %v1236 = vpop.f32.mrb[0].mxu0
        %v1237 = vadd.f32 %v601, %v1236
        %v1238 = vpop.f32.mrb[0].mxu0
        %v1239 = vpop.f32.mrb[0].mxu0
        %v1240 = vpop.f32.mrb[0].mxu0
        %1241 = vdwg.mxu0
        %v1242 = vpack.c.bf16 %v665, %v665
        %v1243 = vpack.c.bf16 %v717, %v717
        %v1244 = vpack.c.bf16 %v769, %v769
        %v1245 = vpack.c.bf16 %v821, %v821
        %v1246 = vpack.c.bf16 %v873, %v873
        %v1247 = vpack.c.bf16 %v925, %v925
        %v1248 = vpack.c.bf16 %v977, %v977
        %v1249 = vpack.c.bf16 %v1029, %v1029
        %v1251 = vlaneseq
        %v1252 = vshrl.u32 %v1251, 7
        %v1253 = vsub.s32 0, %v1252
        %v1254 = vrot.slane %v480, %v1253
        %vm1256 = vcmask 64512
        %v1258 = vsel %vm1256, %v1242, 0
        %v1261 = vsel %vm1256, %v1246, 0
        %1263 = vmatprep.subr.bf16.mxu0 0
        %1264 = vmatpush1.bf16.xpose.msra.mxu0 %v1261
        %1265 = vmatprep.subr.bf16.mxu0 0
        %1266 = vmatpush1.bf16.xpose.msra.mxu0 0
        %1267 = vmatprep.subr.bf16.mxu0 0
        %1268 = vmatpush1.bf16.xpose.msra.mxu0 0
        %1269 = vmatprep.subr.bf16.mxu0 0
        %1270 = vmatpush1.bf16.xpose.msra.mxu0 0
        %1271 = vmatprep.subr.bf16.mxu0 0
        %1272 = vmatpush1.bf16.xpose.msra.mxu0 0
        %1273 = vmatprep.subr.bf16.mxu0 0
        %1274 = vmatpush1.bf16.xpose.msra.mxu0 0
        %1275 = vmatprep.subr.bf16.mxu0 0
        %1276 = vmatpush1.bf16.xpose.msra.mxu0 0
        %1277 = vmatprep.subr.bf16.mxu0 0
        %1278 = vmatpush1.bf16.xpose.msra.mxu0 0
        %1279 = vmatprep.subr.bf16.mxu0 0
        %1280 = vmatpush1.bf16.xpose.msra.mxu0 0
        %1281 = vmatprep.subr.bf16.mxu0 0
        %1282 = vmatpush1.bf16.xpose.msra.mxu0 0
        %1283 = vmatprep.subr.bf16.mxu0 0
        %1284 = vmatpush1.bf16.xpose.msra.mxu0 0
        %1285 = vmatprep.subr.bf16.mxu0 0
        %1286 = vmatpush1.bf16.xpose.msra.mxu0 0
        %1287 = vmatprep.subr.bf16.mxu0 0
        %1288 = vmatpush1.bf16.xpose.msra.mxu0 0
        %1289 = vmatprep.subr.bf16.mxu0 0
        %1290 = vmatpush1.bf16.xpose.msra.mxu0 0
        %1291 = vmatprep.subr.bf16.mxu0 0
        %1292 = vmatpush1.bf16.xpose.msra.mxu0 0
        %1293 = vmatprep.subr.bf16.mxu0 0
        %1294 = vmatpush1.bf16.xpose.msra.mxu0 0
        %1295 = vmatprep.mubr.bf16.mxu0 0
        %1296 = vmatmul.mubr.bf16.gmra.mrb[0].mxu0 %v1258
        %v1297 = vpop.f32.mrb[0].mxu0
        %v1298 = vadd.f32 %v1254, %v1297
        %v1299 = vpop.f32.mrb[0].mxu0
        %v1300 = vpop.f32.mrb[0].mxu0
        %v1301 = vpop.f32.mrb[0].mxu0
        %1302 = vdwg.mxu0
        %v1304 = vsel %vm1256, %v1243, 0
        %v1307 = vsel %vm1256, %v1247, 0
        %1309 = vmatprep.subr.bf16.mxu0 0
        %1310 = vmatpush1.bf16.xpose.msra.mxu0 %v1307
        %1311 = vmatprep.subr.bf16.mxu0 0
        %1312 = vmatpush1.bf16.xpose.msra.mxu0 0
        %1313 = vmatprep.subr.bf16.mxu0 0
        %1314 = vmatpush1.bf16.xpose.msra.mxu0 0
        %1315 = vmatprep.subr.bf16.mxu0 0
        %1316 = vmatpush1.bf16.xpose.msra.mxu0 0
        %1317 = vmatprep.subr.bf16.mxu0 0
        %1318 = vmatpush1.bf16.xpose.msra.mxu0 0
        %1319 = vmatprep.subr.bf16.mxu0 0
        %1320 = vmatpush1.bf16.xpose.msra.mxu0 0
        %1321 = vmatprep.subr.bf16.mxu0 0
        %1322 = vmatpush1.bf16.xpose.msra.mxu0 0
        %1323 = vmatprep.subr.bf16.mxu0 0
        %1324 = vmatpush1.bf16.xpose.msra.mxu0 0
        %1325 = vmatprep.subr.bf16.mxu0 0
        %1326 = vmatpush1.bf16.xpose.msra.mxu0 0
        %1327 = vmatprep.subr.bf16.mxu0 0
        %1328 = vmatpush1.bf16.xpose.msra.mxu0 0
        %1329 = vmatprep.subr.bf16.mxu0 0
        %1330 = vmatpush1.bf16.xpose.msra.mxu0 0
        %1331 = vmatprep.subr.bf16.mxu0 0
        %1332 = vmatpush1.bf16.xpose.msra.mxu0 0
        %1333 = vmatprep.subr.bf16.mxu0 0
        %1334 = vmatpush1.bf16.xpose.msra.mxu0 0
        %1335 = vmatprep.subr.bf16.mxu0 0
        %1336 = vmatpush1.bf16.xpose.msra.mxu0 0
        %1337 = vmatprep.subr.bf16.mxu0 0
        %1338 = vmatpush1.bf16.xpose.msra.mxu0 0
        %1339 = vmatprep.subr.bf16.mxu0 0
        %1340 = vmatpush1.bf16.xpose.msra.mxu0 0
        %1341 = vmatprep.mubr.bf16.mxu0 0
        %1342 = vmatmul.mubr.bf16.gmra.mrb[0].mxu0 %v1304
        %v1343 = vpop.f32.mrb[0].mxu0
        %v1344 = vadd.f32 %v1254, %v1343
        %v1345 = vpop.f32.mrb[0].mxu0
        %v1346 = vpop.f32.mrb[0].mxu0
        %v1347 = vpop.f32.mrb[0].mxu0
        %1348 = vdwg.mxu0
        %v1350 = vsel %vm1256, %v1244, 0
        %v1353 = vsel %vm1256, %v1248, 0
        %1355 = vmatprep.subr.bf16.mxu0 0
        %1356 = vmatpush1.bf16.xpose.msra.mxu0 %v1353
        %1357 = vmatprep.subr.bf16.mxu0 0
        %1358 = vmatpush1.bf16.xpose.msra.mxu0 0
        %1359 = vmatprep.subr.bf16.mxu0 0
        %1360 = vmatpush1.bf16.xpose.msra.mxu0 0
        %1361 = vmatprep.subr.bf16.mxu0 0
        %1362 = vmatpush1.bf16.xpose.msra.mxu0 0
        %1363 = vmatprep.subr.bf16.mxu0 0
        %1364 = vmatpush1.bf16.xpose.msra.mxu0 0
        %1365 = vmatprep.subr.bf16.mxu0 0
        %1366 = vmatpush1.bf16.xpose.msra.mxu0 0
        %1367 = vmatprep.subr.bf16.mxu0 0
        %1368 = vmatpush1.bf16.xpose.msra.mxu0 0
        %1369 = vmatprep.subr.bf16.mxu0 0
        %1370 = vmatpush1.bf16.xpose.msra.mxu0 0
        %1371 = vmatprep.subr.bf16.mxu0 0
        %1372 = vmatpush1.bf16.xpose.msra.mxu0 0
        %1373 = vmatprep.subr.bf16.mxu0 0
        %1374 = vmatpush1.bf16.xpose.msra.mxu0 0
        %1375 = vmatprep.subr.bf16.mxu0 0
        %1376 = vmatpush1.bf16.xpose.msra.mxu0 0
        %1377 = vmatprep.subr.bf16.mxu0 0
        %1378 = vmatpush1.bf16.xpose.msra.mxu0 0
        %1379 = vmatprep.subr.bf16.mxu0 0
        %1380 = vmatpush1.bf16.xpose.msra.mxu0 0
        %1381 = vmatprep.subr.bf16.mxu0 0
        %1382 = vmatpush1.bf16.xpose.msra.mxu0 0
        %1383 = vmatprep.subr.bf16.mxu0 0
        %1384 = vmatpush1.bf16.xpose.msra.mxu0 0
        %1385 = vmatprep.subr.bf16.mxu0 0
        %1386 = vmatpush1.bf16.xpose.msra.mxu0 0
        %1387 = vmatprep.mubr.bf16.mxu0 0
        %1388 = vmatmul.mubr.bf16.gmra.mrb[0].mxu0 %v1350
        %v1389 = vpop.f32.mrb[0].mxu0
        %v1390 = vadd.f32 %v1254, %v1389
        %v1391 = vpop.f32.mrb[0].mxu0
        %v1392 = vpop.f32.mrb[0].mxu0
        %v1393 = vpop.f32.mrb[0].mxu0
        %1394 = vdwg.mxu0
        %v1396 = vsel %vm1256, %v1245, 0
        %v1399 = vsel %vm1256, %v1249, 0
        %1401 = vmatprep.subr.bf16.mxu0 0
        %1402 = vmatpush1.bf16.xpose.msra.mxu0 %v1399
        %1403 = vmatprep.subr.bf16.mxu0 0
        %1404 = vmatpush1.bf16.xpose.msra.mxu0 0
        %1405 = vmatprep.subr.bf16.mxu0 0
        %1406 = vmatpush1.bf16.xpose.msra.mxu0 0
        %1407 = vmatprep.subr.bf16.mxu0 0
        %1408 = vmatpush1.bf16.xpose.msra.mxu0 0
        %1409 = vmatprep.subr.bf16.mxu0 0
        %1410 = vmatpush1.bf16.xpose.msra.mxu0 0
        %1411 = vmatprep.subr.bf16.mxu0 0
        %1412 = vmatpush1.bf16.xpose.msra.mxu0 0
        %1413 = vmatprep.subr.bf16.mxu0 0
        %1414 = vmatpush1.bf16.xpose.msra.mxu0 0
        %1415 = vmatprep.subr.bf16.mxu0 0
        %1416 = vmatpush1.bf16.xpose.msra.mxu0 0
        %1417 = vmatprep.subr.bf16.mxu0 0
        %1418 = vmatpush1.bf16.xpose.msra.mxu0 0
        %1419 = vmatprep.subr.bf16.mxu0 0
        %1420 = vmatpush1.bf16.xpose.msra.mxu0 0
        %1421 = vmatprep.subr.bf16.mxu0 0
        %1422 = vmatpush1.bf16.xpose.msra.mxu0 0
        %1423 = vmatprep.subr.bf16.mxu0 0
        %1424 = vmatpush1.bf16.xpose.msra.mxu0 0
        %1425 = vmatprep.subr.bf16.mxu0 0
        %1426 = vmatpush1.bf16.xpose.msra.mxu0 0
        %1427 = vmatprep.subr.bf16.mxu0 0
        %1428 = vmatpush1.bf16.xpose.msra.mxu0 0
        %1429 = vmatprep.subr.bf16.mxu0 0
        %1430 = vmatpush1.bf16.xpose.msra.mxu0 0
        %1431 = vmatprep.subr.bf16.mxu0 0
        %1432 = vmatpush1.bf16.xpose.msra.mxu0 0
        %1433 = vmatprep.mubr.bf16.mxu0 0
        %1434 = vmatmul.mubr.bf16.gmra.mrb[0].mxu0 %v1396
        %v1435 = vpop.f32.mrb[0].mxu0
        %v1436 = vadd.f32 %v1254, %v1435
        %v1437 = vpop.f32.mrb[0].mxu0
        %v1438 = vpop.f32.mrb[0].mxu0
        %v1439 = vpop.f32.mrb[0].mxu0
        %1440 = vdwg.mxu0
        %v1441 = vsel %vm1256, %v1298, -inf
        %1442 = vmax.xlane.f32.xlu0 %v1441
        %v1443 = vpop.xlane.xlu0 %1442
        %v1444 = vsel %vm1256, %v1344, -inf
        %1445 = vmax.xlane.f32.xlu0 %v1444
        %v1446 = vpop.xlane.xlu0 %1445
        %v1447 = vsel %vm1256, %v1390, -inf
        %1448 = vmax.xlane.f32.xlu0 %v1447
        %v1449 = vpop.xlane.xlu0 %1448
        %v1450 = vsel %vm1256, %v1436, -inf
        %1451 = vmax.xlane.f32.xlu0 %v1450
        %v1452 = vpop.xlane.xlu0 %1451
        %v1453 = vsub.f32 %v1298, %v1443
        %v1454 = vsub.f32 %v1344, %v1446
        %v1455 = vsub.f32 %v1390, %v1449
        %v1456 = vsub.f32 %v1436, %v1452
        %v1457 = vmul.f32 %v1453, 1.442695
        %v1458 = vpow.pop %v1457
        %v1459 = vmul.f32 %v1454, 1.442695
        %v1460 = vpow.pop %v1459
        %v1461 = vmul.f32 %v1455, 1.442695
        %v1462 = vpow.pop %v1461
        %v1463 = vmul.f32 %v1456, 1.442695
        %v1464 = vpow.pop %v1463
        %v1465 = vsel %vm1256, %v1458, 0.0
        %1466 = vadd.xlane.f32.xlu0 %v1465
        %v1467 = vpop.xlane.xlu0 %1466
        %v1468 = vsel %vm1256, %v1460, 0.0
        %1469 = vadd.xlane.f32.xlu0 %v1468
        %v1470 = vpop.xlane.xlu0 %1469
        %v1471 = vsel %vm1256, %v1462, 0.0
        %1472 = vadd.xlane.f32.xlu0 %v1471
        %v1473 = vpop.xlane.xlu0 %1472
        %v1474 = vsel %vm1256, %v1464, 0.0
        %1475 = vadd.xlane.f32.xlu0 %v1474
        %v1476 = vpop.xlane.xlu0 %1475
        %v1477 = vrcp.pop %v1467
        %v1478 = vrcp.pop %v1470
        %v1479 = vrcp.pop %v1473
        %v1480 = vrcp.pop %v1476
        %v1481 = vmul.f32 %v1458, %v1477
        %v1482 = vmul.f32 %v1460, %v1478
        %v1483 = vmul.f32 %v1462, %v1479
        %v1484 = vmul.f32 %v1464, %v1480
        %v1485 = vpack.c.bf16 %v1481, %v1481
        %v1486 = vpack.c.bf16 %v1482, %v1482
        %v1487 = vpack.c.bf16 %v1483, %v1483
        %v1488 = vpack.c.bf16 %v1484, %v1484
        %v1489 = vpack.c.bf16 %v1081, %v1081
        %v1490 = vpack.c.bf16 %v1133, %v1133
        %v1491 = vpack.c.bf16 %v1185, %v1185
        %v1492 = vpack.c.bf16 %v1237, %v1237
        %v1494 = vsel %vm1256, %v1485, 0
        %vm1496 = vcmask 1043456
        %v1498 = vsel %vm1496, %v1489, 0
        %1500 = vmatprep.subr.bf16.mxu0 0
        %1501 = vmatpush1.bf16.msra.mxu0 %v1498
        %1502 = vmatprep.subr.bf16.mxu0 0
        %1503 = vmatpush1.bf16.msra.mxu0 0
        %1504 = vmatprep.subr.bf16.mxu0 0
        %1505 = vmatpush1.bf16.msra.mxu0 0
        %1506 = vmatprep.subr.bf16.mxu0 0
        %1507 = vmatpush1.bf16.msra.mxu0 0
        %1508 = vmatprep.subr.bf16.mxu0 0
        %1509 = vmatpush1.bf16.msra.mxu0 0
        %1510 = vmatprep.subr.bf16.mxu0 0
        %1511 = vmatpush1.bf16.msra.mxu0 0
        %1512 = vmatprep.subr.bf16.mxu0 0
        %1513 = vmatpush1.bf16.msra.mxu0 0
        %1514 = vmatprep.subr.bf16.mxu0 0
        %1515 = vmatpush1.bf16.msra.mxu0 0
        %1516 = vmatprep.subr.bf16.mxu0 0
        %1517 = vmatpush1.bf16.msra.mxu0 0
        %1518 = vmatprep.subr.bf16.mxu0 0
        %1519 = vmatpush1.bf16.msra.mxu0 0
        %1520 = vmatprep.subr.bf16.mxu0 0
        %1521 = vmatpush1.bf16.msra.mxu0 0
        %1522 = vmatprep.subr.bf16.mxu0 0
        %1523 = vmatpush1.bf16.msra.mxu0 0
        %1524 = vmatprep.subr.bf16.mxu0 0
        %1525 = vmatpush1.bf16.msra.mxu0 0
        %1526 = vmatprep.subr.bf16.mxu0 0
        %1527 = vmatpush1.bf16.msra.mxu0 0
        %1528 = vmatprep.subr.bf16.mxu0 0
        %1529 = vmatpush1.bf16.msra.mxu0 0
        %1530 = vmatprep.subr.bf16.mxu0 0
        %1531 = vmatpush1.bf16.msra.mxu0 0
        %1532 = vmatprep.mubr.bf16.mxu0 0
        %1533 = vmatmul.mubr.bf16.gmra.mrb[0].mxu0 %v1494
        %v1534 = vpop.f32.mrb[0].mxu0
        %v1535 = vadd.f32 0.0, %v1534
        %v1536 = vpop.f32.mrb[0].mxu0
        %v1537 = vpop.f32.mrb[0].mxu0
        %v1538 = vpop.f32.mrb[0].mxu0
        %1539 = vdwg.mxu0
        %v1541 = vsel %vm1256, %v1486, 0
        %v1544 = vsel %vm1496, %v1490, 0
        %1546 = vmatprep.subr.bf16.mxu0 0
        %1547 = vmatpush1.bf16.msra.mxu0 %v1544
        %1548 = vmatprep.subr.bf16.mxu0 0
        %1549 = vmatpush1.bf16.msra.mxu0 0
        %1550 = vmatprep.subr.bf16.mxu0 0
        %1551 = vmatpush1.bf16.msra.mxu0 0
        %1552 = vmatprep.subr.bf16.mxu0 0
        %1553 = vmatpush1.bf16.msra.mxu0 0
        %1554 = vmatprep.subr.bf16.mxu0 0
        %1555 = vmatpush1.bf16.msra.mxu0 0
        %1556 = vmatprep.subr.bf16.mxu0 0
        %1557 = vmatpush1.bf16.msra.mxu0 0
        %1558 = vmatprep.subr.bf16.mxu0 0
        %1559 = vmatpush1.bf16.msra.mxu0 0
        %1560 = vmatprep.subr.bf16.mxu0 0
        %1561 = vmatpush1.bf16.msra.mxu0 0
        %1562 = vmatprep.subr.bf16.mxu0 0
        %1563 = vmatpush1.bf16.msra.mxu0 0
        %1564 = vmatprep.subr.bf16.mxu0 0
        %1565 = vmatpush1.bf16.msra.mxu0 0
        %1566 = vmatprep.subr.bf16.mxu0 0
        %1567 = vmatpush1.bf16.msra.mxu0 0
        %1568 = vmatprep.subr.bf16.mxu0 0
        %1569 = vmatpush1.bf16.msra.mxu0 0
        %1570 = vmatprep.subr.bf16.mxu0 0
        %1571 = vmatpush1.bf16.msra.mxu0 0
        %1572 = vmatprep.subr.bf16.mxu0 0
        %1573 = vmatpush1.bf16.msra.mxu0 0
        %1574 = vmatprep.subr.bf16.mxu0 0
        %1575 = vmatpush1.bf16.msra.mxu0 0
        %1576 = vmatprep.subr.bf16.mxu0 0
        %1577 = vmatpush1.bf16.msra.mxu0 0
        %1578 = vmatprep.mubr.bf16.mxu0 0
        %1579 = vmatmul.mubr.bf16.gmra.mrb[0].mxu0 %v1541
        %v1580 = vpop.f32.mrb[0].mxu0
        %v1581 = vadd.f32 0.0, %v1580
        %v1582 = vpop.f32.mrb[0].mxu0
        %v1583 = vpop.f32.mrb[0].mxu0
        %v1584 = vpop.f32.mrb[0].mxu0
        %1585 = vdwg.mxu0
        %v1587 = vsel %vm1256, %v1487, 0
        %v1590 = vsel %vm1496, %v1491, 0
        %1592 = vmatprep.subr.bf16.mxu0 0
        %1593 = vmatpush1.bf16.msra.mxu0 %v1590
        %1594 = vmatprep.subr.bf16.mxu0 0
        %1595 = vmatpush1.bf16.msra.mxu0 0
        %1596 = vmatprep.subr.bf16.mxu0 0
        %1597 = vmatpush1.bf16.msra.mxu0 0
        %1598 = vmatprep.subr.bf16.mxu0 0
        %1599 = vmatpush1.bf16.msra.mxu0 0
        %1600 = vmatprep.subr.bf16.mxu0 0
        %1601 = vmatpush1.bf16.msra.mxu0 0
        %1602 = vmatprep.subr.bf16.mxu0 0
        %1603 = vmatpush1.bf16.msra.mxu0 0
        %1604 = vmatprep.subr.bf16.mxu0 0
        %1605 = vmatpush1.bf16.msra.mxu0 0
        %1606 = vmatprep.subr.bf16.mxu0 0
        %1607 = vmatpush1.bf16.msra.mxu0 0
        %1608 = vmatprep.subr.bf16.mxu0 0
        %1609 = vmatpush1.bf16.msra.mxu0 0
        %1610 = vmatprep.subr.bf16.mxu0 0
        %1611 = vmatpush1.bf16.msra.mxu0 0
        %1612 = vmatprep.subr.bf16.mxu0 0
        %1613 = vmatpush1.bf16.msra.mxu0 0
        %1614 = vmatprep.subr.bf16.mxu0 0
        %1615 = vmatpush1.bf16.msra.mxu0 0
        %1616 = vmatprep.subr.bf16.mxu0 0
        %1617 = vmatpush1.bf16.msra.mxu0 0
        %1618 = vmatprep.subr.bf16.mxu0 0
        %1619 = vmatpush1.bf16.msra.mxu0 0
        %1620 = vmatprep.subr.bf16.mxu0 0
        %1621 = vmatpush1.bf16.msra.mxu0 0
        %1622 = vmatprep.subr.bf16.mxu0 0
        %1623 = vmatpush1.bf16.msra.mxu0 0
        %1624 = vmatprep.mubr.bf16.mxu0 0
        %1625 = vmatmul.mubr.bf16.gmra.mrb[0].mxu0 %v1587
        %v1626 = vpop.f32.mrb[0].mxu0
        %v1627 = vadd.f32 0.0, %v1626
        %v1628 = vpop.f32.mrb[0].mxu0
        %v1629 = vpop.f32.mrb[0].mxu0
        %v1630 = vpop.f32.mrb[0].mxu0
        %1631 = vdwg.mxu0
        %v1633 = vsel %vm1256, %v1488, 0
        %v1636 = vsel %vm1496, %v1492, 0
        %1638 = vmatprep.subr.bf16.mxu0 0
        %1639 = vmatpush1.bf16.msra.mxu0 %v1636
        %1640 = vmatprep.subr.bf16.mxu0 0
        %1641 = vmatpush1.bf16.msra.mxu0 0
        %1642 = vmatprep.subr.bf16.mxu0 0
        %1643 = vmatpush1.bf16.msra.mxu0 0
        %1644 = vmatprep.subr.bf16.mxu0 0
        %1645 = vmatpush1.bf16.msra.mxu0 0
        %1646 = vmatprep.subr.bf16.mxu0 0
        %1647 = vmatpush1.bf16.msra.mxu0 0
        %1648 = vmatprep.subr.bf16.mxu0 0
        %1649 = vmatpush1.bf16.msra.mxu0 0
        %1650 = vmatprep.subr.bf16.mxu0 0
        %1651 = vmatpush1.bf16.msra.mxu0 0
        %1652 = vmatprep.subr.bf16.mxu0 0
        %1653 = vmatpush1.bf16.msra.mxu0 0
        %1654 = vmatprep.subr.bf16.mxu0 0
        %1655 = vmatpush1.bf16.msra.mxu0 0
        %1656 = vmatprep.subr.bf16.mxu0 0
        %1657 = vmatpush1.bf16.msra.mxu0 0
        %1658 = vmatprep.subr.bf16.mxu0 0
        %1659 = vmatpush1.bf16.msra.mxu0 0
        %1660 = vmatprep.subr.bf16.mxu0 0
        %1661 = vmatpush1.bf16.msra.mxu0 0
        %1662 = vmatprep.subr.bf16.mxu0 0
        %1663 = vmatpush1.bf16.msra.mxu0 0
        %1664 = vmatprep.subr.bf16.mxu0 0
        %1665 = vmatpush1.bf16.msra.mxu0 0
        %1666 = vmatprep.subr.bf16.mxu0 0
        %1667 = vmatpush1.bf16.msra.mxu0 0
        %1668 = vmatprep.subr.bf16.mxu0 0
        %1669 = vmatpush1.bf16.msra.mxu0 0
        %1670 = vmatprep.mubr.bf16.mxu0 0
        %1671 = vmatmul.mubr.bf16.gmra.mrb[0].mxu0 %v1633
        %v1672 = vpop.f32.mrb[0].mxu0
        %v1673 = vadd.f32 0.0, %v1672
        %v1674 = vpop.f32.mrb[0].mxu0
        %v1675 = vpop.f32.mrb[0].mxu0
        %v1676 = vpop.f32.mrb[0].mxu0
        %1677 = vdwg.mxu0
        %v1678 = vpack.c.bf16 %v1535, %v1535
        %v1679 = vpack.c.bf16 %v1581, %v1581
        %v1680 = vpack.c.bf16 %v1627, %v1627
        %v1681 = vpack.c.bf16 %v1673, %v1673
        %v1682 = vld [vmem:[%s4] sm:$0xf]
        %v1683 = vld [vmem:[%s4 + $0x4] sm:$0xf]
        %v1684 = vld [vmem:[%s4 + $0x8] sm:$0xf]
        %v1685 = vld [vmem:[%s4 + $0xc] sm:$0xf]
        %v1687 = vsel %vm1256, %v1678, 0
        %v1690 = vsel %vm1496, %v1682, 0
        %1692 = vmatprep.subr.bf16.mxu0 0
        %1693 = vmatpush1.bf16.msra.mxu0 %v1690
        %1694 = vmatprep.subr.bf16.mxu0 0
        %1695 = vmatpush1.bf16.msra.mxu0 0
        %1696 = vmatprep.subr.bf16.mxu0 0
        %1697 = vmatpush1.bf16.msra.mxu0 0
        %1698 = vmatprep.subr.bf16.mxu0 0
        %1699 = vmatpush1.bf16.msra.mxu0 0
        %1700 = vmatprep.subr.bf16.mxu0 0
        %1701 = vmatpush1.bf16.msra.mxu0 0
        %1702 = vmatprep.subr.bf16.mxu0 0
        %1703 = vmatpush1.bf16.msra.mxu0 0
        %1704 = vmatprep.subr.bf16.mxu0 0
        %1705 = vmatpush1.bf16.msra.mxu0 0
        %1706 = vmatprep.subr.bf16.mxu0 0
        %1707 = vmatpush1.bf16.msra.mxu0 0
        %1708 = vmatprep.subr.bf16.mxu0 0
        %1709 = vmatpush1.bf16.msra.mxu0 0
        %1710 = vmatprep.subr.bf16.mxu0 0
        %1711 = vmatpush1.bf16.msra.mxu0 0
        %1712 = vmatprep.subr.bf16.mxu0 0
        %1713 = vmatpush1.bf16.msra.mxu0 0
        %1714 = vmatprep.subr.bf16.mxu0 0
        %1715 = vmatpush1.bf16.msra.mxu0 0
        %1716 = vmatprep.subr.bf16.mxu0 0
        %1717 = vmatpush1.bf16.msra.mxu0 0
        %1718 = vmatprep.subr.bf16.mxu0 0
        %1719 = vmatpush1.bf16.msra.mxu0 0
        %1720 = vmatprep.subr.bf16.mxu0 0
        %1721 = vmatpush1.bf16.msra.mxu0 0
        %1722 = vmatprep.subr.bf16.mxu0 0
        %1723 = vmatpush1.bf16.msra.mxu0 0
        %1724 = vmatprep.mubr.bf16.mxu0 0
        %1725 = vmatmul.mubr.bf16.gmra.mrb[0].mxu0 %v1687
        %v1726 = vpop.f32.mrb[0].mxu0
        %v1727 = vadd.f32 0.0, %v1726
        %v1728 = vpop.f32.mrb[0].mxu0
        %v1729 = vpop.f32.mrb[0].mxu0
        %v1730 = vpop.f32.mrb[0].mxu0
        %1731 = vdwg.mxu0
        %v1733 = vsel %vm1256, %v1679, 0
        %v1736 = vsel %vm1496, %v1683, 0
        %1738 = vmatprep.subr.bf16.mxu0 0
        %1739 = vmatpush1.bf16.msra.mxu0 %v1736
        %1740 = vmatprep.subr.bf16.mxu0 0
        %1741 = vmatpush1.bf16.msra.mxu0 0
        %1742 = vmatprep.subr.bf16.mxu0 0
        %1743 = vmatpush1.bf16.msra.mxu0 0
        %1744 = vmatprep.subr.bf16.mxu0 0
        %1745 = vmatpush1.bf16.msra.mxu0 0
        %1746 = vmatprep.subr.bf16.mxu0 0
        %1747 = vmatpush1.bf16.msra.mxu0 0
        %1748 = vmatprep.subr.bf16.mxu0 0
        %1749 = vmatpush1.bf16.msra.mxu0 0
        %1750 = vmatprep.subr.bf16.mxu0 0
        %1751 = vmatpush1.bf16.msra.mxu0 0
        %1752 = vmatprep.subr.bf16.mxu0 0
        %1753 = vmatpush1.bf16.msra.mxu0 0
        %1754 = vmatprep.subr.bf16.mxu0 0
        %1755 = vmatpush1.bf16.msra.mxu0 0
        %1756 = vmatprep.subr.bf16.mxu0 0
        %1757 = vmatpush1.bf16.msra.mxu0 0
        %1758 = vmatprep.subr.bf16.mxu0 0
        %1759 = vmatpush1.bf16.msra.mxu0 0
        %1760 = vmatprep.subr.bf16.mxu0 0
        %1761 = vmatpush1.bf16.msra.mxu0 0
        %1762 = vmatprep.subr.bf16.mxu0 0
        %1763 = vmatpush1.bf16.msra.mxu0 0
        %1764 = vmatprep.subr.bf16.mxu0 0
        %1765 = vmatpush1.bf16.msra.mxu0 0
        %1766 = vmatprep.subr.bf16.mxu0 0
        %1767 = vmatpush1.bf16.msra.mxu0 0
        %1768 = vmatprep.subr.bf16.mxu0 0
        %1769 = vmatpush1.bf16.msra.mxu0 0
        %1770 = vmatprep.mubr.bf16.mxu0 0
        %1771 = vmatmul.mubr.bf16.gmra.mrb[0].mxu0 %v1733
        %v1772 = vpop.f32.mrb[0].mxu0
        %v1773 = vadd.f32 0.0, %v1772
        %v1774 = vpop.f32.mrb[0].mxu0
        %v1775 = vpop.f32.mrb[0].mxu0
        %v1776 = vpop.f32.mrb[0].mxu0
        %1777 = vdwg.mxu0
        %v1779 = vsel %vm1256, %v1680, 0
        %v1782 = vsel %vm1496, %v1684, 0
        %1784 = vmatprep.subr.bf16.mxu0 0
        %1785 = vmatpush1.bf16.msra.mxu0 %v1782
        %1786 = vmatprep.subr.bf16.mxu0 0
        %1787 = vmatpush1.bf16.msra.mxu0 0
        %1788 = vmatprep.subr.bf16.mxu0 0
        %1789 = vmatpush1.bf16.msra.mxu0 0
        %1790 = vmatprep.subr.bf16.mxu0 0
        %1791 = vmatpush1.bf16.msra.mxu0 0
        %1792 = vmatprep.subr.bf16.mxu0 0
        %1793 = vmatpush1.bf16.msra.mxu0 0
        %1794 = vmatprep.subr.bf16.mxu0 0
        %1795 = vmatpush1.bf16.msra.mxu0 0
        %1796 = vmatprep.subr.bf16.mxu0 0
        %1797 = vmatpush1.bf16.msra.mxu0 0
        %1798 = vmatprep.subr.bf16.mxu0 0
        %1799 = vmatpush1.bf16.msra.mxu0 0
        %1800 = vmatprep.subr.bf16.mxu0 0
        %1801 = vmatpush1.bf16.msra.mxu0 0
        %1802 = vmatprep.subr.bf16.mxu0 0
        %1803 = vmatpush1.bf16.msra.mxu0 0
        %1804 = vmatprep.subr.bf16.mxu0 0
        %1805 = vmatpush1.bf16.msra.mxu0 0
        %1806 = vmatprep.subr.bf16.mxu0 0
        %1807 = vmatpush1.bf16.msra.mxu0 0
        %1808 = vmatprep.subr.bf16.mxu0 0
        %1809 = vmatpush1.bf16.msra.mxu0 0
        %1810 = vmatprep.subr.bf16.mxu0 0
        %1811 = vmatpush1.bf16.msra.mxu0 0
        %1812 = vmatprep.subr.bf16.mxu0 0
        %1813 = vmatpush1.bf16.msra.mxu0 0
        %1814 = vmatprep.subr.bf16.mxu0 0
        %1815 = vmatpush1.bf16.msra.mxu0 0
        %1816 = vmatprep.mubr.bf16.mxu0 0
        %1817 = vmatmul.mubr.bf16.gmra.mrb[0].mxu0 %v1779
        %v1818 = vpop.f32.mrb[0].mxu0
        %v1819 = vadd.f32 0.0, %v1818
        %v1820 = vpop.f32.mrb[0].mxu0
        %v1821 = vpop.f32.mrb[0].mxu0
        %v1822 = vpop.f32.mrb[0].mxu0
        %1823 = vdwg.mxu0
        %v1825 = vsel %vm1256, %v1681, 0
        %v1828 = vsel %vm1496, %v1685, 0
        %1830 = vmatprep.subr.bf16.mxu0 0
        %1831 = vmatpush1.bf16.msra.mxu0 %v1828
        %1832 = vmatprep.subr.bf16.mxu0 0
        %1833 = vmatpush1.bf16.msra.mxu0 0
        %1834 = vmatprep.subr.bf16.mxu0 0
        %1835 = vmatpush1.bf16.msra.mxu0 0
        %1836 = vmatprep.subr.bf16.mxu0 0
        %1837 = vmatpush1.bf16.msra.mxu0 0
        %1838 = vmatprep.subr.bf16.mxu0 0
        %1839 = vmatpush1.bf16.msra.mxu0 0
        %1840 = vmatprep.subr.bf16.mxu0 0
        %1841 = vmatpush1.bf16.msra.mxu0 0
        %1842 = vmatprep.subr.bf16.mxu0 0
        %1843 = vmatpush1.bf16.msra.mxu0 0
        %1844 = vmatprep.subr.bf16.mxu0 0
        %1845 = vmatpush1.bf16.msra.mxu0 0
        %1846 = vmatprep.subr.bf16.mxu0 0
        %1847 = vmatpush1.bf16.msra.mxu0 0
        %1848 = vmatprep.subr.bf16.mxu0 0
        %1849 = vmatpush1.bf16.msra.mxu0 0
        %1850 = vmatprep.subr.bf16.mxu0 0
        %1851 = vmatpush1.bf16.msra.mxu0 0
        %1852 = vmatprep.subr.bf16.mxu0 0
        %1853 = vmatpush1.bf16.msra.mxu0 0
        %1854 = vmatprep.subr.bf16.mxu0 0
        %1855 = vmatpush1.bf16.msra.mxu0 0
        %1856 = vmatprep.subr.bf16.mxu0 0
        %1857 = vmatpush1.bf16.msra.mxu0 0
        %1858 = vmatprep.subr.bf16.mxu0 0
        %1859 = vmatpush1.bf16.msra.mxu0 0
        %1860 = vmatprep.subr.bf16.mxu0 0
        %1861 = vmatpush1.bf16.msra.mxu0 0
        %1862 = vmatprep.mubr.bf16.mxu0 0
        %1863 = vmatmul.mubr.bf16.gmra.mrb[0].mxu0 %v1825
        %v1864 = vpop.f32.mrb[0].mxu0
        %v1865 = vadd.f32 0.0, %v1864
        %v1866 = vpop.f32.mrb[0].mxu0
        %v1867 = vpop.f32.mrb[0].mxu0
        %v1868 = vpop.f32.mrb[0].mxu0
        %1869 = vdwg.mxu0
        %v1870 = vsel %vm626, %v1727, 0.0
        %v1871 = vsel %vm626, %v1773, 0.0
        %v1872 = vadd.f32 %v1870, %v1871
        %v1873 = vsel %vm626, %v1819, 0.0
        %v1874 = vadd.f32 %v1872, %v1873
        %v1875 = vsel %vm626, %v1865, 0.0
        %v1876 = vadd.f32 %v1874, %v1875
        %v1877 = vld [vmem:[%s5] sm:$0x1]
        %v1879 = vlaneseq
        %v1880 = vshrl.u32 %v1879, 7
        %v1881 = vsub.s32 0, %v1880
        %v1882 = vrot.slane %v1877, %v1881
        %v1884 = vadd.f32 %v1876, %v1882
        %v1885 = vadd.f32 %v478, %v1884
        %v1886 = vld [vmem:[%s6] sm:$0x1]
        %v1887 = vld [vmem:[%s7] sm:$0x1]
        %v1888 = vsel %vm626, %v1885, 0.0
        %1889 = vadd.xlane.f32.xlu0 %v1888
        %v1890 = vpop.xlane.xlu0 %1889
        %v1891 = vrcp.pop 32.0
        %v1892 = vmul.f32 %v1890, %v1891
        %v1893 = vsub.f32 %v1885, %v1892
        %v1894 = vmul.f32 %v1893, %v1893
        %v1895 = vsel %vm626, %v1894, 0.0
        %1896 = vadd.xlane.f32.xlu0 %v1895
        %v1897 = vpop.xlane.xlu0 %1896
        %v1898 = vmul.f32 %v1897, 0.032258064
        %v1899 = vrsqrt.pop %v1898
        %v1900 = vmul.f32 %v1898, %v1899
        %vm1901 = vcmp.eq.f32.partialorder %v1898, inf
        %v1902 = vsel %vm1901, %v1898, %v1900
        %vm1903 = vcmp.eq.f32.partialorder %v1898, 0.0
        %v1904 = vand.u32 %v1898, 2147483648
        %v1905 = vsel %vm1903, %v1904, %v1902
        %v1907 = vlaneseq
        %v1908 = vshrl.u32 %v1907, 7
        %v1909 = vsub.s32 0, %v1908
        %v1910 = vrot.slane %v1886, %v1909
        %v1912 = vmul.f32 %v1910, %v1893
        %v1913 = vadd.f32 %v1905, 1e-06
        %v1914 = vrcp.pop %v1913
        %v1915 = vmul.f32 %v1912, %v1914
        %v1917 = vlaneseq
        %v1918 = vshrl.u32 %v1917, 7
        %v1919 = vsub.s32 0, %v1918
        %v1920 = vrot.slane %v1887, %v1919
        %v1922 = vadd.f32 %v1915, %v1920
        %v1923 = vpack.c.bf16 %v1922, %v1922
        %v1924 = vld [vmem:[%s8] sm:$0xf]
        %v1925 = vld [vmem:[%s8 + $0x4] sm:$0xf]
        %v1926 = vld [vmem:[%s8 + $0x8] sm:$0xf]
        %v1927 = vld [vmem:[%s8 + $0xc] sm:$0xf]
        %v1928 = vld [vmem:[%s9] sm:$0x1]
        %v1930 = vlaneseq
        %v1931 = vshrl.u32 %v1930, 7
        %v1932 = vsub.s32 0, %v1931
        %v1933 = vrot.slane %v1928, %v1932
        %v1939 = vunpack.c.l.b16 %v1924
        %v1940 = vunpack.c.l.b16 %v1925
        %v1941 = vunpack.c.l.b16 %v1926
        %v1942 = vunpack.c.l.b16 %v1927
        %v1943 = vpack.c.b16 %v1940, %v1939
        %v1944 = vpack.c.b16 %v1942, %v1941
        %v1948 = vsel %vm626, %v1923, 0
        %1950 = vmatprep.subr.bf16.mxu0 0
        %1951 = vmatpush1.bf16.msra.mxu0 %v1943
        %1952 = vmatprep.subr.bf16.mxu0 0
        %1953 = vmatpush1.bf16.msra.mxu0 %v1944
        %1954 = vmatprep.subr.bf16.mxu0 0
        %1955 = vmatpush1.bf16.msra.mxu0 0
        %1956 = vmatprep.subr.bf16.mxu0 0
        %1957 = vmatpush1.bf16.msra.mxu0 0
        %1958 = vmatprep.subr.bf16.mxu0 0
        %1959 = vmatpush1.bf16.msra.mxu0 0
        %1960 = vmatprep.subr.bf16.mxu0 0
        %1961 = vmatpush1.bf16.msra.mxu0 0
        %1962 = vmatprep.subr.bf16.mxu0 0
        %1963 = vmatpush1.bf16.msra.mxu0 0
        %1964 = vmatprep.subr.bf16.mxu0 0
        %1965 = vmatpush1.bf16.msra.mxu0 0
        %1966 = vmatprep.subr.bf16.mxu0 0
        %1967 = vmatpush1.bf16.msra.mxu0 0
        %1968 = vmatprep.subr.bf16.mxu0 0
        %1969 = vmatpush1.bf16.msra.mxu0 0
        %1970 = vmatprep.subr.bf16.mxu0 0
        %1971 = vmatpush1.bf16.msra.mxu0 0
        %1972 = vmatprep.subr.bf16.mxu0 0
        %1973 = vmatpush1.bf16.msra.mxu0 0
        %1974 = vmatprep.subr.bf16.mxu0 0
        %1975 = vmatpush1.bf16.msra.mxu0 0
        %1976 = vmatprep.subr.bf16.mxu0 0
        %1977 = vmatpush1.bf16.msra.mxu0 0
        %1978 = vmatprep.subr.bf16.mxu0 0
        %1979 = vmatpush1.bf16.msra.mxu0 0
        %1980 = vmatprep.subr.bf16.mxu0 0
        %1981 = vmatpush1.bf16.msra.mxu0 0
        %1982 = vmatprep.mubr.bf16.mxu0 0
        %1983 = vmatmul.mubr.bf16.gmra.mrb[0].mxu0 %v1948
        %v1984 = vpop.f32.mrb[0].mxu0
        %v1985 = vadd.f32 %v1933, %v1984
        %v1986 = vpop.f32.mrb[0].mxu0
        %v1987 = vpop.f32.mrb[0].mxu0
        %v1988 = vpop.f32.mrb[0].mxu0
        %1989 = vdwg.mxu0
        %v1990 = vmax.f32 %v1985, 0.0
        %v1991 = vpack.c.bf16 %v1990, %v1990
        %v1992 = vld [vmem:[%s10] sm:$0xf]
        %v1993 = vld [vmem:[%s10 + $0x4] sm:$0xf]
        %v1994 = vld [vmem:[%s10 + $0x8] sm:$0xf]
        %v1995 = vld [vmem:[%s10 + $0xc] sm:$0xf]
        %v1996 = vld [vmem:[%s10 + $0x10] sm:$0xf]
        %v1997 = vld [vmem:[%s10 + $0x14] sm:$0xf]
        %v1998 = vld [vmem:[%s10 + $0x18] sm:$0xf]
        %v1999 = vld [vmem:[%s10 + $0x1c] sm:$0xf]
        %v2000 = vld [vmem:[%s11] sm:$0x1]
        %v2002 = vlaneseq
        %v2003 = vshrl.u32 %v2002, 7
        %v2004 = vsub.s32 0, %v2003
        %v2005 = vrot.slane %v2000, %v2004
        %v2015 = vunpack.c.l.b16 %v1992
        %v2016 = vunpack.c.l.b16 %v1993
        %v2017 = vunpack.c.l.b16 %v1994
        %v2018 = vunpack.c.l.b16 %v1995
        %v2019 = vunpack.c.l.b16 %v1996
        %v2020 = vunpack.c.l.b16 %v1997
        %v2021 = vunpack.c.l.b16 %v1998
        %v2022 = vunpack.c.l.b16 %v1999
        %v2023 = vpack.c.b16 %v2016, %v2015
        %v2024 = vpack.c.b16 %v2018, %v2017
        %v2025 = vpack.c.b16 %v2020, %v2019
        %v2026 = vpack.c.b16 %v2022, %v2021
        %vm2031 = vcmask 523264
        %v2033 = vsel %vm2031, %v1991, 0
        %2035 = vmatprep.subr.bf16.mxu0 0
        %2036 = vmatpush1.bf16.msra.mxu0 %v2023
        %2037 = vmatprep.subr.bf16.mxu0 0
        %2038 = vmatpush1.bf16.msra.mxu0 %v2024
        %2039 = vmatprep.subr.bf16.mxu0 0
        %2040 = vmatpush1.bf16.msra.mxu0 %v2025
        %2041 = vmatprep.subr.bf16.mxu0 0
        %2042 = vmatpush1.bf16.msra.mxu0 %v2026
        %2043 = vmatprep.subr.bf16.mxu0 0
        %2044 = vmatpush1.bf16.msra.mxu0 0
        %2045 = vmatprep.subr.bf16.mxu0 0
        %2046 = vmatpush1.bf16.msra.mxu0 0
        %2047 = vmatprep.subr.bf16.mxu0 0
        %2048 = vmatpush1.bf16.msra.mxu0 0
        %2049 = vmatprep.subr.bf16.mxu0 0
        %2050 = vmatpush1.bf16.msra.mxu0 0
        %2051 = vmatprep.subr.bf16.mxu0 0
        %2052 = vmatpush1.bf16.msra.mxu0 0
        %2053 = vmatprep.subr.bf16.mxu0 0
        %2054 = vmatpush1.bf16.msra.mxu0 0
        %2055 = vmatprep.subr.bf16.mxu0 0
        %2056 = vmatpush1.bf16.msra.mxu0 0
        %2057 = vmatprep.subr.bf16.mxu0 0
        %2058 = vmatpush1.bf16.msra.mxu0 0
        %2059 = vmatprep.subr.bf16.mxu0 0
        %2060 = vmatpush1.bf16.msra.mxu0 0
        %2061 = vmatprep.subr.bf16.mxu0 0
        %2062 = vmatpush1.bf16.msra.mxu0 0
        %2063 = vmatprep.subr.bf16.mxu0 0
        %2064 = vmatpush1.bf16.msra.mxu0 0
        %2065 = vmatprep.subr.bf16.mxu0 0
        %2066 = vmatpush1.bf16.msra.mxu0 0
        %2067 = vmatprep.mubr.bf16.mxu0 0
        %2068 = vmatmul.mubr.bf16.gmra.mrb[0].mxu0 %v2033
        %v2069 = vpop.f32.mrb[0].mxu0
        %v2070 = vadd.f32 %v2005, %v2069
        %v2071 = vpop.f32.mrb[0].mxu0
        %v2072 = vpop.f32.mrb[0].mxu0
        %v2073 = vpop.f32.mrb[0].mxu0
        %2074 = vdwg.mxu0
        %v2075 = vadd.f32 %v1922, %v2070
        %v2076 = vld [vmem:[%s12] sm:$0x1]
        %v2077 = vld [vmem:[%s13] sm:$0x1]
        %v2078 = vsel %vm626, %v2075, 0.0
        %2079 = vadd.xlane.f32.xlu0 %v2078
        %v2080 = vpop.xlane.xlu0 %2079
        %v2081 = vmul.f32 %v2080, %v1891
        %v2082 = vsub.f32 %v2075, %v2081
        %v2083 = vmul.f32 %v2082, %v2082
        %v2084 = vsel %vm626, %v2083, 0.0
        %2085 = vadd.xlane.f32.xlu0 %v2084
        %v2086 = vpop.xlane.xlu0 %2085
        %v2087 = vmul.f32 %v2086, 0.032258064
        %v2088 = vrsqrt.pop %v2087
        %v2089 = vmul.f32 %v2087, %v2088
        %vm2090 = vcmp.eq.f32.partialorder %v2087, inf
        %v2091 = vsel %vm2090, %v2087, %v2089
        %vm2092 = vcmp.eq.f32.partialorder %v2087, 0.0
        %v2093 = vand.u32 %v2087, 2147483648
        %v2094 = vsel %vm2092, %v2093, %v2091
        %v2096 = vlaneseq
        %v2097 = vshrl.u32 %v2096, 7
        %v2098 = vsub.s32 0, %v2097
        %v2099 = vrot.slane %v2076, %v2098
        %v2101 = vmul.f32 %v2099, %v2082
        %v2102 = vadd.f32 %v2094, 1e-06
        %v2103 = vrcp.pop %v2102
        %v2104 = vmul.f32 %v2101, %v2103
        %v2106 = vlaneseq
        %v2107 = vshrl.u32 %v2106, 7
        %v2108 = vsub.s32 0, %v2107
        %v2109 = vrot.slane %v2077, %v2108
        %v2111 = vadd.f32 %v2104, %v2109
        %v2112 = vpack.c.bf16 %v2111, %v2111
        %s2113 = scalar_lea.vmem %s2, 192
        %v2114 = vld [vmem:[%s2113] sm:$0xf]
        %v2115 = vld [vmem:[%s2113 + $0x4] sm:$0xf]
        %v2116 = vld [vmem:[%s2113 + $0x8] sm:$0xf]
        %v2117 = vld [vmem:[%s2113 + $0xc] sm:$0xf]
        %v2118 = vld [vmem:[%s2113 + $0x10] sm:$0xf]
        %v2119 = vld [vmem:[%s2113 + $0x14] sm:$0xf]
        %v2120 = vld [vmem:[%s2113 + $0x18] sm:$0xf]
        %v2121 = vld [vmem:[%s2113 + $0x1c] sm:$0xf]
        %v2122 = vld [vmem:[%s2113 + $0x20] sm:$0xf]
        %v2123 = vld [vmem:[%s2113 + $0x24] sm:$0xf]
        %v2124 = vld [vmem:[%s2113 + $0x28] sm:$0xf]
        %v2125 = vld [vmem:[%s2113 + $0x2c] sm:$0xf]
        %v2126 = vld [vmem:[%s2113 + $0x30] sm:$0xf]
        %v2127 = vld [vmem:[%s2113 + $0x34] sm:$0xf]
        %v2128 = vld [vmem:[%s2113 + $0x38] sm:$0xf]
        %v2129 = vld [vmem:[%s2113 + $0x3c] sm:$0xf]
        %v2130 = vld [vmem:[%s2113 + $0x40] sm:$0xf]
        %v2131 = vld [vmem:[%s2113 + $0x44] sm:$0xf]
        %v2132 = vld [vmem:[%s2113 + $0x48] sm:$0xf]
        %v2133 = vld [vmem:[%s2113 + $0x4c] sm:$0xf]
        %v2134 = vld [vmem:[%s2113 + $0x50] sm:$0xf]
        %v2135 = vld [vmem:[%s2113 + $0x54] sm:$0xf]
        %v2136 = vld [vmem:[%s2113 + $0x58] sm:$0xf]
        %v2137 = vld [vmem:[%s2113 + $0x5c] sm:$0xf]
        %v2138 = vld [vmem:[%s2113 + $0x60] sm:$0xf]
        %v2139 = vld [vmem:[%s2113 + $0x64] sm:$0xf]
        %v2140 = vld [vmem:[%s2113 + $0x68] sm:$0xf]
        %v2141 = vld [vmem:[%s2113 + $0x6c] sm:$0xf]
        %v2142 = vld [vmem:[%s2113 + $0x70] sm:$0xf]
        %v2143 = vld [vmem:[%s2113 + $0x74] sm:$0xf]
        %v2144 = vld [vmem:[%s2113 + $0x78] sm:$0xf]
        %v2145 = vld [vmem:[%s2113 + $0x7c] sm:$0xf]
        %v2146 = vld [vmem:[%s2113 + $0x80] sm:$0xf]
        %v2147 = vld [vmem:[%s2113 + $0x84] sm:$0xf]
        %v2148 = vld [vmem:[%s2113 + $0x88] sm:$0xf]
        %v2149 = vld [vmem:[%s2113 + $0x8c] sm:$0xf]
        %v2150 = vld [vmem:[%s2113 + $0x90] sm:$0xf]
        %v2151 = vld [vmem:[%s2113 + $0x94] sm:$0xf]
        %v2152 = vld [vmem:[%s2113 + $0x98] sm:$0xf]
        %v2153 = vld [vmem:[%s2113 + $0x9c] sm:$0xf]
        %v2154 = vld [vmem:[%s2113 + $0xa0] sm:$0xf]
        %v2155 = vld [vmem:[%s2113 + $0xa4] sm:$0xf]
        %v2156 = vld [vmem:[%s2113 + $0xa8] sm:$0xf]
        %v2157 = vld [vmem:[%s2113 + $0xac] sm:$0xf]
        %v2158 = vld [vmem:[%s2113 + $0xb0] sm:$0xf]
        %v2159 = vld [vmem:[%s2113 + $0xb4] sm:$0xf]
        %v2160 = vld [vmem:[%s2113 + $0xb8] sm:$0xf]
        %v2161 = vld [vmem:[%s2113 + $0xbc] sm:$0xf]
        %s2162 = scalar_lea.vmem %s3, 12
        %v2163 = vld [vmem:[%s2162] sm:$0x1]
        %v2164 = vld [vmem:[%s2162 + $0x1] sm:$0x1]
        %v2165 = vld [vmem:[%s2162 + $0x2] sm:$0x1]
        %v2166 = vld [vmem:[%s2162 + $0x3] sm:$0x1]
        %v2167 = vld [vmem:[%s2162 + $0x4] sm:$0x1]
        %v2168 = vld [vmem:[%s2162 + $0x5] sm:$0x1]
        %v2169 = vld [vmem:[%s2162 + $0x6] sm:$0x1]
        %v2170 = vld [vmem:[%s2162 + $0x7] sm:$0x1]
        %v2171 = vld [vmem:[%s2162 + $0x8] sm:$0x1]
        %v2172 = vld [vmem:[%s2162 + $0x9] sm:$0x1]
        %v2173 = vld [vmem:[%s2162 + $0xa] sm:$0x1]
        %v2174 = vld [vmem:[%s2162 + $0xb] sm:$0x1]
        %v2187 = vlaneseq
        %v2188 = vshrl.u32 %v2187, 7
        %v2189 = vsub.s32 0, %v2188
        %v2190 = vrot.slane %v2163, %v2189
        %v2191 = vlaneseq
        %v2192 = vshrl.u32 %v2191, 7
        %v2193 = vsub.s32 0, %v2192
        %v2194 = vrot.slane %v2164, %v2193
        %v2195 = vlaneseq
        %v2196 = vshrl.u32 %v2195, 7
        %v2197 = vsub.s32 0, %v2196
        %v2198 = vrot.slane %v2165, %v2197
        %v2199 = vlaneseq
        %v2200 = vshrl.u32 %v2199, 7
        %v2201 = vsub.s32 0, %v2200
        %v2202 = vrot.slane %v2166, %v2201
        %v2203 = vlaneseq
        %v2204 = vshrl.u32 %v2203, 7
        %v2205 = vsub.s32 0, %v2204
        %v2206 = vrot.slane %v2167, %v2205
        %v2207 = vlaneseq
        %v2208 = vshrl.u32 %v2207, 7
        %v2209 = vsub.s32 0, %v2208
        %v2210 = vrot.slane %v2168, %v2209
        %v2211 = vlaneseq
        %v2212 = vshrl.u32 %v2211, 7
        %v2213 = vsub.s32 0, %v2212
        %v2214 = vrot.slane %v2169, %v2213
        %v2215 = vlaneseq
        %v2216 = vshrl.u32 %v2215, 7
        %v2217 = vsub.s32 0, %v2216
        %v2218 = vrot.slane %v2170, %v2217
        %v2219 = vlaneseq
        %v2220 = vshrl.u32 %v2219, 7
        %v2221 = vsub.s32 0, %v2220
        %v2222 = vrot.slane %v2171, %v2221
        %v2223 = vlaneseq
        %v2224 = vshrl.u32 %v2223, 7
        %v2225 = vsub.s32 0, %v2224
        %v2226 = vrot.slane %v2172, %v2225
        %v2227 = vlaneseq
        %v2228 = vshrl.u32 %v2227, 7
        %v2229 = vsub.s32 0, %v2228
        %v2230 = vrot.slane %v2173, %v2229
        %v2231 = vlaneseq
        %v2232 = vshrl.u32 %v2231, 7
        %v2233 = vsub.s32 0, %v2232
        %v2234 = vrot.slane %v2174, %v2233
        %v2251 = vunpack.c.l.b16 %v2114
        %v2252 = vunpack.c.l.b16 %v2115
        %v2253 = vunpack.c.l.b16 %v2116
        %v2254 = vunpack.c.l.b16 %v2117
        %v2255 = vpack.c.b16 %v2252, %v2251
        %v2256 = vpack.c.b16 %v2254, %v2253
        %v2260 = vsel %vm626, %v2112, 0
        %2262 = vmatprep.subr.bf16.mxu0 0
        %2263 = vmatpush1.bf16.msra.mxu0 %v2255
        %2264 = vmatprep.subr.bf16.mxu0 0
        %2265 = vmatpush1.bf16.msra.mxu0 %v2256
        %2266 = vmatprep.subr.bf16.mxu0 0
        %2267 = vmatpush1.bf16.msra.mxu0 0
        %2268 = vmatprep.subr.bf16.mxu0 0
        %2269 = vmatpush1.bf16.msra.mxu0 0
        %2270 = vmatprep.subr.bf16.mxu0 0
        %2271 = vmatpush1.bf16.msra.mxu0 0
        %2272 = vmatprep.subr.bf16.mxu0 0
        %2273 = vmatpush1.bf16.msra.mxu0 0
        %2274 = vmatprep.subr.bf16.mxu0 0
        %2275 = vmatpush1.bf16.msra.mxu0 0
        %2276 = vmatprep.subr.bf16.mxu0 0
        %2277 = vmatpush1.bf16.msra.mxu0 0
        %2278 = vmatprep.subr.bf16.mxu0 0
        %2279 = vmatpush1.bf16.msra.mxu0 0
        %2280 = vmatprep.subr.bf16.mxu0 0
        %2281 = vmatpush1.bf16.msra.mxu0 0
        %2282 = vmatprep.subr.bf16.mxu0 0
        %2283 = vmatpush1.bf16.msra.mxu0 0
        %2284 = vmatprep.subr.bf16.mxu0 0
        %2285 = vmatpush1.bf16.msra.mxu0 0
        %2286 = vmatprep.subr.bf16.mxu0 0
        %2287 = vmatpush1.bf16.msra.mxu0 0
        %2288 = vmatprep.subr.bf16.mxu0 0
        %2289 = vmatpush1.bf16.msra.mxu0 0
        %2290 = vmatprep.subr.bf16.mxu0 0
        %2291 = vmatpush1.bf16.msra.mxu0 0
        %2292 = vmatprep.subr.bf16.mxu0 0
        %2293 = vmatpush1.bf16.msra.mxu0 0
        %2294 = vmatprep.mubr.bf16.mxu0 0
        %2295 = vmatmul.mubr.bf16.gmra.mrb[0].mxu0 %v2260
        %v2296 = vpop.f32.mrb[0].mxu0
        %v2297 = vadd.f32 %v2190, %v2296
        %v2298 = vpop.f32.mrb[0].mxu0
        %v2299 = vpop.f32.mrb[0].mxu0
        %v2300 = vpop.f32.mrb[0].mxu0
        %2301 = vdwg.mxu0
        %v2306 = vunpack.c.l.b16 %v2118
        %v2307 = vunpack.c.l.b16 %v2119
        %v2308 = vunpack.c.l.b16 %v2120
        %v2309 = vunpack.c.l.b16 %v2121
        %v2310 = vpack.c.b16 %v2307, %v2306
        %v2311 = vpack.c.b16 %v2309, %v2308
        %2314 = vmatprep.subr.bf16.mxu0 0
        %2315 = vmatpush1.bf16.msra.mxu0 %v2310
        %2316 = vmatprep.subr.bf16.mxu0 0
        %2317 = vmatpush1.bf16.msra.mxu0 %v2311
        %2318 = vmatprep.subr.bf16.mxu0 0
        %2319 = vmatpush1.bf16.msra.mxu0 0
        %2320 = vmatprep.subr.bf16.mxu0 0
        %2321 = vmatpush1.bf16.msra.mxu0 0
        %2322 = vmatprep.subr.bf16.mxu0 0
        %2323 = vmatpush1.bf16.msra.mxu0 0
        %2324 = vmatprep.subr.bf16.mxu0 0
        %2325 = vmatpush1.bf16.msra.mxu0 0
        %2326 = vmatprep.subr.bf16.mxu0 0
        %2327 = vmatpush1.bf16.msra.mxu0 0
        %2328 = vmatprep.subr.bf16.mxu0 0
        %2329 = vmatpush1.bf16.msra.mxu0 0
        %2330 = vmatprep.subr.bf16.mxu0 0
        %2331 = vmatpush1.bf16.msra.mxu0 0
        %2332 = vmatprep.subr.bf16.mxu0 0
        %2333 = vmatpush1.bf16.msra.mxu0 0
        %2334 = vmatprep.subr.bf16.mxu0 0
        %2335 = vmatpush1.bf16.msra.mxu0 0
        %2336 = vmatprep.subr.bf16.mxu0 0
        %2337 = vmatpush1.bf16.msra.mxu0 0
        %2338 = vmatprep.subr.bf16.mxu0 0
        %2339 = vmatpush1.bf16.msra.mxu0 0
        %2340 = vmatprep.subr.bf16.mxu0 0
        %2341 = vmatpush1.bf16.msra.mxu0 0
        %2342 = vmatprep.subr.bf16.mxu0 0
        %2343 = vmatpush1.bf16.msra.mxu0 0
        %2344 = vmatprep.subr.bf16.mxu0 0
        %2345 = vmatpush1.bf16.msra.mxu0 0
        %2346 = vmatprep.mubr.bf16.mxu0 0
        %2347 = vmatmul.mubr.bf16.gmra.mrb[0].mxu0 %v2260
        %v2348 = vpop.f32.mrb[0].mxu0
        %v2349 = vadd.f32 %v2194, %v2348
        %v2350 = vpop.f32.mrb[0].mxu0
        %v2351 = vpop.f32.mrb[0].mxu0
        %v2352 = vpop.f32.mrb[0].mxu0
        %2353 = vdwg.mxu0
        %v2358 = vunpack.c.l.b16 %v2122
        %v2359 = vunpack.c.l.b16 %v2123
        %v2360 = vunpack.c.l.b16 %v2124
        %v2361 = vunpack.c.l.b16 %v2125
        %v2362 = vpack.c.b16 %v2359, %v2358
        %v2363 = vpack.c.b16 %v2361, %v2360
        %2366 = vmatprep.subr.bf16.mxu0 0
        %2367 = vmatpush1.bf16.msra.mxu0 %v2362
        %2368 = vmatprep.subr.bf16.mxu0 0
        %2369 = vmatpush1.bf16.msra.mxu0 %v2363
        %2370 = vmatprep.subr.bf16.mxu0 0
        %2371 = vmatpush1.bf16.msra.mxu0 0
        %2372 = vmatprep.subr.bf16.mxu0 0
        %2373 = vmatpush1.bf16.msra.mxu0 0
        %2374 = vmatprep.subr.bf16.mxu0 0
        %2375 = vmatpush1.bf16.msra.mxu0 0
        %2376 = vmatprep.subr.bf16.mxu0 0
        %2377 = vmatpush1.bf16.msra.mxu0 0
        %2378 = vmatprep.subr.bf16.mxu0 0
        %2379 = vmatpush1.bf16.msra.mxu0 0
        %2380 = vmatprep.subr.bf16.mxu0 0
        %2381 = vmatpush1.bf16.msra.mxu0 0
        %2382 = vmatprep.subr.bf16.mxu0 0
        %2383 = vmatpush1.bf16.msra.mxu0 0
        %2384 = vmatprep.subr.bf16.mxu0 0
        %2385 = vmatpush1.bf16.msra.mxu0 0
        %2386 = vmatprep.subr.bf16.mxu0 0
        %2387 = vmatpush1.bf16.msra.mxu0 0
        %2388 = vmatprep.subr.bf16.mxu0 0
        %2389 = vmatpush1.bf16.msra.mxu0 0
        %2390 = vmatprep.subr.bf16.mxu0 0
        %2391 = vmatpush1.bf16.msra.mxu0 0
        %2392 = vmatprep.subr.bf16.mxu0 0
        %2393 = vmatpush1.bf16.msra.mxu0 0
        %2394 = vmatprep.subr.bf16.mxu0 0
        %2395 = vmatpush1.bf16.msra.mxu0 0
        %2396 = vmatprep.subr.bf16.mxu0 0
        %2397 = vmatpush1.bf16.msra.mxu0 0
        %2398 = vmatprep.mubr.bf16.mxu0 0
        %2399 = vmatmul.mubr.bf16.gmra.mrb[0].mxu0 %v2260
        %v2400 = vpop.f32.mrb[0].mxu0
        %v2401 = vadd.f32 %v2198, %v2400
        %v2402 = vpop.f32.mrb[0].mxu0
        %v2403 = vpop.f32.mrb[0].mxu0
        %v2404 = vpop.f32.mrb[0].mxu0
        %2405 = vdwg.mxu0
        %v2410 = vunpack.c.l.b16 %v2126
        %v2411 = vunpack.c.l.b16 %v2127
        %v2412 = vunpack.c.l.b16 %v2128
        %v2413 = vunpack.c.l.b16 %v2129
        %v2414 = vpack.c.b16 %v2411, %v2410
        %v2415 = vpack.c.b16 %v2413, %v2412
        %2418 = vmatprep.subr.bf16.mxu0 0
        %2419 = vmatpush1.bf16.msra.mxu0 %v2414
        %2420 = vmatprep.subr.bf16.mxu0 0
        %2421 = vmatpush1.bf16.msra.mxu0 %v2415
        %2422 = vmatprep.subr.bf16.mxu0 0
        %2423 = vmatpush1.bf16.msra.mxu0 0
        %2424 = vmatprep.subr.bf16.mxu0 0
        %2425 = vmatpush1.bf16.msra.mxu0 0
        %2426 = vmatprep.subr.bf16.mxu0 0
        %2427 = vmatpush1.bf16.msra.mxu0 0
        %2428 = vmatprep.subr.bf16.mxu0 0
        %2429 = vmatpush1.bf16.msra.mxu0 0
        %2430 = vmatprep.subr.bf16.mxu0 0
        %2431 = vmatpush1.bf16.msra.mxu0 0
        %2432 = vmatprep.subr.bf16.mxu0 0
        %2433 = vmatpush1.bf16.msra.mxu0 0
        %2434 = vmatprep.subr.bf16.mxu0 0
        %2435 = vmatpush1.bf16.msra.mxu0 0
        %2436 = vmatprep.subr.bf16.mxu0 0
        %2437 = vmatpush1.bf16.msra.mxu0 0
        %2438 = vmatprep.subr.bf16.mxu0 0
        %2439 = vmatpush1.bf16.msra.mxu0 0
        %2440 = vmatprep.subr.bf16.mxu0 0
        %2441 = vmatpush1.bf16.msra.mxu0 0
        %2442 = vmatprep.subr.bf16.mxu0 0
        %2443 = vmatpush1.bf16.msra.mxu0 0
        %2444 = vmatprep.subr.bf16.mxu0 0
        %2445 = vmatpush1.bf16.msra.mxu0 0
        %2446 = vmatprep.subr.bf16.mxu0 0
        %2447 = vmatpush1.bf16.msra.mxu0 0
        %2448 = vmatprep.subr.bf16.mxu0 0
        %2449 = vmatpush1.bf16.msra.mxu0 0
        %2450 = vmatprep.mubr.bf16.mxu0 0
        %2451 = vmatmul.mubr.bf16.gmra.mrb[0].mxu0 %v2260
        %v2452 = vpop.f32.mrb[0].mxu0
        %v2453 = vadd.f32 %v2202, %v2452
        %v2454 = vpop.f32.mrb[0].mxu0
        %v2455 = vpop.f32.mrb[0].mxu0
        %v2456 = vpop.f32.mrb[0].mxu0
        %2457 = vdwg.mxu0
        %v2462 = vunpack.c.l.b16 %v2130
        %v2463 = vunpack.c.l.b16 %v2131
        %v2464 = vunpack.c.l.b16 %v2132
        %v2465 = vunpack.c.l.b16 %v2133
        %v2466 = vpack.c.b16 %v2463, %v2462
        %v2467 = vpack.c.b16 %v2465, %v2464
        %2470 = vmatprep.subr.bf16.mxu0 0
        %2471 = vmatpush1.bf16.msra.mxu0 %v2466
        %2472 = vmatprep.subr.bf16.mxu0 0
        %2473 = vmatpush1.bf16.msra.mxu0 %v2467
        %2474 = vmatprep.subr.bf16.mxu0 0
        %2475 = vmatpush1.bf16.msra.mxu0 0
        %2476 = vmatprep.subr.bf16.mxu0 0
        %2477 = vmatpush1.bf16.msra.mxu0 0
        %2478 = vmatprep.subr.bf16.mxu0 0
        %2479 = vmatpush1.bf16.msra.mxu0 0
        %2480 = vmatprep.subr.bf16.mxu0 0
        %2481 = vmatpush1.bf16.msra.mxu0 0
        %2482 = vmatprep.subr.bf16.mxu0 0
        %2483 = vmatpush1.bf16.msra.mxu0 0
        %2484 = vmatprep.subr.bf16.mxu0 0
        %2485 = vmatpush1.bf16.msra.mxu0 0
        %2486 = vmatprep.subr.bf16.mxu0 0
        %2487 = vmatpush1.bf16.msra.mxu0 0
        %2488 = vmatprep.subr.bf16.mxu0 0
        %2489 = vmatpush1.bf16.msra.mxu0 0
        %2490 = vmatprep.subr.bf16.mxu0 0
        %2491 = vmatpush1.bf16.msra.mxu0 0
        %2492 = vmatprep.subr.bf16.mxu0 0
        %2493 = vmatpush1.bf16.msra.mxu0 0
        %2494 = vmatprep.subr.bf16.mxu0 0
        %2495 = vmatpush1.bf16.msra.mxu0 0
        %2496 = vmatprep.subr.bf16.mxu0 0
        %2497 = vmatpush1.bf16.msra.mxu0 0
        %2498 = vmatprep.subr.bf16.mxu0 0
        %2499 = vmatpush1.bf16.msra.mxu0 0
        %2500 = vmatprep.subr.bf16.mxu0 0
        %2501 = vmatpush1.bf16.msra.mxu0 0
        %2502 = vmatprep.mubr.bf16.mxu0 0
        %2503 = vmatmul.mubr.bf16.gmra.mrb[0].mxu0 %v2260
        %v2504 = vpop.f32.mrb[0].mxu0
        %v2505 = vadd.f32 %v2206, %v2504
        %v2506 = vpop.f32.mrb[0].mxu0
        %v2507 = vpop.f32.mrb[0].mxu0
        %v2508 = vpop.f32.mrb[0].mxu0
        %2509 = vdwg.mxu0
        %v2514 = vunpack.c.l.b16 %v2134
        %v2515 = vunpack.c.l.b16 %v2135
        %v2516 = vunpack.c.l.b16 %v2136
        %v2517 = vunpack.c.l.b16 %v2137
        %v2518 = vpack.c.b16 %v2515, %v2514
        %v2519 = vpack.c.b16 %v2517, %v2516
        %2522 = vmatprep.subr.bf16.mxu0 0
        %2523 = vmatpush1.bf16.msra.mxu0 %v2518
        %2524 = vmatprep.subr.bf16.mxu0 0
        %2525 = vmatpush1.bf16.msra.mxu0 %v2519
        %2526 = vmatprep.subr.bf16.mxu0 0
        %2527 = vmatpush1.bf16.msra.mxu0 0
        %2528 = vmatprep.subr.bf16.mxu0 0
        %2529 = vmatpush1.bf16.msra.mxu0 0
        %2530 = vmatprep.subr.bf16.mxu0 0
        %2531 = vmatpush1.bf16.msra.mxu0 0
        %2532 = vmatprep.subr.bf16.mxu0 0
        %2533 = vmatpush1.bf16.msra.mxu0 0
        %2534 = vmatprep.subr.bf16.mxu0 0
        %2535 = vmatpush1.bf16.msra.mxu0 0
        %2536 = vmatprep.subr.bf16.mxu0 0
        %2537 = vmatpush1.bf16.msra.mxu0 0
        %2538 = vmatprep.subr.bf16.mxu0 0
        %2539 = vmatpush1.bf16.msra.mxu0 0
        %2540 = vmatprep.subr.bf16.mxu0 0
        %2541 = vmatpush1.bf16.msra.mxu0 0
        %2542 = vmatprep.subr.bf16.mxu0 0
        %2543 = vmatpush1.bf16.msra.mxu0 0
        %2544 = vmatprep.subr.bf16.mxu0 0
        %2545 = vmatpush1.bf16.msra.mxu0 0
        %2546 = vmatprep.subr.bf16.mxu0 0
        %2547 = vmatpush1.bf16.msra.mxu0 0
        %2548 = vmatprep.subr.bf16.mxu0 0
        %2549 = vmatpush1.bf16.msra.mxu0 0
        %2550 = vmatprep.subr.bf16.mxu0 0
        %2551 = vmatpush1.bf16.msra.mxu0 0
        %2552 = vmatprep.subr.bf16.mxu0 0
        %2553 = vmatpush1.bf16.msra.mxu0 0
        %2554 = vmatprep.mubr.bf16.mxu0 0
        %2555 = vmatmul.mubr.bf16.gmra.mrb[0].mxu0 %v2260
        %v2556 = vpop.f32.mrb[0].mxu0
        %v2557 = vadd.f32 %v2210, %v2556
        %v2558 = vpop.f32.mrb[0].mxu0
        %v2559 = vpop.f32.mrb[0].mxu0
        %v2560 = vpop.f32.mrb[0].mxu0
        %2561 = vdwg.mxu0
        %v2566 = vunpack.c.l.b16 %v2138
        %v2567 = vunpack.c.l.b16 %v2139
        %v2568 = vunpack.c.l.b16 %v2140
        %v2569 = vunpack.c.l.b16 %v2141
        %v2570 = vpack.c.b16 %v2567, %v2566
        %v2571 = vpack.c.b16 %v2569, %v2568
        %2574 = vmatprep.subr.bf16.mxu0 0
        %2575 = vmatpush1.bf16.msra.mxu0 %v2570
        %2576 = vmatprep.subr.bf16.mxu0 0
        %2577 = vmatpush1.bf16.msra.mxu0 %v2571
        %2578 = vmatprep.subr.bf16.mxu0 0
        %2579 = vmatpush1.bf16.msra.mxu0 0
        %2580 = vmatprep.subr.bf16.mxu0 0
        %2581 = vmatpush1.bf16.msra.mxu0 0
        %2582 = vmatprep.subr.bf16.mxu0 0
        %2583 = vmatpush1.bf16.msra.mxu0 0
        %2584 = vmatprep.subr.bf16.mxu0 0
        %2585 = vmatpush1.bf16.msra.mxu0 0
        %2586 = vmatprep.subr.bf16.mxu0 0
        %2587 = vmatpush1.bf16.msra.mxu0 0
        %2588 = vmatprep.subr.bf16.mxu0 0
        %2589 = vmatpush1.bf16.msra.mxu0 0
        %2590 = vmatprep.subr.bf16.mxu0 0
        %2591 = vmatpush1.bf16.msra.mxu0 0
        %2592 = vmatprep.subr.bf16.mxu0 0
        %2593 = vmatpush1.bf16.msra.mxu0 0
        %2594 = vmatprep.subr.bf16.mxu0 0
        %2595 = vmatpush1.bf16.msra.mxu0 0
        %2596 = vmatprep.subr.bf16.mxu0 0
        %2597 = vmatpush1.bf16.msra.mxu0 0
        %2598 = vmatprep.subr.bf16.mxu0 0
        %2599 = vmatpush1.bf16.msra.mxu0 0
        %2600 = vmatprep.subr.bf16.mxu0 0
        %2601 = vmatpush1.bf16.msra.mxu0 0
        %2602 = vmatprep.subr.bf16.mxu0 0
        %2603 = vmatpush1.bf16.msra.mxu0 0
        %2604 = vmatprep.subr.bf16.mxu0 0
        %2605 = vmatpush1.bf16.msra.mxu0 0
        %2606 = vmatprep.mubr.bf16.mxu0 0
        %2607 = vmatmul.mubr.bf16.gmra.mrb[0].mxu0 %v2260
        %v2608 = vpop.f32.mrb[0].mxu0
        %v2609 = vadd.f32 %v2214, %v2608
        %v2610 = vpop.f32.mrb[0].mxu0
        %v2611 = vpop.f32.mrb[0].mxu0
        %v2612 = vpop.f32.mrb[0].mxu0
        %2613 = vdwg.mxu0
        %v2618 = vunpack.c.l.b16 %v2142
        %v2619 = vunpack.c.l.b16 %v2143
        %v2620 = vunpack.c.l.b16 %v2144
        %v2621 = vunpack.c.l.b16 %v2145
        %v2622 = vpack.c.b16 %v2619, %v2618
        %v2623 = vpack.c.b16 %v2621, %v2620
        %2626 = vmatprep.subr.bf16.mxu0 0
        %2627 = vmatpush1.bf16.msra.mxu0 %v2622
        %2628 = vmatprep.subr.bf16.mxu0 0
        %2629 = vmatpush1.bf16.msra.mxu0 %v2623
        %2630 = vmatprep.subr.bf16.mxu0 0
        %2631 = vmatpush1.bf16.msra.mxu0 0
        %2632 = vmatprep.subr.bf16.mxu0 0
        %2633 = vmatpush1.bf16.msra.mxu0 0
        %2634 = vmatprep.subr.bf16.mxu0 0
        %2635 = vmatpush1.bf16.msra.mxu0 0
        %2636 = vmatprep.subr.bf16.mxu0 0
        %2637 = vmatpush1.bf16.msra.mxu0 0
        %2638 = vmatprep.subr.bf16.mxu0 0
        %2639 = vmatpush1.bf16.msra.mxu0 0
        %2640 = vmatprep.subr.bf16.mxu0 0
        %2641 = vmatpush1.bf16.msra.mxu0 0
        %2642 = vmatprep.subr.bf16.mxu0 0
        %2643 = vmatpush1.bf16.msra.mxu0 0
        %2644 = vmatprep.subr.bf16.mxu0 0
        %2645 = vmatpush1.bf16.msra.mxu0 0
        %2646 = vmatprep.subr.bf16.mxu0 0
        %2647 = vmatpush1.bf16.msra.mxu0 0
        %2648 = vmatprep.subr.bf16.mxu0 0
        %2649 = vmatpush1.bf16.msra.mxu0 0
        %2650 = vmatprep.subr.bf16.mxu0 0
        %2651 = vmatpush1.bf16.msra.mxu0 0
        %2652 = vmatprep.subr.bf16.mxu0 0
        %2653 = vmatpush1.bf16.msra.mxu0 0
        %2654 = vmatprep.subr.bf16.mxu0 0
        %2655 = vmatpush1.bf16.msra.mxu0 0
        %2656 = vmatprep.subr.bf16.mxu0 0
        %2657 = vmatpush1.bf16.msra.mxu0 0
        %2658 = vmatprep.mubr.bf16.mxu0 0
        %2659 = vmatmul.mubr.bf16.gmra.mrb[0].mxu0 %v2260
        %v2660 = vpop.f32.mrb[0].mxu0
        %v2661 = vadd.f32 %v2218, %v2660
        %v2662 = vpop.f32.mrb[0].mxu0
        %v2663 = vpop.f32.mrb[0].mxu0
        %v2664 = vpop.f32.mrb[0].mxu0
        %2665 = vdwg.mxu0
        %v2670 = vunpack.c.l.b16 %v2146
        %v2671 = vunpack.c.l.b16 %v2147
        %v2672 = vunpack.c.l.b16 %v2148
        %v2673 = vunpack.c.l.b16 %v2149
        %v2674 = vpack.c.b16 %v2671, %v2670
        %v2675 = vpack.c.b16 %v2673, %v2672
        %2678 = vmatprep.subr.bf16.mxu0 0
        %2679 = vmatpush1.bf16.msra.mxu0 %v2674
        %2680 = vmatprep.subr.bf16.mxu0 0
        %2681 = vmatpush1.bf16.msra.mxu0 %v2675
        %2682 = vmatprep.subr.bf16.mxu0 0
        %2683 = vmatpush1.bf16.msra.mxu0 0
        %2684 = vmatprep.subr.bf16.mxu0 0
        %2685 = vmatpush1.bf16.msra.mxu0 0
        %2686 = vmatprep.subr.bf16.mxu0 0
        %2687 = vmatpush1.bf16.msra.mxu0 0
        %2688 = vmatprep.subr.bf16.mxu0 0
        %2689 = vmatpush1.bf16.msra.mxu0 0
        %2690 = vmatprep.subr.bf16.mxu0 0
        %2691 = vmatpush1.bf16.msra.mxu0 0
        %2692 = vmatprep.subr.bf16.mxu0 0
        %2693 = vmatpush1.bf16.msra.mxu0 0
        %2694 = vmatprep.subr.bf16.mxu0 0
        %2695 = vmatpush1.bf16.msra.mxu0 0
        %2696 = vmatprep.subr.bf16.mxu0 0
        %2697 = vmatpush1.bf16.msra.mxu0 0
        %2698 = vmatprep.subr.bf16.mxu0 0
        %2699 = vmatpush1.bf16.msra.mxu0 0
        %2700 = vmatprep.subr.bf16.mxu0 0
        %2701 = vmatpush1.bf16.msra.mxu0 0
        %2702 = vmatprep.subr.bf16.mxu0 0
        %2703 = vmatpush1.bf16.msra.mxu0 0
        %2704 = vmatprep.subr.bf16.mxu0 0
        %2705 = vmatpush1.bf16.msra.mxu0 0
        %2706 = vmatprep.subr.bf16.mxu0 0
        %2707 = vmatpush1.bf16.msra.mxu0 0
        %2708 = vmatprep.subr.bf16.mxu0 0
        %2709 = vmatpush1.bf16.msra.mxu0 0
        %2710 = vmatprep.mubr.bf16.mxu0 0
        %2711 = vmatmul.mubr.bf16.gmra.mrb[0].mxu0 %v2260
        %v2712 = vpop.f32.mrb[0].mxu0
        %v2713 = vadd.f32 %v2222, %v2712
        %v2714 = vpop.f32.mrb[0].mxu0
        %v2715 = vpop.f32.mrb[0].mxu0
        %v2716 = vpop.f32.mrb[0].mxu0
        %2717 = vdwg.mxu0
        %v2722 = vunpack.c.l.b16 %v2150
        %v2723 = vunpack.c.l.b16 %v2151
        %v2724 = vunpack.c.l.b16 %v2152
        %v2725 = vunpack.c.l.b16 %v2153
        %v2726 = vpack.c.b16 %v2723, %v2722
        %v2727 = vpack.c.b16 %v2725, %v2724
        %2730 = vmatprep.subr.bf16.mxu0 0
        %2731 = vmatpush1.bf16.msra.mxu0 %v2726
        %2732 = vmatprep.subr.bf16.mxu0 0
        %2733 = vmatpush1.bf16.msra.mxu0 %v2727
        %2734 = vmatprep.subr.bf16.mxu0 0
        %2735 = vmatpush1.bf16.msra.mxu0 0
        %2736 = vmatprep.subr.bf16.mxu0 0
        %2737 = vmatpush1.bf16.msra.mxu0 0
        %2738 = vmatprep.subr.bf16.mxu0 0
        %2739 = vmatpush1.bf16.msra.mxu0 0
        %2740 = vmatprep.subr.bf16.mxu0 0
        %2741 = vmatpush1.bf16.msra.mxu0 0
        %2742 = vmatprep.subr.bf16.mxu0 0
        %2743 = vmatpush1.bf16.msra.mxu0 0
        %2744 = vmatprep.subr.bf16.mxu0 0
        %2745 = vmatpush1.bf16.msra.mxu0 0
        %2746 = vmatprep.subr.bf16.mxu0 0
        %2747 = vmatpush1.bf16.msra.mxu0 0
        %2748 = vmatprep.subr.bf16.mxu0 0
        %2749 = vmatpush1.bf16.msra.mxu0 0
        %2750 = vmatprep.subr.bf16.mxu0 0
        %2751 = vmatpush1.bf16.msra.mxu0 0
        %2752 = vmatprep.subr.bf16.mxu0 0
        %2753 = vmatpush1.bf16.msra.mxu0 0
        %2754 = vmatprep.subr.bf16.mxu0 0
        %2755 = vmatpush1.bf16.msra.mxu0 0
        %2756 = vmatprep.subr.bf16.mxu0 0
        %2757 = vmatpush1.bf16.msra.mxu0 0
        %2758 = vmatprep.subr.bf16.mxu0 0
        %2759 = vmatpush1.bf16.msra.mxu0 0
        %2760 = vmatprep.subr.bf16.mxu0 0
        %2761 = vmatpush1.bf16.msra.mxu0 0
        %2762 = vmatprep.mubr.bf16.mxu0 0
        %2763 = vmatmul.mubr.bf16.gmra.mrb[0].mxu0 %v2260
        %v2764 = vpop.f32.mrb[0].mxu0
        %v2765 = vadd.f32 %v2226, %v2764
        %v2766 = vpop.f32.mrb[0].mxu0
        %v2767 = vpop.f32.mrb[0].mxu0
        %v2768 = vpop.f32.mrb[0].mxu0
        %2769 = vdwg.mxu0
        %v2774 = vunpack.c.l.b16 %v2154
        %v2775 = vunpack.c.l.b16 %v2155
        %v2776 = vunpack.c.l.b16 %v2156
        %v2777 = vunpack.c.l.b16 %v2157
        %v2778 = vpack.c.b16 %v2775, %v2774
        %v2779 = vpack.c.b16 %v2777, %v2776
        %2782 = vmatprep.subr.bf16.mxu0 0
        %2783 = vmatpush1.bf16.msra.mxu0 %v2778
        %2784 = vmatprep.subr.bf16.mxu0 0
        %2785 = vmatpush1.bf16.msra.mxu0 %v2779
        %2786 = vmatprep.subr.bf16.mxu0 0
        %2787 = vmatpush1.bf16.msra.mxu0 0
        %2788 = vmatprep.subr.bf16.mxu0 0
        %2789 = vmatpush1.bf16.msra.mxu0 0
        %2790 = vmatprep.subr.bf16.mxu0 0
        %2791 = vmatpush1.bf16.msra.mxu0 0
        %2792 = vmatprep.subr.bf16.mxu0 0
        %2793 = vmatpush1.bf16.msra.mxu0 0
        %2794 = vmatprep.subr.bf16.mxu0 0
        %2795 = vmatpush1.bf16.msra.mxu0 0
        %2796 = vmatprep.subr.bf16.mxu0 0
        %2797 = vmatpush1.bf16.msra.mxu0 0
        %2798 = vmatprep.subr.bf16.mxu0 0
        %2799 = vmatpush1.bf16.msra.mxu0 0
        %2800 = vmatprep.subr.bf16.mxu0 0
        %2801 = vmatpush1.bf16.msra.mxu0 0
        %2802 = vmatprep.subr.bf16.mxu0 0
        %2803 = vmatpush1.bf16.msra.mxu0 0
        %2804 = vmatprep.subr.bf16.mxu0 0
        %2805 = vmatpush1.bf16.msra.mxu0 0
        %2806 = vmatprep.subr.bf16.mxu0 0
        %2807 = vmatpush1.bf16.msra.mxu0 0
        %2808 = vmatprep.subr.bf16.mxu0 0
        %2809 = vmatpush1.bf16.msra.mxu0 0
        %2810 = vmatprep.subr.bf16.mxu0 0
        %2811 = vmatpush1.bf16.msra.mxu0 0
        %2812 = vmatprep.subr.bf16.mxu0 0
        %2813 = vmatpush1.bf16.msra.mxu0 0
        %2814 = vmatprep.mubr.bf16.mxu0 0
        %2815 = vmatmul.mubr.bf16.gmra.mrb[0].mxu0 %v2260
        %v2816 = vpop.f32.mrb[0].mxu0
        %v2817 = vadd.f32 %v2230, %v2816
        %v2818 = vpop.f32.mrb[0].mxu0
        %v2819 = vpop.f32.mrb[0].mxu0
        %v2820 = vpop.f32.mrb[0].mxu0
        %2821 = vdwg.mxu0
        %v2826 = vunpack.c.l.b16 %v2158
        %v2827 = vunpack.c.l.b16 %v2159
        %v2828 = vunpack.c.l.b16 %v2160
        %v2829 = vunpack.c.l.b16 %v2161
        %v2830 = vpack.c.b16 %v2827, %v2826
        %v2831 = vpack.c.b16 %v2829, %v2828
        %2834 = vmatprep.subr.bf16.mxu0 0
        %2835 = vmatpush1.bf16.msra.mxu0 %v2830
        %2836 = vmatprep.subr.bf16.mxu0 0
        %2837 = vmatpush1.bf16.msra.mxu0 %v2831
        %2838 = vmatprep.subr.bf16.mxu0 0
        %2839 = vmatpush1.bf16.msra.mxu0 0
        %2840 = vmatprep.subr.bf16.mxu0 0
        %2841 = vmatpush1.bf16.msra.mxu0 0
        %2842 = vmatprep.subr.bf16.mxu0 0
        %2843 = vmatpush1.bf16.msra.mxu0 0
        %2844 = vmatprep.subr.bf16.mxu0 0
        %2845 = vmatpush1.bf16.msra.mxu0 0
        %2846 = vmatprep.subr.bf16.mxu0 0
        %2847 = vmatpush1.bf16.msra.mxu0 0
        %2848 = vmatprep.subr.bf16.mxu0 0
        %2849 = vmatpush1.bf16.msra.mxu0 0
        %2850 = vmatprep.subr.bf16.mxu0 0
        %2851 = vmatpush1.bf16.msra.mxu0 0
        %2852 = vmatprep.subr.bf16.mxu0 0
        %2853 = vmatpush1.bf16.msra.mxu0 0
        %2854 = vmatprep.subr.bf16.mxu0 0
        %2855 = vmatpush1.bf16.msra.mxu0 0
        %2856 = vmatprep.subr.bf16.mxu0 0
        %2857 = vmatpush1.bf16.msra.mxu0 0
        %2858 = vmatprep.subr.bf16.mxu0 0
        %2859 = vmatpush1.bf16.msra.mxu0 0
        %2860 = vmatprep.subr.bf16.mxu0 0
        %2861 = vmatpush1.bf16.msra.mxu0 0
        %2862 = vmatprep.subr.bf16.mxu0 0
        %2863 = vmatpush1.bf16.msra.mxu0 0
        %2864 = vmatprep.subr.bf16.mxu0 0
        %2865 = vmatpush1.bf16.msra.mxu0 0
        %2866 = vmatprep.mubr.bf16.mxu0 0
        %2867 = vmatmul.mubr.bf16.gmra.mrb[0].mxu0 %v2260
        %v2868 = vpop.f32.mrb[0].mxu0
        %v2869 = vadd.f32 %v2234, %v2868
        %v2870 = vpop.f32.mrb[0].mxu0
        %v2871 = vpop.f32.mrb[0].mxu0
        %v2872 = vpop.f32.mrb[0].mxu0
        %2873 = vdwg.mxu0
        %v2874 = vpack.c.bf16 %v2297, %v2297
        %v2875 = vpack.c.bf16 %v2349, %v2349
        %v2876 = vpack.c.bf16 %v2401, %v2401
        %v2877 = vpack.c.bf16 %v2453, %v2453
        %v2878 = vpack.c.bf16 %v2505, %v2505
        %v2879 = vpack.c.bf16 %v2557, %v2557
        %v2880 = vpack.c.bf16 %v2609, %v2609
        %v2881 = vpack.c.bf16 %v2661, %v2661
        %v2883 = vsel %vm1256, %v2874, 0
        %v2886 = vsel %vm1256, %v2878, 0
        %2888 = vmatprep.subr.bf16.mxu0 0
        %2889 = vmatpush1.bf16.xpose.msra.mxu0 %v2886
        %2890 = vmatprep.subr.bf16.mxu0 0
        %2891 = vmatpush1.bf16.xpose.msra.mxu0 0
        %2892 = vmatprep.subr.bf16.mxu0 0
        %2893 = vmatpush1.bf16.xpose.msra.mxu0 0
        %2894 = vmatprep.subr.bf16.mxu0 0
        %2895 = vmatpush1.bf16.xpose.msra.mxu0 0
        %2896 = vmatprep.subr.bf16.mxu0 0
        %2897 = vmatpush1.bf16.xpose.msra.mxu0 0
        %2898 = vmatprep.subr.bf16.mxu0 0
        %2899 = vmatpush1.bf16.xpose.msra.mxu0 0
        %2900 = vmatprep.subr.bf16.mxu0 0
        %2901 = vmatpush1.bf16.xpose.msra.mxu0 0
        %2902 = vmatprep.subr.bf16.mxu0 0
        %2903 = vmatpush1.bf16.xpose.msra.mxu0 0
        %2904 = vmatprep.subr.bf16.mxu0 0
        %2905 = vmatpush1.bf16.xpose.msra.mxu0 0
        %2906 = vmatprep.subr.bf16.mxu0 0
        %2907 = vmatpush1.bf16.xpose.msra.mxu0 0
        %2908 = vmatprep.subr.bf16.mxu0 0
        %2909 = vmatpush1.bf16.xpose.msra.mxu0 0
        %2910 = vmatprep.subr.bf16.mxu0 0
        %2911 = vmatpush1.bf16.xpose.msra.mxu0 0
        %2912 = vmatprep.subr.bf16.mxu0 0
        %2913 = vmatpush1.bf16.xpose.msra.mxu0 0
        %2914 = vmatprep.subr.bf16.mxu0 0
        %2915 = vmatpush1.bf16.xpose.msra.mxu0 0
        %2916 = vmatprep.subr.bf16.mxu0 0
        %2917 = vmatpush1.bf16.xpose.msra.mxu0 0
        %2918 = vmatprep.subr.bf16.mxu0 0
        %2919 = vmatpush1.bf16.xpose.msra.mxu0 0
        %2920 = vmatprep.mubr.bf16.mxu0 0
        %2921 = vmatmul.mubr.bf16.gmra.mrb[0].mxu0 %v2883
        %v2922 = vpop.f32.mrb[0].mxu0
        %v2923 = vadd.f32 %v1254, %v2922
        %v2924 = vpop.f32.mrb[0].mxu0
        %v2925 = vpop.f32.mrb[0].mxu0
        %v2926 = vpop.f32.mrb[0].mxu0
        %2927 = vdwg.mxu0
        %v2929 = vsel %vm1256, %v2875, 0
        %v2932 = vsel %vm1256, %v2879, 0
        %2934 = vmatprep.subr.bf16.mxu0 0
        %2935 = vmatpush1.bf16.xpose.msra.mxu0 %v2932
        %2936 = vmatprep.subr.bf16.mxu0 0
        %2937 = vmatpush1.bf16.xpose.msra.mxu0 0
        %2938 = vmatprep.subr.bf16.mxu0 0
        %2939 = vmatpush1.bf16.xpose.msra.mxu0 0
        %2940 = vmatprep.subr.bf16.mxu0 0
        %2941 = vmatpush1.bf16.xpose.msra.mxu0 0
        %2942 = vmatprep.subr.bf16.mxu0 0
        %2943 = vmatpush1.bf16.xpose.msra.mxu0 0
        %2944 = vmatprep.subr.bf16.mxu0 0
        %2945 = vmatpush1.bf16.xpose.msra.mxu0 0
        %2946 = vmatprep.subr.bf16.mxu0 0
        %2947 = vmatpush1.bf16.xpose.msra.mxu0 0
        %2948 = vmatprep.subr.bf16.mxu0 0
        %2949 = vmatpush1.bf16.xpose.msra.mxu0 0
        %2950 = vmatprep.subr.bf16.mxu0 0
        %2951 = vmatpush1.bf16.xpose.msra.mxu0 0
        %2952 = vmatprep.subr.bf16.mxu0 0
        %2953 = vmatpush1.bf16.xpose.msra.mxu0 0
        %2954 = vmatprep.subr.bf16.mxu0 0
        %2955 = vmatpush1.bf16.xpose.msra.mxu0 0
        %2956 = vmatprep.subr.bf16.mxu0 0
        %2957 = vmatpush1.bf16.xpose.msra.mxu0 0
        %2958 = vmatprep.subr.bf16.mxu0 0
        %2959 = vmatpush1.bf16.xpose.msra.mxu0 0
        %2960 = vmatprep.subr.bf16.mxu0 0
        %2961 = vmatpush1.bf16.xpose.msra.mxu0 0
        %2962 = vmatprep.subr.bf16.mxu0 0
        %2963 = vmatpush1.bf16.xpose.msra.mxu0 0
        %2964 = vmatprep.subr.bf16.mxu0 0
        %2965 = vmatpush1.bf16.xpose.msra.mxu0 0
        %2966 = vmatprep.mubr.bf16.mxu0 0
        %2967 = vmatmul.mubr.bf16.gmra.mrb[0].mxu0 %v2929
        %v2968 = vpop.f32.mrb[0].mxu0
        %v2969 = vadd.f32 %v1254, %v2968
        %v2970 = vpop.f32.mrb[0].mxu0
        %v2971 = vpop.f32.mrb[0].mxu0
        %v2972 = vpop.f32.mrb[0].mxu0
        %2973 = vdwg.mxu0
        %v2975 = vsel %vm1256, %v2876, 0
        %v2978 = vsel %vm1256, %v2880, 0
        %2980 = vmatprep.subr.bf16.mxu0 0
        %2981 = vmatpush1.bf16.xpose.msra.mxu0 %v2978
        %2982 = vmatprep.subr.bf16.mxu0 0
        %2983 = vmatpush1.bf16.xpose.msra.mxu0 0
        %2984 = vmatprep.subr.bf16.mxu0 0
        %2985 = vmatpush1.bf16.xpose.msra.mxu0 0
        %2986 = vmatprep.subr.bf16.mxu0 0
        %2987 = vmatpush1.bf16.xpose.msra.mxu0 0
        %2988 = vmatprep.subr.bf16.mxu0 0
        %2989 = vmatpush1.bf16.xpose.msra.mxu0 0
        %2990 = vmatprep.subr.bf16.mxu0 0
        %2991 = vmatpush1.bf16.xpose.msra.mxu0 0
        %2992 = vmatprep.subr.bf16.mxu0 0
        %2993 = vmatpush1.bf16.xpose.msra.mxu0 0
        %2994 = vmatprep.subr.bf16.mxu0 0
        %2995 = vmatpush1.bf16.xpose.msra.mxu0 0
        %2996 = vmatprep.subr.bf16.mxu0 0
        %2997 = vmatpush1.bf16.xpose.msra.mxu0 0
        %2998 = vmatprep.subr.bf16.mxu0 0
        %2999 = vmatpush1.bf16.xpose.msra.mxu0 0
        %3000 = vmatprep.subr.bf16.mxu0 0
        %3001 = vmatpush1.bf16.xpose.msra.mxu0 0
        %3002 = vmatprep.subr.bf16.mxu0 0
        %3003 = vmatpush1.bf16.xpose.msra.mxu0 0
        %3004 = vmatprep.subr.bf16.mxu0 0
        %3005 = vmatpush1.bf16.xpose.msra.mxu0 0
        %3006 = vmatprep.subr.bf16.mxu0 0
        %3007 = vmatpush1.bf16.xpose.msra.mxu0 0
        %3008 = vmatprep.subr.bf16.mxu0 0
        %3009 = vmatpush1.bf16.xpose.msra.mxu0 0
        %3010 = vmatprep.subr.bf16.mxu0 0
        %3011 = vmatpush1.bf16.xpose.msra.mxu0 0
        %3012 = vmatprep.mubr.bf16.mxu0 0
        %3013 = vmatmul.mubr.bf16.gmra.mrb[0].mxu0 %v2975
        %v3014 = vpop.f32.mrb[0].mxu0
        %v3015 = vadd.f32 %v1254, %v3014
        %v3016 = vpop.f32.mrb[0].mxu0
        %v3017 = vpop.f32.mrb[0].mxu0
        %v3018 = vpop.f32.mrb[0].mxu0
        %3019 = vdwg.mxu0
        %v3021 = vsel %vm1256, %v2877, 0
        %v3024 = vsel %vm1256, %v2881, 0
        %3026 = vmatprep.subr.bf16.mxu0 0
        %3027 = vmatpush1.bf16.xpose.msra.mxu0 %v3024
        %3028 = vmatprep.subr.bf16.mxu0 0
        %3029 = vmatpush1.bf16.xpose.msra.mxu0 0
        %3030 = vmatprep.subr.bf16.mxu0 0
        %3031 = vmatpush1.bf16.xpose.msra.mxu0 0
        %3032 = vmatprep.subr.bf16.mxu0 0
        %3033 = vmatpush1.bf16.xpose.msra.mxu0 0
        %3034 = vmatprep.subr.bf16.mxu0 0
        %3035 = vmatpush1.bf16.xpose.msra.mxu0 0
        %3036 = vmatprep.subr.bf16.mxu0 0
        %3037 = vmatpush1.bf16.xpose.msra.mxu0 0
        %3038 = vmatprep.subr.bf16.mxu0 0
        %3039 = vmatpush1.bf16.xpose.msra.mxu0 0
        %3040 = vmatprep.subr.bf16.mxu0 0
        %3041 = vmatpush1.bf16.xpose.msra.mxu0 0
        %3042 = vmatprep.subr.bf16.mxu0 0
        %3043 = vmatpush1.bf16.xpose.msra.mxu0 0
        %3044 = vmatprep.subr.bf16.mxu0 0
        %3045 = vmatpush1.bf16.xpose.msra.mxu0 0
        %3046 = vmatprep.subr.bf16.mxu0 0
        %3047 = vmatpush1.bf16.xpose.msra.mxu0 0
        %3048 = vmatprep.subr.bf16.mxu0 0
        %3049 = vmatpush1.bf16.xpose.msra.mxu0 0
        %3050 = vmatprep.subr.bf16.mxu0 0
        %3051 = vmatpush1.bf16.xpose.msra.mxu0 0
        %3052 = vmatprep.subr.bf16.mxu0 0
        %3053 = vmatpush1.bf16.xpose.msra.mxu0 0
        %3054 = vmatprep.subr.bf16.mxu0 0
        %3055 = vmatpush1.bf16.xpose.msra.mxu0 0
        %3056 = vmatprep.subr.bf16.mxu0 0
        %3057 = vmatpush1.bf16.xpose.msra.mxu0 0
        %3058 = vmatprep.mubr.bf16.mxu0 0
        %3059 = vmatmul.mubr.bf16.gmra.mrb[0].mxu0 %v3021
        %v3060 = vpop.f32.mrb[0].mxu0
        %v3061 = vadd.f32 %v1254, %v3060
        %v3062 = vpop.f32.mrb[0].mxu0
        %v3063 = vpop.f32.mrb[0].mxu0
        %v3064 = vpop.f32.mrb[0].mxu0
        %3065 = vdwg.mxu0
        %v3066 = vsel %vm1256, %v2923, -inf
        %3067 = vmax.xlane.f32.xlu0 %v3066
        %v3068 = vpop.xlane.xlu0 %3067
        %v3069 = vsel %vm1256, %v2969, -inf
        %3070 = vmax.xlane.f32.xlu0 %v3069
        %v3071 = vpop.xlane.xlu0 %3070
        %v3072 = vsel %vm1256, %v3015, -inf
        %3073 = vmax.xlane.f32.xlu0 %v3072
        %v3074 = vpop.xlane.xlu0 %3073
        %v3075 = vsel %vm1256, %v3061, -inf
        %3076 = vmax.xlane.f32.xlu0 %v3075
        %v3077 = vpop.xlane.xlu0 %3076
        %v3078 = vsub.f32 %v2923, %v3068
        %v3079 = vsub.f32 %v2969, %v3071
        %v3080 = vsub.f32 %v3015, %v3074
        %v3081 = vsub.f32 %v3061, %v3077
        %v3082 = vmul.f32 %v3078, 1.442695
        %v3083 = vpow.pop %v3082
        %v3084 = vmul.f32 %v3079, 1.442695
        %v3085 = vpow.pop %v3084
        %v3086 = vmul.f32 %v3080, 1.442695
        %v3087 = vpow.pop %v3086
        %v3088 = vmul.f32 %v3081, 1.442695
        %v3089 = vpow.pop %v3088
        %v3090 = vsel %vm1256, %v3083, 0.0
        %3091 = vadd.xlane.f32.xlu0 %v3090
        %v3092 = vpop.xlane.xlu0 %3091
        %v3093 = vsel %vm1256, %v3085, 0.0
        %3094 = vadd.xlane.f32.xlu0 %v3093
        %v3095 = vpop.xlane.xlu0 %3094
        %v3096 = vsel %vm1256, %v3087, 0.0
        %3097 = vadd.xlane.f32.xlu0 %v3096
        %v3098 = vpop.xlane.xlu0 %3097
        %v3099 = vsel %vm1256, %v3089, 0.0
        %3100 = vadd.xlane.f32.xlu0 %v3099
        %v3101 = vpop.xlane.xlu0 %3100
        %v3102 = vrcp.pop %v3092
        %v3103 = vrcp.pop %v3095
        %v3104 = vrcp.pop %v3098
        %v3105 = vrcp.pop %v3101
        %v3106 = vmul.f32 %v3083, %v3102
        %v3107 = vmul.f32 %v3085, %v3103
        %v3108 = vmul.f32 %v3087, %v3104
        %v3109 = vmul.f32 %v3089, %v3105
        %v3110 = vpack.c.bf16 %v3106, %v3106
        %v3111 = vpack.c.bf16 %v3107, %v3107
        %v3112 = vpack.c.bf16 %v3108, %v3108
        %v3113 = vpack.c.bf16 %v3109, %v3109
        %v3114 = vpack.c.bf16 %v2713, %v2713
        %v3115 = vpack.c.bf16 %v2765, %v2765
        %v3116 = vpack.c.bf16 %v2817, %v2817
        %v3117 = vpack.c.bf16 %v2869, %v2869
        %v3119 = vsel %vm1256, %v3110, 0
        %v3122 = vsel %vm1496, %v3114, 0
        %3124 = vmatprep.subr.bf16.mxu0 0
        %3125 = vmatpush1.bf16.msra.mxu0 %v3122
        %3126 = vmatprep.subr.bf16.mxu0 0
        %3127 = vmatpush1.bf16.msra.mxu0 0
        %3128 = vmatprep.subr.bf16.mxu0 0
        %3129 = vmatpush1.bf16.msra.mxu0 0
        %3130 = vmatprep.subr.bf16.mxu0 0
        %3131 = vmatpush1.bf16.msra.mxu0 0
        %3132 = vmatprep.subr.bf16.mxu0 0
        %3133 = vmatpush1.bf16.msra.mxu0 0
        %3134 = vmatprep.subr.bf16.mxu0 0
        %3135 = vmatpush1.bf16.msra.mxu0 0
        %3136 = vmatprep.subr.bf16.mxu0 0
        %3137 = vmatpush1.bf16.msra.mxu0 0
        %3138 = vmatprep.subr.bf16.mxu0 0
        %3139 = vmatpush1.bf16.msra.mxu0 0
        %3140 = vmatprep.subr.bf16.mxu0 0
        %3141 = vmatpush1.bf16.msra.mxu0 0
        %3142 = vmatprep.subr.bf16.mxu0 0
        %3143 = vmatpush1.bf16.msra.mxu0 0
        %3144 = vmatprep.subr.bf16.mxu0 0
        %3145 = vmatpush1.bf16.msra.mxu0 0
        %3146 = vmatprep.subr.bf16.mxu0 0
        %3147 = vmatpush1.bf16.msra.mxu0 0
        %3148 = vmatprep.subr.bf16.mxu0 0
        %3149 = vmatpush1.bf16.msra.mxu0 0
        %3150 = vmatprep.subr.bf16.mxu0 0
        %3151 = vmatpush1.bf16.msra.mxu0 0
        %3152 = vmatprep.subr.bf16.mxu0 0
        %3153 = vmatpush1.bf16.msra.mxu0 0
        %3154 = vmatprep.subr.bf16.mxu0 0
        %3155 = vmatpush1.bf16.msra.mxu0 0
        %3156 = vmatprep.mubr.bf16.mxu0 0
        %3157 = vmatmul.mubr.bf16.gmra.mrb[0].mxu0 %v3119
        %v3158 = vpop.f32.mrb[0].mxu0
        %v3159 = vadd.f32 0.0, %v3158
        %v3160 = vpop.f32.mrb[0].mxu0
        %v3161 = vpop.f32.mrb[0].mxu0
        %v3162 = vpop.f32.mrb[0].mxu0
        %3163 = vdwg.mxu0
        %v3165 = vsel %vm1256, %v3111, 0
        %v3168 = vsel %vm1496, %v3115, 0
        %3170 = vmatprep.subr.bf16.mxu0 0
        %3171 = vmatpush1.bf16.msra.mxu0 %v3168
        %3172 = vmatprep.subr.bf16.mxu0 0
        %3173 = vmatpush1.bf16.msra.mxu0 0
        %3174 = vmatprep.subr.bf16.mxu0 0
        %3175 = vmatpush1.bf16.msra.mxu0 0
        %3176 = vmatprep.subr.bf16.mxu0 0
        %3177 = vmatpush1.bf16.msra.mxu0 0
        %3178 = vmatprep.subr.bf16.mxu0 0
        %3179 = vmatpush1.bf16.msra.mxu0 0
        %3180 = vmatprep.subr.bf16.mxu0 0
        %3181 = vmatpush1.bf16.msra.mxu0 0
        %3182 = vmatprep.subr.bf16.mxu0 0
        %3183 = vmatpush1.bf16.msra.mxu0 0
        %3184 = vmatprep.subr.bf16.mxu0 0
        %3185 = vmatpush1.bf16.msra.mxu0 0
        %3186 = vmatprep.subr.bf16.mxu0 0
        %3187 = vmatpush1.bf16.msra.mxu0 0
        %3188 = vmatprep.subr.bf16.mxu0 0
        %3189 = vmatpush1.bf16.msra.mxu0 0
        %3190 = vmatprep.subr.bf16.mxu0 0
        %3191 = vmatpush1.bf16.msra.mxu0 0
        %3192 = vmatprep.subr.bf16.mxu0 0
        %3193 = vmatpush1.bf16.msra.mxu0 0
        %3194 = vmatprep.subr.bf16.mxu0 0
        %3195 = vmatpush1.bf16.msra.mxu0 0
        %3196 = vmatprep.subr.bf16.mxu0 0
        %3197 = vmatpush1.bf16.msra.mxu0 0
        %3198 = vmatprep.subr.bf16.mxu0 0
        %3199 = vmatpush1.bf16.msra.mxu0 0
        %3200 = vmatprep.subr.bf16.mxu0 0
        %3201 = vmatpush1.bf16.msra.mxu0 0
        %3202 = vmatprep.mubr.bf16.mxu0 0
        %3203 = vmatmul.mubr.bf16.gmra.mrb[0].mxu0 %v3165
        %v3204 = vpop.f32.mrb[0].mxu0
        %v3205 = vadd.f32 0.0, %v3204
        %v3206 = vpop.f32.mrb[0].mxu0
        %v3207 = vpop.f32.mrb[0].mxu0
        %v3208 = vpop.f32.mrb[0].mxu0
        %3209 = vdwg.mxu0
        %v3211 = vsel %vm1256, %v3112, 0
        %v3214 = vsel %vm1496, %v3116, 0
        %3216 = vmatprep.subr.bf16.mxu0 0
        %3217 = vmatpush1.bf16.msra.mxu0 %v3214
        %3218 = vmatprep.subr.bf16.mxu0 0
        %3219 = vmatpush1.bf16.msra.mxu0 0
        %3220 = vmatprep.subr.bf16.mxu0 0
        %3221 = vmatpush1.bf16.msra.mxu0 0
        %3222 = vmatprep.subr.bf16.mxu0 0
        %3223 = vmatpush1.bf16.msra.mxu0 0
        %3224 = vmatprep.subr.bf16.mxu0 0
        %3225 = vmatpush1.bf16.msra.mxu0 0
        %3226 = vmatprep.subr.bf16.mxu0 0
        %3227 = vmatpush1.bf16.msra.mxu0 0
        %3228 = vmatprep.subr.bf16.mxu0 0
        %3229 = vmatpush1.bf16.msra.mxu0 0
        %3230 = vmatprep.subr.bf16.mxu0 0
        %3231 = vmatpush1.bf16.msra.mxu0 0
        %3232 = vmatprep.subr.bf16.mxu0 0
        %3233 = vmatpush1.bf16.msra.mxu0 0
        %3234 = vmatprep.subr.bf16.mxu0 0
        %3235 = vmatpush1.bf16.msra.mxu0 0
        %3236 = vmatprep.subr.bf16.mxu0 0
        %3237 = vmatpush1.bf16.msra.mxu0 0
        %3238 = vmatprep.subr.bf16.mxu0 0
        %3239 = vmatpush1.bf16.msra.mxu0 0
        %3240 = vmatprep.subr.bf16.mxu0 0
        %3241 = vmatpush1.bf16.msra.mxu0 0
        %3242 = vmatprep.subr.bf16.mxu0 0
        %3243 = vmatpush1.bf16.msra.mxu0 0
        %3244 = vmatprep.subr.bf16.mxu0 0
        %3245 = vmatpush1.bf16.msra.mxu0 0
        %3246 = vmatprep.subr.bf16.mxu0 0
        %3247 = vmatpush1.bf16.msra.mxu0 0
        %3248 = vmatprep.mubr.bf16.mxu0 0
        %3249 = vmatmul.mubr.bf16.gmra.mrb[0].mxu0 %v3211
        %v3250 = vpop.f32.mrb[0].mxu0
        %v3251 = vadd.f32 0.0, %v3250
        %v3252 = vpop.f32.mrb[0].mxu0
        %v3253 = vpop.f32.mrb[0].mxu0
        %v3254 = vpop.f32.mrb[0].mxu0
        %3255 = vdwg.mxu0
        %v3257 = vsel %vm1256, %v3113, 0
        %v3260 = vsel %vm1496, %v3117, 0
        %3262 = vmatprep.subr.bf16.mxu0 0
        %3263 = vmatpush1.bf16.msra.mxu0 %v3260
        %3264 = vmatprep.subr.bf16.mxu0 0
        %3265 = vmatpush1.bf16.msra.mxu0 0
        %3266 = vmatprep.subr.bf16.mxu0 0
        %3267 = vmatpush1.bf16.msra.mxu0 0
        %3268 = vmatprep.subr.bf16.mxu0 0
        %3269 = vmatpush1.bf16.msra.mxu0 0
        %3270 = vmatprep.subr.bf16.mxu0 0
        %3271 = vmatpush1.bf16.msra.mxu0 0
        %3272 = vmatprep.subr.bf16.mxu0 0
        %3273 = vmatpush1.bf16.msra.mxu0 0
        %3274 = vmatprep.subr.bf16.mxu0 0
        %3275 = vmatpush1.bf16.msra.mxu0 0
        %3276 = vmatprep.subr.bf16.mxu0 0
        %3277 = vmatpush1.bf16.msra.mxu0 0
        %3278 = vmatprep.subr.bf16.mxu0 0
        %3279 = vmatpush1.bf16.msra.mxu0 0
        %3280 = vmatprep.subr.bf16.mxu0 0
        %3281 = vmatpush1.bf16.msra.mxu0 0
        %3282 = vmatprep.subr.bf16.mxu0 0
        %3283 = vmatpush1.bf16.msra.mxu0 0
        %3284 = vmatprep.subr.bf16.mxu0 0
        %3285 = vmatpush1.bf16.msra.mxu0 0
        %3286 = vmatprep.subr.bf16.mxu0 0
        %3287 = vmatpush1.bf16.msra.mxu0 0
        %3288 = vmatprep.subr.bf16.mxu0 0
        %3289 = vmatpush1.bf16.msra.mxu0 0
        %3290 = vmatprep.subr.bf16.mxu0 0
        %3291 = vmatpush1.bf16.msra.mxu0 0
        %3292 = vmatprep.subr.bf16.mxu0 0
        %3293 = vmatpush1.bf16.msra.mxu0 0
        %3294 = vmatprep.mubr.bf16.mxu0 0
        %3295 = vmatmul.mubr.bf16.gmra.mrb[0].mxu0 %v3257
        %v3296 = vpop.f32.mrb[0].mxu0
        %v3297 = vadd.f32 0.0, %v3296
        %v3298 = vpop.f32.mrb[0].mxu0
        %v3299 = vpop.f32.mrb[0].mxu0
        %v3300 = vpop.f32.mrb[0].mxu0
        %3301 = vdwg.mxu0
        %v3302 = vpack.c.bf16 %v3159, %v3159
        %v3303 = vpack.c.bf16 %v3205, %v3205
        %v3304 = vpack.c.bf16 %v3251, %v3251
        %v3305 = vpack.c.bf16 %v3297, %v3297
        %s3306 = scalar_lea.vmem %s4, 16
        %v3307 = vld [vmem:[%s3306] sm:$0xf]
        %v3308 = vld [vmem:[%s3306 + $0x4] sm:$0xf]
        %v3309 = vld [vmem:[%s3306 + $0x8] sm:$0xf]
        %v3310 = vld [vmem:[%s3306 + $0xc] sm:$0xf]
        %v3312 = vsel %vm1256, %v3302, 0
        %v3315 = vsel %vm1496, %v3307, 0
        %3317 = vmatprep.subr.bf16.mxu0 0
        %3318 = vmatpush1.bf16.msra.mxu0 %v3315
        %3319 = vmatprep.subr.bf16.mxu0 0
        %3320 = vmatpush1.bf16.msra.mxu0 0
        %3321 = vmatprep.subr.bf16.mxu0 0
        %3322 = vmatpush1.bf16.msra.mxu0 0
        %3323 = vmatprep.subr.bf16.mxu0 0
        %3324 = vmatpush1.bf16.msra.mxu0 0
        %3325 = vmatprep.subr.bf16.mxu0 0
        %3326 = vmatpush1.bf16.msra.mxu0 0
        %3327 = vmatprep.subr.bf16.mxu0 0
        %3328 = vmatpush1.bf16.msra.mxu0 0
        %3329 = vmatprep.subr.bf16.mxu0 0
        %3330 = vmatpush1.bf16.msra.mxu0 0
        %3331 = vmatprep.subr.bf16.mxu0 0
        %3332 = vmatpush1.bf16.msra.mxu0 0
        %3333 = vmatprep.subr.bf16.mxu0 0
        %3334 = vmatpush1.bf16.msra.mxu0 0
        %3335 = vmatprep.subr.bf16.mxu0 0
        %3336 = vmatpush1.bf16.msra.mxu0 0
        %3337 = vmatprep.subr.bf16.mxu0 0
        %3338 = vmatpush1.bf16.msra.mxu0 0
        %3339 = vmatprep.subr.bf16.mxu0 0
        %3340 = vmatpush1.bf16.msra.mxu0 0
        %3341 = vmatprep.subr.bf16.mxu0 0
        %3342 = vmatpush1.bf16.msra.mxu0 0
        %3343 = vmatprep.subr.bf16.mxu0 0
        %3344 = vmatpush1.bf16.msra.mxu0 0
        %3345 = vmatprep.subr.bf16.mxu0 0
        %3346 = vmatpush1.bf16.msra.mxu0 0
        %3347 = vmatprep.subr.bf16.mxu0 0
        %3348 = vmatpush1.bf16.msra.mxu0 0
        %3349 = vmatprep.mubr.bf16.mxu0 0
        %3350 = vmatmul.mubr.bf16.gmra.mrb[0].mxu0 %v3312
        %v3351 = vpop.f32.mrb[0].mxu0
        %v3352 = vadd.f32 0.0, %v3351
        %v3353 = vpop.f32.mrb[0].mxu0
        %v3354 = vpop.f32.mrb[0].mxu0
        %v3355 = vpop.f32.mrb[0].mxu0
        %3356 = vdwg.mxu0
        %v3358 = vsel %vm1256, %v3303, 0
        %v3361 = vsel %vm1496, %v3308, 0
        %3363 = vmatprep.subr.bf16.mxu0 0
        %3364 = vmatpush1.bf16.msra.mxu0 %v3361
        %3365 = vmatprep.subr.bf16.mxu0 0
        %3366 = vmatpush1.bf16.msra.mxu0 0
        %3367 = vmatprep.subr.bf16.mxu0 0
        %3368 = vmatpush1.bf16.msra.mxu0 0
        %3369 = vmatprep.subr.bf16.mxu0 0
        %3370 = vmatpush1.bf16.msra.mxu0 0
        %3371 = vmatprep.subr.bf16.mxu0 0
        %3372 = vmatpush1.bf16.msra.mxu0 0
        %3373 = vmatprep.subr.bf16.mxu0 0
        %3374 = vmatpush1.bf16.msra.mxu0 0
        %3375 = vmatprep.subr.bf16.mxu0 0
        %3376 = vmatpush1.bf16.msra.mxu0 0
        %3377 = vmatprep.subr.bf16.mxu0 0
        %3378 = vmatpush1.bf16.msra.mxu0 0
        %3379 = vmatprep.subr.bf16.mxu0 0
        %3380 = vmatpush1.bf16.msra.mxu0 0
        %3381 = vmatprep.subr.bf16.mxu0 0
        %3382 = vmatpush1.bf16.msra.mxu0 0
        %3383 = vmatprep.subr.bf16.mxu0 0
        %3384 = vmatpush1.bf16.msra.mxu0 0
        %3385 = vmatprep.subr.bf16.mxu0 0
        %3386 = vmatpush1.bf16.msra.mxu0 0
        %3387 = vmatprep.subr.bf16.mxu0 0
        %3388 = vmatpush1.bf16.msra.mxu0 0
        %3389 = vmatprep.subr.bf16.mxu0 0
        %3390 = vmatpush1.bf16.msra.mxu0 0
        %3391 = vmatprep.subr.bf16.mxu0 0
        %3392 = vmatpush1.bf16.msra.mxu0 0
        %3393 = vmatprep.subr.bf16.mxu0 0
        %3394 = vmatpush1.bf16.msra.mxu0 0
        %3395 = vmatprep.mubr.bf16.mxu0 0
        %3396 = vmatmul.mubr.bf16.gmra.mrb[0].mxu0 %v3358
        %v3397 = vpop.f32.mrb[0].mxu0
        %v3398 = vadd.f32 0.0, %v3397
        %v3399 = vpop.f32.mrb[0].mxu0
        %v3400 = vpop.f32.mrb[0].mxu0
        %v3401 = vpop.f32.mrb[0].mxu0
        %3402 = vdwg.mxu0
        %v3404 = vsel %vm1256, %v3304, 0
        %v3407 = vsel %vm1496, %v3309, 0
        %3409 = vmatprep.subr.bf16.mxu0 0
        %3410 = vmatpush1.bf16.msra.mxu0 %v3407
        %3411 = vmatprep.subr.bf16.mxu0 0
        %3412 = vmatpush1.bf16.msra.mxu0 0
        %3413 = vmatprep.subr.bf16.mxu0 0
        %3414 = vmatpush1.bf16.msra.mxu0 0
        %3415 = vmatprep.subr.bf16.mxu0 0
        %3416 = vmatpush1.bf16.msra.mxu0 0
        %3417 = vmatprep.subr.bf16.mxu0 0
        %3418 = vmatpush1.bf16.msra.mxu0 0
        %3419 = vmatprep.subr.bf16.mxu0 0
        %3420 = vmatpush1.bf16.msra.mxu0 0
        %3421 = vmatprep.subr.bf16.mxu0 0
        %3422 = vmatpush1.bf16.msra.mxu0 0
        %3423 = vmatprep.subr.bf16.mxu0 0
        %3424 = vmatpush1.bf16.msra.mxu0 0
        %3425 = vmatprep.subr.bf16.mxu0 0
        %3426 = vmatpush1.bf16.msra.mxu0 0
        %3427 = vmatprep.subr.bf16.mxu0 0
        %3428 = vmatpush1.bf16.msra.mxu0 0
        %3429 = vmatprep.subr.bf16.mxu0 0
        %3430 = vmatpush1.bf16.msra.mxu0 0
        %3431 = vmatprep.subr.bf16.mxu0 0
        %3432 = vmatpush1.bf16.msra.mxu0 0
        %3433 = vmatprep.subr.bf16.mxu0 0
        %3434 = vmatpush1.bf16.msra.mxu0 0
        %3435 = vmatprep.subr.bf16.mxu0 0
        %3436 = vmatpush1.bf16.msra.mxu0 0
        %3437 = vmatprep.subr.bf16.mxu0 0
        %3438 = vmatpush1.bf16.msra.mxu0 0
        %3439 = vmatprep.subr.bf16.mxu0 0
        %3440 = vmatpush1.bf16.msra.mxu0 0
        %3441 = vmatprep.mubr.bf16.mxu0 0
        %3442 = vmatmul.mubr.bf16.gmra.mrb[0].mxu0 %v3404
        %v3443 = vpop.f32.mrb[0].mxu0
        %v3444 = vadd.f32 0.0, %v3443
        %v3445 = vpop.f32.mrb[0].mxu0
        %v3446 = vpop.f32.mrb[0].mxu0
        %v3447 = vpop.f32.mrb[0].mxu0
        %3448 = vdwg.mxu0
        %v3450 = vsel %vm1256, %v3305, 0
        %v3453 = vsel %vm1496, %v3310, 0
        %3455 = vmatprep.subr.bf16.mxu0 0
        %3456 = vmatpush1.bf16.msra.mxu0 %v3453
        %3457 = vmatprep.subr.bf16.mxu0 0
        %3458 = vmatpush1.bf16.msra.mxu0 0
        %3459 = vmatprep.subr.bf16.mxu0 0
        %3460 = vmatpush1.bf16.msra.mxu0 0
        %3461 = vmatprep.subr.bf16.mxu0 0
        %3462 = vmatpush1.bf16.msra.mxu0 0
        %3463 = vmatprep.subr.bf16.mxu0 0
        %3464 = vmatpush1.bf16.msra.mxu0 0
        %3465 = vmatprep.subr.bf16.mxu0 0
        %3466 = vmatpush1.bf16.msra.mxu0 0
        %3467 = vmatprep.subr.bf16.mxu0 0
        %3468 = vmatpush1.bf16.msra.mxu0 0
        %3469 = vmatprep.subr.bf16.mxu0 0
        %3470 = vmatpush1.bf16.msra.mxu0 0
        %3471 = vmatprep.subr.bf16.mxu0 0
        %3472 = vmatpush1.bf16.msra.mxu0 0
        %3473 = vmatprep.subr.bf16.mxu0 0
        %3474 = vmatpush1.bf16.msra.mxu0 0
        %3475 = vmatprep.subr.bf16.mxu0 0
        %3476 = vmatpush1.bf16.msra.mxu0 0
        %3477 = vmatprep.subr.bf16.mxu0 0
        %3478 = vmatpush1.bf16.msra.mxu0 0
        %3479 = vmatprep.subr.bf16.mxu0 0
        %3480 = vmatpush1.bf16.msra.mxu0 0
        %3481 = vmatprep.subr.bf16.mxu0 0
        %3482 = vmatpush1.bf16.msra.mxu0 0
        %3483 = vmatprep.subr.bf16.mxu0 0
        %3484 = vmatpush1.bf16.msra.mxu0 0
        %3485 = vmatprep.subr.bf16.mxu0 0
        %3486 = vmatpush1.bf16.msra.mxu0 0
        %3487 = vmatprep.mubr.bf16.mxu0 0
        %3488 = vmatmul.mubr.bf16.gmra.mrb[0].mxu0 %v3450
        %v3489 = vpop.f32.mrb[0].mxu0
        %v3490 = vadd.f32 0.0, %v3489
        %v3491 = vpop.f32.mrb[0].mxu0
        %v3492 = vpop.f32.mrb[0].mxu0
        %v3493 = vpop.f32.mrb[0].mxu0
        %3494 = vdwg.mxu0
        %v3495 = vsel %vm626, %v3352, 0.0
        %v3496 = vsel %vm626, %v3398, 0.0
        %v3497 = vadd.f32 %v3495, %v3496
        %v3498 = vsel %vm626, %v3444, 0.0
        %v3499 = vadd.f32 %v3497, %v3498
        %v3500 = vsel %vm626, %v3490, 0.0
        %v3501 = vadd.f32 %v3499, %v3500
        %s3502 = scalar_lea.vmem %s5, 1
        %v3503 = vld [vmem:[%s3502] sm:$0x1]
        %v3505 = vlaneseq
        %v3506 = vshrl.u32 %v3505, 7
        %v3507 = vsub.s32 0, %v3506
        %v3508 = vrot.slane %v3503, %v3507
        %v3510 = vadd.f32 %v3501, %v3508
        %v3511 = vadd.f32 %v2111, %v3510
        %s3512 = scalar_lea.vmem %s6, 1
        %v3513 = vld [vmem:[%s3512] sm:$0x1]
        %s3514 = scalar_lea.vmem %s7, 1
        %v3515 = vld [vmem:[%s3514] sm:$0x1]
        %v3516 = vsel %vm626, %v3511, 0.0
        %3517 = vadd.xlane.f32.xlu0 %v3516
        %v3518 = vpop.xlane.xlu0 %3517
        %v3519 = vmul.f32 %v3518, %v1891
        %v3520 = vsub.f32 %v3511, %v3519
        %v3521 = vmul.f32 %v3520, %v3520
        %v3522 = vsel %vm626, %v3521, 0.0
        %3523 = vadd.xlane.f32.xlu0 %v3522
        %v3524 = vpop.xlane.xlu0 %3523
        %v3525 = vmul.f32 %v3524, 0.032258064
        %v3526 = vrsqrt.pop %v3525
        %v3527 = vmul.f32 %v3525, %v3526
        %vm3528 = vcmp.eq.f32.partialorder %v3525, inf
        %v3529 = vsel %vm3528, %v3525, %v3527
        %vm3530 = vcmp.eq.f32.partialorder %v3525, 0.0
        %v3531 = vand.u32 %v3525, 2147483648
        %v3532 = vsel %vm3530, %v3531, %v3529
        %v3534 = vlaneseq
        %v3535 = vshrl.u32 %v3534, 7
        %v3536 = vsub.s32 0, %v3535
        %v3537 = vrot.slane %v3513, %v3536
        %v3539 = vmul.f32 %v3537, %v3520
        %v3540 = vadd.f32 %v3532, 1e-06
        %v3541 = vrcp.pop %v3540
        %v3542 = vmul.f32 %v3539, %v3541
        %v3544 = vlaneseq
        %v3545 = vshrl.u32 %v3544, 7
        %v3546 = vsub.s32 0, %v3545
        %v3547 = vrot.slane %v3515, %v3546
        %v3549 = vadd.f32 %v3542, %v3547
        %v3550 = vpack.c.bf16 %v3549, %v3549
        %s3551 = scalar_lea.vmem %s8, 16
        %v3552 = vld [vmem:[%s3551] sm:$0xf]
        %v3553 = vld [vmem:[%s3551 + $0x4] sm:$0xf]
        %v3554 = vld [vmem:[%s3551 + $0x8] sm:$0xf]
        %v3555 = vld [vmem:[%s3551 + $0xc] sm:$0xf]
        %s3556 = scalar_lea.vmem %s9, 1
        %v3557 = vld [vmem:[%s3556] sm:$0x1]
        %v3559 = vlaneseq
        %v3560 = vshrl.u32 %v3559, 7
        %v3561 = vsub.s32 0, %v3560
        %v3562 = vrot.slane %v3557, %v3561
        %v3568 = vunpack.c.l.b16 %v3552
        %v3569 = vunpack.c.l.b16 %v3553
        %v3570 = vunpack.c.l.b16 %v3554
        %v3571 = vunpack.c.l.b16 %v3555
        %v3572 = vpack.c.b16 %v3569, %v3568
        %v3573 = vpack.c.b16 %v3571, %v3570
        %v3577 = vsel %vm626, %v3550, 0
        %3579 = vmatprep.subr.bf16.mxu0 0
        %3580 = vmatpush1.bf16.msra.mxu0 %v3572
        %3581 = vmatprep.subr.bf16.mxu0 0
        %3582 = vmatpush1.bf16.msra.mxu0 %v3573
        %3583 = vmatprep.subr.bf16.mxu0 0
        %3584 = vmatpush1.bf16.msra.mxu0 0
        %3585 = vmatprep.subr.bf16.mxu0 0
        %3586 = vmatpush1.bf16.msra.mxu0 0
        %3587 = vmatprep.subr.bf16.mxu0 0
        %3588 = vmatpush1.bf16.msra.mxu0 0
        %3589 = vmatprep.subr.bf16.mxu0 0
        %3590 = vmatpush1.bf16.msra.mxu0 0
        %3591 = vmatprep.subr.bf16.mxu0 0
        %3592 = vmatpush1.bf16.msra.mxu0 0
        %3593 = vmatprep.subr.bf16.mxu0 0
        %3594 = vmatpush1.bf16.msra.mxu0 0
        %3595 = vmatprep.subr.bf16.mxu0 0
        %3596 = vmatpush1.bf16.msra.mxu0 0
        %3597 = vmatprep.subr.bf16.mxu0 0
        %3598 = vmatpush1.bf16.msra.mxu0 0
        %3599 = vmatprep.subr.bf16.mxu0 0
        %3600 = vmatpush1.bf16.msra.mxu0 0
        %3601 = vmatprep.subr.bf16.mxu0 0
        %3602 = vmatpush1.bf16.msra.mxu0 0
        %3603 = vmatprep.subr.bf16.mxu0 0
        %3604 = vmatpush1.bf16.msra.mxu0 0
        %3605 = vmatprep.subr.bf16.mxu0 0
        %3606 = vmatpush1.bf16.msra.mxu0 0
        %3607 = vmatprep.subr.bf16.mxu0 0
        %3608 = vmatpush1.bf16.msra.mxu0 0
        %3609 = vmatprep.subr.bf16.mxu0 0
        %3610 = vmatpush1.bf16.msra.mxu0 0
        %3611 = vmatprep.mubr.bf16.mxu0 0
        %3612 = vmatmul.mubr.bf16.gmra.mrb[0].mxu0 %v3577
        %v3613 = vpop.f32.mrb[0].mxu0
        %v3614 = vadd.f32 %v3562, %v3613
        %v3615 = vpop.f32.mrb[0].mxu0
        %v3616 = vpop.f32.mrb[0].mxu0
        %v3617 = vpop.f32.mrb[0].mxu0
        %3618 = vdwg.mxu0
        %v3619 = vmax.f32 %v3614, 0.0
        %v3620 = vpack.c.bf16 %v3619, %v3619
        %s3621 = scalar_lea.vmem %s10, 32
        %v3622 = vld [vmem:[%s3621] sm:$0xf]
        %v3623 = vld [vmem:[%s3621 + $0x4] sm:$0xf]
        %v3624 = vld [vmem:[%s3621 + $0x8] sm:$0xf]
        %v3625 = vld [vmem:[%s3621 + $0xc] sm:$0xf]
        %v3626 = vld [vmem:[%s3621 + $0x10] sm:$0xf]
        %v3627 = vld [vmem:[%s3621 + $0x14] sm:$0xf]
        %v3628 = vld [vmem:[%s3621 + $0x18] sm:$0xf]
        %v3629 = vld [vmem:[%s3621 + $0x1c] sm:$0xf]
        %s3630 = scalar_lea.vmem %s11, 1
        %v3631 = vld [vmem:[%s3630] sm:$0x1]
        %v3633 = vlaneseq
        %v3634 = vshrl.u32 %v3633, 7
        %v3635 = vsub.s32 0, %v3634
        %v3636 = vrot.slane %v3631, %v3635
        %v3646 = vunpack.c.l.b16 %v3622
        %v3647 = vunpack.c.l.b16 %v3623
        %v3648 = vunpack.c.l.b16 %v3624
        %v3649 = vunpack.c.l.b16 %v3625
        %v3650 = vunpack.c.l.b16 %v3626
        %v3651 = vunpack.c.l.b16 %v3627
        %v3652 = vunpack.c.l.b16 %v3628
        %v3653 = vunpack.c.l.b16 %v3629
        %v3654 = vpack.c.b16 %v3647, %v3646
        %v3655 = vpack.c.b16 %v3649, %v3648
        %v3656 = vpack.c.b16 %v3651, %v3650
        %v3657 = vpack.c.b16 %v3653, %v3652
        %v3663 = vsel %vm2031, %v3620, 0
        %3665 = vmatprep.subr.bf16.mxu0 0
        %3666 = vmatpush1.bf16.msra.mxu0 %v3654
        %3667 = vmatprep.subr.bf16.mxu0 0
        %3668 = vmatpush1.bf16.msra.mxu0 %v3655
        %3669 = vmatprep.subr.bf16.mxu0 0
        %3670 = vmatpush1.bf16.msra.mxu0 %v3656
        %3671 = vmatprep.subr.bf16.mxu0 0
        %3672 = vmatpush1.bf16.msra.mxu0 %v3657
        %3673 = vmatprep.subr.bf16.mxu0 0
        %3674 = vmatpush1.bf16.msra.mxu0 0
        %3675 = vmatprep.subr.bf16.mxu0 0
        %3676 = vmatpush1.bf16.msra.mxu0 0
        %3677 = vmatprep.subr.bf16.mxu0 0
        %3678 = vmatpush1.bf16.msra.mxu0 0
        %3679 = vmatprep.subr.bf16.mxu0 0
        %3680 = vmatpush1.bf16.msra.mxu0 0
        %3681 = vmatprep.subr.bf16.mxu0 0
        %3682 = vmatpush1.bf16.msra.mxu0 0
        %3683 = vmatprep.subr.bf16.mxu0 0
        %3684 = vmatpush1.bf16.msra.mxu0 0
        %3685 = vmatprep.subr.bf16.mxu0 0
        %3686 = vmatpush1.bf16.msra.mxu0 0
        %3687 = vmatprep.subr.bf16.mxu0 0
        %3688 = vmatpush1.bf16.msra.mxu0 0
        %3689 = vmatprep.subr.bf16.mxu0 0
        %3690 = vmatpush1.bf16.msra.mxu0 0
        %3691 = vmatprep.subr.bf16.mxu0 0
        %3692 = vmatpush1.bf16.msra.mxu0 0
        %3693 = vmatprep.subr.bf16.mxu0 0
        %3694 = vmatpush1.bf16.msra.mxu0 0
        %3695 = vmatprep.subr.bf16.mxu0 0
        %3696 = vmatpush1.bf16.msra.mxu0 0
        %3697 = vmatprep.mubr.bf16.mxu0 0
        %3698 = vmatmul.mubr.bf16.gmra.mrb[0].mxu0 %v3663
        %v3699 = vpop.f32.mrb[0].mxu0
        %v3700 = vadd.f32 %v3636, %v3699
        %v3701 = vpop.f32.mrb[0].mxu0
        %v3702 = vpop.f32.mrb[0].mxu0
        %v3703 = vpop.f32.mrb[0].mxu0
        %3704 = vdwg.mxu0
        %v3705 = vadd.f32 %v3549, %v3700
        %s3706 = scalar_lea.vmem %s12, 1
        %v3707 = vld [vmem:[%s3706] sm:$0x1]
        %s3708 = scalar_lea.vmem %s13, 1
        %v3709 = vld [vmem:[%s3708] sm:$0x1]
        %v3710 = vsel %vm626, %v3705, 0.0
        %3711 = vadd.xlane.f32.xlu0 %v3710
        %v3712 = vpop.xlane.xlu0 %3711
        %v3713 = vmul.f32 %v3712, %v1891
        %v3714 = vsub.f32 %v3705, %v3713
        %v3715 = vmul.f32 %v3714, %v3714
        %v3716 = vsel %vm626, %v3715, 0.0
        %3717 = vadd.xlane.f32.xlu0 %v3716
        %v3718 = vpop.xlane.xlu0 %3717
        %v3719 = vmul.f32 %v3718, 0.032258064
        %v3720 = vrsqrt.pop %v3719
        %v3721 = vmul.f32 %v3719, %v3720
        %vm3722 = vcmp.eq.f32.partialorder %v3719, inf
        %v3723 = vsel %vm3722, %v3719, %v3721
        %vm3724 = vcmp.eq.f32.partialorder %v3719, 0.0
        %v3725 = vand.u32 %v3719, 2147483648
        %v3726 = vsel %vm3724, %v3725, %v3723
        %v3728 = vlaneseq
        %v3729 = vshrl.u32 %v3728, 7
        %v3730 = vsub.s32 0, %v3729
        %v3731 = vrot.slane %v3707, %v3730
        %v3733 = vmul.f32 %v3731, %v3714
        %v3734 = vadd.f32 %v3726, 1e-06
        %v3735 = vrcp.pop %v3734
        %v3736 = vmul.f32 %v3733, %v3735
        %v3738 = vlaneseq
        %v3739 = vshrl.u32 %v3738, 7
        %v3740 = vsub.s32 0, %v3739
        %v3741 = vrot.slane %v3709, %v3740
        %v3743 = vadd.f32 %v3736, %v3741
        %3744 = vst.msk [vmem:[%s469] sm:$0xff] %vm626, %v3743
        %s3745 = sand.u32 %s340, 1
        %s3746 = scalar_lea.sflag [#allocation3], %s3745
        %s3747 = sand.u32 %s340, 1
        %s3748 = smul.addr %s3747, 8
        %s3749 = scalar_lea.vmem [#allocation2], %s3748
        // Predicated region
        $region77: #{tpu_custom_call.1} parent=75 // pred_check
          %p3750 = pneg %p350
        $region78: #{tpu_custom_call.1} parent=75 // pred_check_branch
          %3752 = sbr.rel (%p3750) target = $region80
        $region79: #{tpu_custom_call.1} parent=75 // pred_region
          %s3754 = ssub.s32 128, 128
          %3755 = vsyncadd %s3746, %s3754
          %s3756 = smul.addr %s28, 128
          %s3757 = scalar_lea.hbm %s14, %s3756
          %s3759 = sshll.u32 %s3749, 4
          %s3760 = int_to_ptr.vmem [resolvable:$true] %s3759
          %3762 = dma.vmem_to_hbm [thread:$0]  %s3760, 128, %s3757, %s3746
        $region80: #{tpu_custom_call.1} parent=75 // pred_fallthru
          _
      $region76: #{tpu_custom_call.1} parent=5 // pred_fallthru
        _
      %p3763 = scmp.le.s32.totalorder 2, %s23
      // Predicated region
      $region81: #{tpu_custom_call.1} parent=5 // pred_check
        %p3764 = pneg %p3763
      $region82: #{tpu_custom_call.1} parent=5 // pred_check_branch
        %3766 = sbr.rel (%p3764) target = $region84
      $region83: #{tpu_custom_call.1} parent=5 // pred_region
        %s3767 = ssub.s32 %s23, 2
        // Predicated region
        $region85: #{tpu_custom_call.1} parent=83 // pred_check
          %p3768 = pneg %p356
        $region86: #{tpu_custom_call.1} parent=83 // pred_check_branch
          %3770 = sbr.rel (%p3768) target = $region88
        $region87: #{tpu_custom_call.1} parent=83 // pred_region
          %s3771 = sand.u32 %s341, 1
          %s3772 = scalar_lea.sflag [#allocation3], %s3771
          %s3773 = sand.u32 %s341, 1
          %s3774 = smul.addr %s3773, 8
          %s3775 = scalar_lea.vmem [#allocation2], %s3774
          %3776 = dma.done %s3772, 128
        $region88: #{tpu_custom_call.1} parent=83 // pred_fallthru
          _
      $region84: #{tpu_custom_call.1} parent=5 // pred_fallthru
        _
    $region6: #{tpu_custom_call.1} parent=1 // loop_footer
      %s27 = sadd.s32 1, %s23
    $region7: #{tpu_custom_call.1} parent=1 // loop_footer_branch
      %22 = sbr.rel target = $region3
    $region8: #{tpu_custom_call.1} parent=1 // loop_exit
      _
    %3777 = vsyncpa [#allocation3], 1
    %s3778 = scalar_lea.sflag [#allocation3], 1
    %3779 = vsyncpa %s3778, 1

</llo_original>
